<compile_context>
chip_gen: v5e
topology: v5e:2x2
jax: 0.10.0
libtpu: 0.0.40
codegen_flags: <defaults>
</compile_context>

<pallas_src>
import math

import jax
import jax.numpy as jnp
from jax import lax
from jax.experimental import pallas as pl
from jax.experimental.pallas import tpu as pltpu

# ---- module hyper-parameters (small test config) ----
DIM = 4
B, H, W = 2, 16, 16
N = H * W                                                    # 256 (lane axis)
KERNEL_SIZE = 21
DILATION = 3
MLP_RATIO = 4.0
HID = int(DIM * MLP_RATIO)                                   # 16

BD = B * DIM                                                 # 8  (one full sublane vreg)
BH = B * HID                                                 # 32

D_K = 2 * DILATION - 1                                       # 5
D_P = (D_K - 1) // 2                                         # 2
DD_K = KERNEL_SIZE // DILATION + (KERNEL_SIZE // DILATION % 2 - 1)  # 7
DD_P = DILATION * (DD_K - 1) // 2                            # 9
BN_EPS = 1e-5
SQRT_2_OVER_PI = 0.7978845608028654

assert W & (W - 1) == 0, "W must be a power of two for the lane->(y,x) split"


def _round_up(v, m):
    return (v + m - 1) // m * m


# Flat padded scratch geometry for the depthwise convs: the H*W interior lives
# at lane offset M (128-aligned -> unmasked interior store); tap (dy, dx) reads
# the lane window starting at M + dy*W + dx.  Pad lanes are zero-filled once,
# so vertical out-of-image reads need no mask.
M0 = _round_up(D_P * (W + 1), 128)              # conv0        (5x5, dil 1) -> 128
MS = _round_up(DD_P * (W + 1), 128)             # conv_spatial (7x7, dil 3) -> 256
MM = _round_up(1 * (W + 1), 128)                # MixMlp dwconv (3x3)       -> 128
L0 = _round_up(M0 + N + D_P * (W + 1), 128)     # 512
LS = _round_up(MS + N + DD_P * (W + 1), 128)    # 768
LM = _round_up(MM + N + 1 * (W + 1), 128)       # 512


# ---- packed parameter layout (column offsets inside two resident arrays) ----
def _alloc(entries):
    offs, c = {}, 0
    for name, n in entries:
        offs[name] = c
        c += n
    return offs, c


PK8_OFF, PK8_USED = _alloc([
    ("bn1_s", 1), ("bn1_b", 1),
    ("p1_b", 1),
    ("c0_w", D_K * D_K), ("c0_b", 1),
    ("cs_w", DD_K * DD_K), ("cs_b", 1),
    ("c1_bf", 1), ("c1_bg", 1),
    ("p2_b", 1),
    ("ls1", 1),
    ("fc2_b", 1),
    ("ls2", 1),
])
PK8_W = _round_up(PK8_USED, 128)                 # 128 (85 used)

PK32_OFF, PK32_USED = _alloc([
    ("fc1_b", 1),
    ("dw_w", 9), ("dw_b", 1),
])
PK32_W = _round_up(PK32_USED, 128)               # 128 (11 used)


def _gelu_tanh(v):
    # tanh-approx GELU: the tanh goes to the EUP (spare slot), freeing VALU.
    return 0.5 * v * (1.0 + jnp.tanh(SQRT_2_OVER_PI * (v + 0.044715 * v * v * v)))


# ---- the kernel ----
def gasubblock_kernel(x_ref, pk8_ref, pk32_ref, wp1_ref, wfg_ref, wp2_ref,
                      wfc1_ref, wfc2_ref, out_ref, buf0, bufs, bufm):
    x = x_ref[...]                                     # (B*DIM, N), lane-dense

    lane = lax.broadcasted_iota(jnp.int32, (1, N), 1)
    xcol = jnp.bitwise_and(lane, W - 1)                # x coordinate of each lane

    def col(ref, off, n=1):
        # (rows, n) column slab of a packed parameter array
        return ref[:, off:off + n]

    def mm(w_ref, v):
        # block-diagonal 1x1 conv over the batch-fused channel axis -> MXU
        return jnp.dot(w_ref[...], v, preferred_element_type=jnp.float32)

    def dwconv(v, buf, m_off, k, dil, pad, wref, woff, boff):
        rows, total = v.shape[0], buf.shape[1]
        # Zero the (128-aligned) pad columns once, then store the interior.
        # Vertical out-of-image taps then read genuine zeros (no row mask);
        # only horizontally-wrapped lanes still need a select.
        buf[:, 0:m_off] = jnp.zeros((rows, m_off), jnp.float32)
        buf[:, m_off + N:total] = jnp.zeros((rows, total - m_off - N), jnp.float32)
        buf[:, m_off:m_off + N] = v

        col_ok = []
        for d in range(k):
            dx = d * dil - pad
            if dx == 0:
                col_ok.append(None)
            else:
                col_ok.append((xcol + dx >= 0) & (xcol + dx < W))

        # 4 independent accumulators break the serial FP add chain so the
        # VLIW can co-issue taps across the VALU slots.
        accs = [None, None, None, None]
        t = 0
        for di in range(k):
            dy = di * dil - pad
            for dj in range(k):
                dx = dj * dil - pad
                start = m_off + dy * W + dx
                win = buf[:, start:start + N]
                if col_ok[dj] is not None:
                    win = jnp.where(col_ok[dj], win, 0.0)
                term = win * col(wref, woff + di * k + dj)
                a = t % 4
                accs[a] = term if accs[a] is None else accs[a] + term
                t += 1
        live = [a for a in accs if a is not None]
        while len(live) > 1:                       # tree-combine the partials
            nxt = [live[i] + live[i + 1] for i in range(0, len(live) - 1, 2)]
            if len(live) % 2:
                nxt.append(live[-1])
            live = nxt
        return live[0] + col(wref, boff)

    O8, O32 = PK8_OFF, PK32_OFF

    # ----- branch 1: x + ls1 * SpatialAttention(BN1(x)) -----
    y = x * col(pk8_ref, O8["bn1_s"]) + col(pk8_ref, O8["bn1_b"])        # BN1 (eval)
    sa_shortcut = y
    y = _gelu_tanh(mm(wp1_ref, y) + col(pk8_ref, O8["p1_b"]))            # proj_1 + GELU
    y = dwconv(y, buf0, M0, D_K, 1, D_P, pk8_ref, O8["c0_w"], O8["c0_b"])          # conv0
    y = dwconv(y, bufs, MS, DD_K, DILATION, DD_P, pk8_ref, O8["cs_w"], O8["cs_b"]) # conv_spatial
    fg = mm(wfg_ref, y)                                                  # conv1 (f;g stacked)
    f_x = fg[0:BD] + col(pk8_ref, O8["c1_bf"])
    g_x = fg[BD:2 * BD] + col(pk8_ref, O8["c1_bg"])
    y = jax.nn.sigmoid(g_x) * f_x                                        # gating
    y = mm(wp2_ref, y) + col(pk8_ref, O8["p2_b"])                        # proj_2
    y = y + sa_shortcut
    x1 = x + col(pk8_ref, O8["ls1"]) * y

    # ----- branch 2: x1 + ls2 * MixMlp(BN2(x1)); BN2 folded into fc1 -----
    z = mm(wfc1_ref, x1) + col(pk32_ref, O32["fc1_b"])                   # fc1 (BN2 folded)
    z = dwconv(z, bufm, MM, 3, 1, 1, pk32_ref, O32["dw_w"], O32["dw_b"]) # dwconv 3x3
    z = _gelu_tanh(z)
    z = mm(wfc2_ref, z) + col(pk8_ref, O8["fc2_b"])                      # fc2
    out_ref[...] = x1 + col(pk8_ref, O8["ls2"]) * z


# ---- wrapper ----
def pack_params(p):
    def percol(v):
        # (1, C) per-channel vector -> (B*C, 1) batch-fused column
        return jnp.tile(jnp.reshape(jnp.asarray(v, jnp.float32), (-1, 1)), (B, 1))

    def perrow(w2d):
        # (C, n) per-channel rows -> (B*C, n)
        return jnp.tile(jnp.asarray(w2d, jnp.float32), (B, 1))

    def bdiag(w):
        # (o, i) per-batch weight -> (B*o, B*i) block diagonal
        o, i = w.shape
        m = jnp.zeros((B * o, B * i), jnp.float32)
        for b in range(B):
            m = m.at[b * o:(b + 1) * o, b * i:(b + 1) * i].set(
                jnp.asarray(w, jnp.float32))
        return m

    pk8 = jnp.zeros((BD, PK8_W), jnp.float32)
    pk32 = jnp.zeros((BH, PK32_W), jnp.float32)

    def put(a, offs, name, block):
        off = offs[name]
        return a.at[:, off:off + block.shape[1]].set(block)

    pk8 = put(pk8, PK8_OFF, "bn1_s", percol(p["bn1_scale"]))
    pk8 = put(pk8, PK8_OFF, "bn1_b", percol(p["bn1_bias"]))
    pk8 = put(pk8, PK8_OFF, "p1_b", percol(p["p1_b"]))
    pk8 = put(pk8, PK8_OFF, "c0_w", perrow(p["c0_w"].reshape(D_K * D_K, DIM).T))
    pk8 = put(pk8, PK8_OFF, "c0_b", percol(p["c0_b"]))
    pk8 = put(pk8, PK8_OFF, "cs_w", perrow(p["cs_w"].reshape(DD_K * DD_K, DIM).T))
    pk8 = put(pk8, PK8_OFF, "cs_b", percol(p["cs_b"]))
    pk8 = put(pk8, PK8_OFF, "c1_bf", percol(p["c1_b"][:, :DIM]))
    pk8 = put(pk8, PK8_OFF, "c1_bg", percol(p["c1_b"][:, DIM:]))
    pk8 = put(pk8, PK8_OFF, "p2_b", percol(p["p2_b"]))
    pk8 = put(pk8, PK8_OFF, "ls1", percol(p["ls1"]))
    pk8 = put(pk8, PK8_OFF, "fc2_b", percol(p["fc2_b"]))
    pk8 = put(pk8, PK8_OFF, "ls2", percol(p["ls2"]))

    # BN2 folded into fc1: W' = W * s2 (per input channel), b' = b + W @ b2
    w_fc1 = jnp.asarray(p["fc1_w"], jnp.float32).T            # (HID, DIM)
    s2 = jnp.asarray(p["bn2_scale"], jnp.float32)[0]
    b2 = jnp.asarray(p["bn2_bias"], jnp.float32)[0]
    w_fc1_fold = w_fc1 * s2[None, :]
    b_fc1_fold = jnp.asarray(p["fc1_b"], jnp.float32)[0] + w_fc1 @ b2

    pk32 = put(pk32, PK32_OFF, "fc1_b", percol(b_fc1_fold[None, :]))
    pk32 = put(pk32, PK32_OFF, "dw_w", perrow(p["dw_w"].reshape(9, HID).T))
    pk32 = put(pk32, PK32_OFF, "dw_b", percol(p["dw_b"]))

    w_p1 = bdiag(p["p1_w"].T)                                  # (BD, BD)
    w_fg = jnp.concatenate([bdiag(p["c1_w"][:, :DIM].T),       # f block on top,
                            bdiag(p["c1_w"][:, DIM:].T)], 0)   # g block below -> (2*BD, BD)
    w_p2 = bdiag(p["p2_w"].T)                                  # (BD, BD)
    w_fc1b = bdiag(w_fc1_fold)                                 # (BH, BD)
    w_fc2 = bdiag(p["fc2_w"].T)                                # (BD, BH)
    return pk8, pk32, w_p1, w_fg, w_p2, w_fc1b, w_fc2


def gasubblock_forward(x_nchw, p):
    pk8, pk32, w_p1, w_fg, w_p2, w_fc1, w_fc2 = pack_params(p)
    # NCHW row-major reshape already gives the batch-fused lane-dense slab.
    xf = x_nchw.reshape(BD, N).astype(jnp.float32)

    out = pl.pallas_call(
        gasubblock_kernel,
        out_shape=jax.ShapeDtypeStruct((BD, N), jnp.float32),
        grid_spec=pltpu.PrefetchScalarGridSpec(
            num_scalar_prefetch=0,
            grid=(1,),
            in_specs=[
                pl.BlockSpec((BD, N), lambda i: (0, 0)),
                pl.BlockSpec((BD, PK8_W), lambda i: (0, 0)),
                pl.BlockSpec((BH, PK32_W), lambda i: (0, 0)),
                pl.BlockSpec((BD, BD), lambda i: (0, 0)),        # proj_1 (block-diag)
                pl.BlockSpec((2 * BD, BD), lambda i: (0, 0)),    # conv1 f;g stacked
                pl.BlockSpec((BD, BD), lambda i: (0, 0)),        # proj_2
                pl.BlockSpec((BH, BD), lambda i: (0, 0)),        # fc1 (BN2 folded)
                pl.BlockSpec((BD, BH), lambda i: (0, 0)),        # fc2
            ],
            out_specs=pl.BlockSpec((BD, N), lambda i: (0, 0)),
            scratch_shapes=[
                pltpu.VMEM((BD, L0), jnp.float32),   # conv0 padded flat image
                pltpu.VMEM((BD, LS), jnp.float32),   # conv_spatial padded flat image
                pltpu.VMEM((BH, LM), jnp.float32),   # MixMlp dwconv padded flat image
            ],
        ),
        compiler_params=pltpu.CompilerParams(
            dimension_semantics=("arbitrary",)),
    )(xf, pk8, pk32, w_p1, w_fg, w_p2, w_fc1, w_fc2)
    return out.reshape(B, DIM, H, W)


# ---- parameter init (mirrors the PyTorch module's init, eval-mode BN fold) ----
def init_params(key):
    ks = jax.random.split(key, 8)

    def conv_w(k, shape, fan_out):
        return jax.random.normal(k, shape, jnp.float32) * math.sqrt(2.0 / fan_out)

    p = {}
    bn_scale = 1.0 / math.sqrt(1.0 + BN_EPS)
    p["bn1_scale"] = jnp.full((1, DIM), bn_scale, jnp.float32)
    p["bn1_bias"] = jnp.zeros((1, DIM), jnp.float32)
    p["bn2_scale"] = jnp.full((1, DIM), bn_scale, jnp.float32)
    p["bn2_bias"] = jnp.zeros((1, DIM), jnp.float32)
    p["p1_w"] = conv_w(ks[0], (DIM, DIM), DIM)                    # (Cin, Cout)
    p["p1_b"] = jnp.zeros((1, DIM), jnp.float32)
    p["c0_w"] = conv_w(ks[1], (D_K, D_K, DIM), D_K * D_K)         # (kh, kw, C)
    p["c0_b"] = jnp.zeros((1, DIM), jnp.float32)
    p["cs_w"] = conv_w(ks[2], (DD_K, DD_K, DIM), DD_K * DD_K)
    p["cs_b"] = jnp.zeros((1, DIM), jnp.float32)
    p["c1_w"] = conv_w(ks[3], (DIM, 2 * DIM), 2 * DIM)
    p["c1_b"] = jnp.zeros((1, 2 * DIM), jnp.float32)
    p["p2_w"] = conv_w(ks[4], (DIM, DIM), DIM)
    p["p2_b"] = jnp.zeros((1, DIM), jnp.float32)
    p["fc1_w"] = conv_w(ks[5], (DIM, HID), HID)
    p["fc1_b"] = jnp.zeros((1, HID), jnp.float32)
    p["dw_w"] = conv_w(ks[6], (3, 3, HID), 9)
    p["dw_b"] = jnp.zeros((1, HID), jnp.float32)
    p["fc2_w"] = conv_w(ks[7], (HID, DIM), DIM)
    p["fc2_b"] = jnp.zeros((1, DIM), jnp.float32)
    p["ls1"] = jnp.full((1, DIM), 0.01, jnp.float32)
    p["ls2"] = jnp.full((1, DIM), 0.01, jnp.float32)
    return p


# ---- pure-JAX reference (NHWC), mirrors the PyTorch eval-mode forward ----
def reference_forward(x_nchw, p):
    x = jnp.transpose(x_nchw, (0, 2, 3, 1)).astype(jnp.float32)

    def conv1x1(v, w, b):
        return jnp.einsum("bhwc,cd->bhwd", v, w) + b[0]

    def dwconv(v, w, b, k, dil, pad):
        vp = jnp.pad(v, ((0, 0), (pad, pad), (pad, pad), (0, 0)))
        acc = jnp.zeros(v.shape, jnp.float32)
        for i in range(k):
            for j in range(k):
                acc = acc + vp[:, i * dil:i * dil + H, j * dil:j * dil + W, :] * w[i, j, :]
        return acc + b[0]

    gelu = lambda v: jax.nn.gelu(v, approximate=False)   # exact erf GELU (nn.GELU default)

    y = x * p["bn1_scale"][0] + p["bn1_bias"][0]
    sc = y
    y = gelu(conv1x1(y, p["p1_w"], p["p1_b"]))
    y = dwconv(y, p["c0_w"], p["c0_b"], D_K, 1, D_P)
    y = dwconv(y, p["cs_w"], p["cs_b"], DD_K, DILATION, DD_P)
    fg = conv1x1(y, p["c1_w"], p["c1_b"])
    f_x, g_x = fg[..., :DIM], fg[..., DIM:]
    y = jax.nn.sigmoid(g_x) * f_x
    y = conv1x1(y, p["p2_w"], p["p2_b"]) + sc
    x1 = x + p["ls1"][0] * y

    z = x1 * p["bn2_scale"][0] + p["bn2_bias"][0]
    z = conv1x1(z, p["fc1_w"], p["fc1_b"])
    z = dwconv(z, p["dw_w"], p["dw_b"], 3, 1, 1)
    z = gelu(z)
    z = conv1x1(z, p["fc2_w"], p["fc2_b"])
    out = x1 + p["ls2"][0] * z
    return jnp.transpose(out, (0, 3, 1, 2))


if __name__ == "__main__":
    key = jax.random.PRNGKey(0)
    kx, kp = jax.random.split(key)
    x = jax.random.normal(kx, (B, DIM, H, W), jnp.float32)   # PyTorch NCHW input
    params = init_params(kp)

    out = gasubblock_forward(x, params)
    out = jax.block_until_ready(out)

    ref = reference_forward(x, params)
    assert out.shape == (B, DIM, H, W)
    assert bool(jnp.all(jnp.isfinite(out)))
    max_err = float(jnp.max(jnp.abs(out - ref)))
    if max_err < 5e-2:
        print("KERNEL_OK")
    else:
        print(f"MAX_ERR={max_err}")
</pallas_src>

<mosaic_0001>
module attributes {stable_mosaic.version = 11 : i64} {
  func.func @gasubblock_kernel(%arg0: i32, %arg1: memref<8x256xf32, #tpu.memory_space<vmem>>, %arg2: memref<8x128xf32, #tpu.memory_space<vmem>>, %arg3: memref<32x128xf32, #tpu.memory_space<vmem>>, %arg4: memref<8x8xf32, #tpu.memory_space<vmem>>, %arg5: memref<16x8xf32, #tpu.memory_space<vmem>>, %arg6: memref<8x8xf32, #tpu.memory_space<vmem>>, %arg7: memref<32x8xf32, #tpu.memory_space<vmem>>, %arg8: memref<8x32xf32, #tpu.memory_space<vmem>>, %arg9: memref<8x256xf32, #tpu.memory_space<vmem>>, %arg10: memref<8x512xf32, #tpu.memory_space<vmem>>, %arg11: memref<8x768xf32, #tpu.memory_space<vmem>>, %arg12: memref<32x512xf32, #tpu.memory_space<vmem>>) attributes {dimension_semantics = [#tpu.dimension_semantics<arbitrary>], iteration_bounds = array<i64: 1>, scalar_prefetch = 0 : i64, scratch_operands = 3 : i64, tpu.core_type = #tpu.core_type<tc>, window_params = [{pipeline_mode = #tpu.pipeline_mode<synchronous>, transform_indices = @transform_0, window_bounds = array<i64: 8, 256>}, {pipeline_mode = #tpu.pipeline_mode<synchronous>, transform_indices = @transform_1, window_bounds = array<i64: 8, 128>}, {pipeline_mode = #tpu.pipeline_mode<synchronous>, transform_indices = @transform_2, window_bounds = array<i64: 32, 128>}, {pipeline_mode = #tpu.pipeline_mode<synchronous>, transform_indices = @transform_3, window_bounds = array<i64: 8, 8>}, {pipeline_mode = #tpu.pipeline_mode<synchronous>, transform_indices = @transform_4, window_bounds = array<i64: 16, 8>}, {pipeline_mode = #tpu.pipeline_mode<synchronous>, transform_indices = @transform_5, window_bounds = array<i64: 8, 8>}, {pipeline_mode = #tpu.pipeline_mode<synchronous>, transform_indices = @transform_6, window_bounds = array<i64: 32, 8>}, {pipeline_mode = #tpu.pipeline_mode<synchronous>, transform_indices = @transform_7, window_bounds = array<i64: 8, 32>}, {pipeline_mode = #tpu.pipeline_mode<synchronous>, transform_indices = @transform_8, window_bounds = array<i64: 8, 256>}]} {
    %c0 = arith.constant 0 : index
    %c0_0 = arith.constant 0 : index
    %0 = vector.load %arg1[%c0, %c0_0] : memref<8x256xf32, #tpu.memory_space<vmem>>, vector<8x256xf32>
    %1 = tpu.iota {dimensions = array<i32: 1>} : vector<1x256xi32>
    %c15_i32 = arith.constant 15 : i32
    %2 = vector.broadcast %c15_i32 : i32 to vector<1x256xi32>
    %3 = arith.andi %1, %2 : vector<1x256xi32>
    %c0_1 = arith.constant 0 : index
    %c0_2 = arith.constant 0 : index
    %4 = vector.load %arg2[%c0_1, %c0_2] : memref<8x128xf32, #tpu.memory_space<vmem>>, vector<8x1xf32>
    %5 = vector.broadcast %4 : vector<8x1xf32> to vector<8x256xf32>
    %6 = arith.mulf %0, %5 : vector<8x256xf32>
    %c0_3 = arith.constant 0 : index
    %c1 = arith.constant 1 : index
    %7 = vector.load %arg2[%c0_3, %c1] : memref<8x128xf32, #tpu.memory_space<vmem>>, vector<8x1xf32>
    %8 = vector.broadcast %7 : vector<8x1xf32> to vector<8x256xf32>
    %9 = arith.addf %6, %8 : vector<8x256xf32>
    %c0_4 = arith.constant 0 : index
    %c0_5 = arith.constant 0 : index
    %10 = vector.load %arg4[%c0_4, %c0_5] : memref<8x8xf32, #tpu.memory_space<vmem>>, vector<8x8xf32>
    %cst = arith.constant dense<0.000000e+00> : vector<8x256xf32>
    %11 = tpu.matmul %10, %9, %cst {dimension_numbers = #tpu.dot_dimension_numbers<[1], [0], [0], [1], [0, 0, 1, 1], [], []>} : vector<8x8xf32>, vector<8x256xf32>, vector<8x256xf32> -> vector<8x256xf32>
    %c0_6 = arith.constant 0 : index
    %c2 = arith.constant 2 : index
    %12 = vector.load %arg2[%c0_6, %c2] : memref<8x128xf32, #tpu.memory_space<vmem>>, vector<8x1xf32>
    %13 = vector.broadcast %12 : vector<8x1xf32> to vector<8x256xf32>
    %14 = arith.addf %11, %13 : vector<8x256xf32>
    %cst_7 = arith.constant 5.000000e-01 : f32
    %15 = vector.broadcast %cst_7 : f32 to vector<8x256xf32>
    %16 = arith.mulf %15, %14 : vector<8x256xf32>
    %cst_8 = arith.constant 4.471500e-02 : f32
    %17 = vector.broadcast %cst_8 : f32 to vector<8x256xf32>
    %18 = arith.mulf %17, %14 : vector<8x256xf32>
    %19 = arith.mulf %18, %14 : vector<8x256xf32>
    %20 = arith.mulf %19, %14 : vector<8x256xf32>
    %21 = arith.addf %14, %20 : vector<8x256xf32>
    %cst_9 = arith.constant 0.797884583 : f32
    %22 = vector.broadcast %cst_9 : f32 to vector<8x256xf32>
    %23 = arith.mulf %22, %21 : vector<8x256xf32>
    %24 = math.tanh %23 : vector<8x256xf32>
    %cst_10 = arith.constant 1.000000e+00 : f32
    %25 = vector.broadcast %cst_10 : f32 to vector<8x256xf32>
    %26 = arith.addf %25, %24 : vector<8x256xf32>
    %27 = arith.mulf %16, %26 : vector<8x256xf32>
    %cst_11 = arith.constant 0.000000e+00 : f32
    %28 = vector.broadcast %cst_11 : f32 to vector<8x128xf32>
    %c0_12 = arith.constant 0 : index
    %c0_13 = arith.constant 0 : index
    %29 = vector.load %arg10[%c0_12, %c0_13] : memref<8x512xf32, #tpu.memory_space<vmem>>, vector<8x128xf32>
    tpu.vector_store %arg10[%c0_12, %c0_13], %28 {strides = array<i32>} : memref<8x512xf32, #tpu.memory_space<vmem>>, vector<8x128xf32>,
    %cst_14 = arith.constant 0.000000e+00 : f32
    %30 = vector.broadcast %cst_14 : f32 to vector<8x128xf32>
    %c0_15 = arith.constant 0 : index
    %c384 = arith.constant 384 : index
    %31 = vector.load %arg10[%c0_15, %c384] : memref<8x512xf32, #tpu.memory_space<vmem>>, vector<8x128xf32>
    tpu.vector_store %arg10[%c0_15, %c384], %30 {strides = array<i32>} : memref<8x512xf32, #tpu.memory_space<vmem>>, vector<8x128xf32>,
    %c0_16 = arith.constant 0 : index
    %c128 = arith.constant 128 : index
    %32 = vector.load %arg10[%c0_16, %c128] : memref<8x512xf32, #tpu.memory_space<vmem>>, vector<8x256xf32>
    tpu.vector_store %arg10[%c0_16, %c128], %27 {strides = array<i32>} : memref<8x512xf32, #tpu.memory_space<vmem>>, vector<8x256xf32>,
    %c-2_i32 = arith.constant -2 : i32
    %33 = vector.broadcast %c-2_i32 : i32 to vector<1x256xi32>
    %34 = arith.addi %3, %33 : vector<1x256xi32>
    %c0_i32 = arith.constant 0 : i32
    %35 = vector.broadcast %c0_i32 : i32 to vector<1x256xi32>
    %36 = arith.cmpi sge, %34, %35 : vector<1x256xi32>
    %c-2_i32_17 = arith.constant -2 : i32
    %37 = vector.broadcast %c-2_i32_17 : i32 to vector<1x256xi32>
    %38 = arith.addi %3, %37 : vector<1x256xi32>
    %c16_i32 = arith.constant 16 : i32
    %39 = vector.broadcast %c16_i32 : i32 to vector<1x256xi32>
    %40 = arith.cmpi slt, %38, %39 : vector<1x256xi32>
    %41 = arith.andi %36, %40 : vector<1x256xi1>
    %c-1_i32 = arith.constant -1 : i32
    %42 = vector.broadcast %c-1_i32 : i32 to vector<1x256xi32>
    %43 = arith.addi %3, %42 : vector<1x256xi32>
    %c0_i32_18 = arith.constant 0 : i32
    %44 = vector.broadcast %c0_i32_18 : i32 to vector<1x256xi32>
    %45 = arith.cmpi sge, %43, %44 : vector<1x256xi32>
    %c-1_i32_19 = arith.constant -1 : i32
    %46 = vector.broadcast %c-1_i32_19 : i32 to vector<1x256xi32>
    %47 = arith.addi %3, %46 : vector<1x256xi32>
    %c16_i32_20 = arith.constant 16 : i32
    %48 = vector.broadcast %c16_i32_20 : i32 to vector<1x256xi32>
    %49 = arith.cmpi slt, %47, %48 : vector<1x256xi32>
    %50 = arith.andi %45, %49 : vector<1x256xi1>
    %c1_i32 = arith.constant 1 : i32
    %51 = vector.broadcast %c1_i32 : i32 to vector<1x256xi32>
    %52 = arith.addi %3, %51 : vector<1x256xi32>
    %c0_i32_21 = arith.constant 0 : i32
    %53 = vector.broadcast %c0_i32_21 : i32 to vector<1x256xi32>
    %54 = arith.cmpi sge, %52, %53 : vector<1x256xi32>
    %c1_i32_22 = arith.constant 1 : i32
    %55 = vector.broadcast %c1_i32_22 : i32 to vector<1x256xi32>
    %56 = arith.addi %3, %55 : vector<1x256xi32>
    %c16_i32_23 = arith.constant 16 : i32
    %57 = vector.broadcast %c16_i32_23 : i32 to vector<1x256xi32>
    %58 = arith.cmpi slt, %56, %57 : vector<1x256xi32>
    %59 = arith.andi %54, %58 : vector<1x256xi1>
    %c2_i32 = arith.constant 2 : i32
    %60 = vector.broadcast %c2_i32 : i32 to vector<1x256xi32>
    %61 = arith.addi %3, %60 : vector<1x256xi32>
    %c0_i32_24 = arith.constant 0 : i32
    %62 = vector.broadcast %c0_i32_24 : i32 to vector<1x256xi32>
    %63 = arith.cmpi sge, %61, %62 : vector<1x256xi32>
    %c2_i32_25 = arith.constant 2 : i32
    %64 = vector.broadcast %c2_i32_25 : i32 to vector<1x256xi32>
    %65 = arith.addi %3, %64 : vector<1x256xi32>
    %c16_i32_26 = arith.constant 16 : i32
    %66 = vector.broadcast %c16_i32_26 : i32 to vector<1x256xi32>
    %67 = arith.cmpi slt, %65, %66 : vector<1x256xi32>
    %68 = arith.andi %63, %67 : vector<1x256xi1>
    %c0_27 = arith.constant 0 : index
    %c94 = arith.constant 94 : index
    %69 = vector.load %arg10[%c0_27, %c94] : memref<8x512xf32, #tpu.memory_space<vmem>>, vector<8x256xf32>
    %cst_28 = arith.constant 0.000000e+00 : f32
    %70 = vector.shape_cast %41 : vector<1x256xi1> to vector<1x256xi1>
    %71 = vector.broadcast %70 : vector<1x256xi1> to vector<8x256xi1>
    %72 = vector.broadcast %cst_28 : f32 to vector<8x256xf32>
    %73 = arith.select %71, %69, %72 : vector<8x256xi1>, vector<8x256xf32>
    %c0_29 = arith.constant 0 : index
    %c3 = arith.constant 3 : index
    %74 = vector.load %arg2[%c0_29, %c3] : memref<8x128xf32, #tpu.memory_space<vmem>>, vector<8x1xf32>
    %75 = vector.broadcast %74 : vector<8x1xf32> to vector<8x256xf32>
    %76 = arith.mulf %73, %75 : vector<8x256xf32>
    %c0_30 = arith.constant 0 : index
    %c95 = arith.constant 95 : index
    %77 = vector.load %arg10[%c0_30, %c95] : memref<8x512xf32, #tpu.memory_space<vmem>>, vector<8x256xf32>
    %cst_31 = arith.constant 0.000000e+00 : f32
    %78 = vector.shape_cast %50 : vector<1x256xi1> to vector<1x256xi1>
    %79 = vector.broadcast %78 : vector<1x256xi1> to vector<8x256xi1>
    %80 = vector.broadcast %cst_31 : f32 to vector<8x256xf32>
    %81 = arith.select %79, %77, %80 : vector<8x256xi1>, vector<8x256xf32>
    %c0_32 = arith.constant 0 : index
    %c4 = arith.constant 4 : index
    %82 = vector.load %arg2[%c0_32, %c4] : memref<8x128xf32, #tpu.memory_space<vmem>>, vector<8x1xf32>
    %83 = vector.broadcast %82 : vector<8x1xf32> to vector<8x256xf32>
    %84 = arith.mulf %81, %83 : vector<8x256xf32>
    %c0_33 = arith.constant 0 : index
    %c96 = arith.constant 96 : index
    %85 = vector.load %arg10[%c0_33, %c96] : memref<8x512xf32, #tpu.memory_space<vmem>>, vector<8x256xf32>
    %c0_34 = arith.constant 0 : index
    %c5 = arith.constant 5 : index
    %86 = vector.load %arg2[%c0_34, %c5] : memref<8x128xf32, #tpu.memory_space<vmem>>, vector<8x1xf32>
    %87 = vector.broadcast %86 : vector<8x1xf32> to vector<8x256xf32>
    %88 = arith.mulf %85, %87 : vector<8x256xf32>
    %c0_35 = arith.constant 0 : index
    %c97 = arith.constant 97 : index
    %89 = vector.load %arg10[%c0_35, %c97] : memref<8x512xf32, #tpu.memory_space<vmem>>, vector<8x256xf32>
    %cst_36 = arith.constant 0.000000e+00 : f32
    %90 = vector.shape_cast %59 : vector<1x256xi1> to vector<1x256xi1>
    %91 = vector.broadcast %90 : vector<1x256xi1> to vector<8x256xi1>
    %92 = vector.broadcast %cst_36 : f32 to vector<8x256xf32>
    %93 = arith.select %91, %89, %92 : vector<8x256xi1>, vector<8x256xf32>
    %c0_37 = arith.constant 0 : index
    %c6 = arith.constant 6 : index
    %94 = vector.load %arg2[%c0_37, %c6] : memref<8x128xf32, #tpu.memory_space<vmem>>, vector<8x1xf32>
    %95 = vector.broadcast %94 : vector<8x1xf32> to vector<8x256xf32>
    %96 = arith.mulf %93, %95 : vector<8x256xf32>
    %c0_38 = arith.constant 0 : index
    %c98 = arith.constant 98 : index
    %97 = vector.load %arg10[%c0_38, %c98] : memref<8x512xf32, #tpu.memory_space<vmem>>, vector<8x256xf32>
    %cst_39 = arith.constant 0.000000e+00 : f32
    %98 = vector.shape_cast %68 : vector<1x256xi1> to vector<1x256xi1>
    %99 = vector.broadcast %98 : vector<1x256xi1> to vector<8x256xi1>
    %100 = vector.broadcast %cst_39 : f32 to vector<8x256xf32>
    %101 = arith.select %99, %97, %100 : vector<8x256xi1>, vector<8x256xf32>
    %c0_40 = arith.constant 0 : index
    %c7 = arith.constant 7 : index
    %102 = vector.load %arg2[%c0_40, %c7] : memref<8x128xf32, #tpu.memory_space<vmem>>, vector<8x1xf32>
    %103 = vector.broadcast %102 : vector<8x1xf32> to vector<8x256xf32>
    %104 = arith.mulf %101, %103 : vector<8x256xf32>
    %105 = arith.addf %76, %104 : vector<8x256xf32>
    %c0_41 = arith.constant 0 : index
    %c110 = arith.constant 110 : index
    %106 = vector.load %arg10[%c0_41, %c110] : memref<8x512xf32, #tpu.memory_space<vmem>>, vector<8x256xf32>
    %cst_42 = arith.constant 0.000000e+00 : f32
    %107 = vector.shape_cast %41 : vector<1x256xi1> to vector<1x256xi1>
    %108 = vector.broadcast %107 : vector<1x256xi1> to vector<8x256xi1>
    %109 = vector.broadcast %cst_42 : f32 to vector<8x256xf32>
    %110 = arith.select %108, %106, %109 : vector<8x256xi1>, vector<8x256xf32>
    %c0_43 = arith.constant 0 : index
    %c8 = arith.constant 8 : index
    %111 = vector.load %arg2[%c0_43, %c8] : memref<8x128xf32, #tpu.memory_space<vmem>>, vector<8x1xf32>
    %112 = vector.broadcast %111 : vector<8x1xf32> to vector<8x256xf32>
    %113 = arith.mulf %110, %112 : vector<8x256xf32>
    %114 = arith.addf %84, %113 : vector<8x256xf32>
    %c0_44 = arith.constant 0 : index
    %c111 = arith.constant 111 : index
    %115 = vector.load %arg10[%c0_44, %c111] : memref<8x512xf32, #tpu.memory_space<vmem>>, vector<8x256xf32>
    %cst_45 = arith.constant 0.000000e+00 : f32
    %116 = vector.shape_cast %50 : vector<1x256xi1> to vector<1x256xi1>
    %117 = vector.broadcast %116 : vector<1x256xi1> to vector<8x256xi1>
    %118 = vector.broadcast %cst_45 : f32 to vector<8x256xf32>
    %119 = arith.select %117, %115, %118 : vector<8x256xi1>, vector<8x256xf32>
    %c0_46 = arith.constant 0 : index
    %c9 = arith.constant 9 : index
    %120 = vector.load %arg2[%c0_46, %c9] : memref<8x128xf32, #tpu.memory_space<vmem>>, vector<8x1xf32>
    %121 = vector.broadcast %120 : vector<8x1xf32> to vector<8x256xf32>
    %122 = arith.mulf %119, %121 : vector<8x256xf32>
    %123 = arith.addf %88, %122 : vector<8x256xf32>
    %c0_47 = arith.constant 0 : index
    %c112 = arith.constant 112 : index
    %124 = vector.load %arg10[%c0_47, %c112] : memref<8x512xf32, #tpu.memory_space<vmem>>, vector<8x256xf32>
    %c0_48 = arith.constant 0 : index
    %c10 = arith.constant 10 : index
    %125 = vector.load %arg2[%c0_48, %c10] : memref<8x128xf32, #tpu.memory_space<vmem>>, vector<8x1xf32>
    %126 = vector.broadcast %125 : vector<8x1xf32> to vector<8x256xf32>
    %127 = arith.mulf %124, %126 : vector<8x256xf32>
    %128 = arith.addf %96, %127 : vector<8x256xf32>
    %c0_49 = arith.constant 0 : index
    %c113 = arith.constant 113 : index
    %129 = vector.load %arg10[%c0_49, %c113] : memref<8x512xf32, #tpu.memory_space<vmem>>, vector<8x256xf32>
    %cst_50 = arith.constant 0.000000e+00 : f32
    %130 = vector.shape_cast %59 : vector<1x256xi1> to vector<1x256xi1>
    %131 = vector.broadcast %130 : vector<1x256xi1> to vector<8x256xi1>
    %132 = vector.broadcast %cst_50 : f32 to vector<8x256xf32>
    %133 = arith.select %131, %129, %132 : vector<8x256xi1>, vector<8x256xf32>
    %c0_51 = arith.constant 0 : index
    %c11 = arith.constant 11 : index
    %134 = vector.load %arg2[%c0_51, %c11] : memref<8x128xf32, #tpu.memory_space<vmem>>, vector<8x1xf32>
    %135 = vector.broadcast %134 : vector<8x1xf32> to vector<8x256xf32>
    %136 = arith.mulf %133, %135 : vector<8x256xf32>
    %137 = arith.addf %105, %136 : vector<8x256xf32>
    %c0_52 = arith.constant 0 : index
    %c114 = arith.constant 114 : index
    %138 = vector.load %arg10[%c0_52, %c114] : memref<8x512xf32, #tpu.memory_space<vmem>>, vector<8x256xf32>
    %cst_53 = arith.constant 0.000000e+00 : f32
    %139 = vector.shape_cast %68 : vector<1x256xi1> to vector<1x256xi1>
    %140 = vector.broadcast %139 : vector<1x256xi1> to vector<8x256xi1>
    %141 = vector.broadcast %cst_53 : f32 to vector<8x256xf32>
    %142 = arith.select %140, %138, %141 : vector<8x256xi1>, vector<8x256xf32>
    %c0_54 = arith.constant 0 : index
    %c12 = arith.constant 12 : index
    %143 = vector.load %arg2[%c0_54, %c12] : memref<8x128xf32, #tpu.memory_space<vmem>>, vector<8x1xf32>
    %144 = vector.broadcast %143 : vector<8x1xf32> to vector<8x256xf32>
    %145 = arith.mulf %142, %144 : vector<8x256xf32>
    %146 = arith.addf %114, %145 : vector<8x256xf32>
    %c0_55 = arith.constant 0 : index
    %c126 = arith.constant 126 : index
    %147 = vector.load %arg10[%c0_55, %c126] : memref<8x512xf32, #tpu.memory_space<vmem>>, vector<8x256xf32>
    %cst_56 = arith.constant 0.000000e+00 : f32
    %148 = vector.shape_cast %41 : vector<1x256xi1> to vector<1x256xi1>
    %149 = vector.broadcast %148 : vector<1x256xi1> to vector<8x256xi1>
    %150 = vector.broadcast %cst_56 : f32 to vector<8x256xf32>
    %151 = arith.select %149, %147, %150 : vector<8x256xi1>, vector<8x256xf32>
    %c0_57 = arith.constant 0 : index
    %c13 = arith.constant 13 : index
    %152 = vector.load %arg2[%c0_57, %c13] : memref<8x128xf32, #tpu.memory_space<vmem>>, vector<8x1xf32>
    %153 = vector.broadcast %152 : vector<8x1xf32> to vector<8x256xf32>
    %154 = arith.mulf %151, %153 : vector<8x256xf32>
    %155 = arith.addf %123, %154 : vector<8x256xf32>
    %c0_58 = arith.constant 0 : index
    %c127 = arith.constant 127 : index
    %156 = vector.load %arg10[%c0_58, %c127] : memref<8x512xf32, #tpu.memory_space<vmem>>, vector<8x256xf32>
    %cst_59 = arith.constant 0.000000e+00 : f32
    %157 = vector.shape_cast %50 : vector<1x256xi1> to vector<1x256xi1>
    %158 = vector.broadcast %157 : vector<1x256xi1> to vector<8x256xi1>
    %159 = vector.broadcast %cst_59 : f32 to vector<8x256xf32>
    %160 = arith.select %158, %156, %159 : vector<8x256xi1>, vector<8x256xf32>
    %c0_60 = arith.constant 0 : index
    %c14 = arith.constant 14 : index
    %161 = vector.load %arg2[%c0_60, %c14] : memref<8x128xf32, #tpu.memory_space<vmem>>, vector<8x1xf32>
    %162 = vector.broadcast %161 : vector<8x1xf32> to vector<8x256xf32>
    %163 = arith.mulf %160, %162 : vector<8x256xf32>
    %164 = arith.addf %128, %163 : vector<8x256xf32>
    %c0_61 = arith.constant 0 : index
    %c128_62 = arith.constant 128 : index
    %165 = vector.load %arg10[%c0_61, %c128_62] : memref<8x512xf32, #tpu.memory_space<vmem>>, vector<8x256xf32>
    %c0_63 = arith.constant 0 : index
    %c15 = arith.constant 15 : index
    %166 = vector.load %arg2[%c0_63, %c15] : memref<8x128xf32, #tpu.memory_space<vmem>>, vector<8x1xf32>
    %167 = vector.broadcast %166 : vector<8x1xf32> to vector<8x256xf32>
    %168 = arith.mulf %165, %167 : vector<8x256xf32>
    %169 = arith.addf %137, %168 : vector<8x256xf32>
    %c0_64 = arith.constant 0 : index
    %c129 = arith.constant 129 : index
    %170 = vector.load %arg10[%c0_64, %c129] : memref<8x512xf32, #tpu.memory_space<vmem>>, vector<8x256xf32>
    %cst_65 = arith.constant 0.000000e+00 : f32
    %171 = vector.shape_cast %59 : vector<1x256xi1> to vector<1x256xi1>
    %172 = vector.broadcast %171 : vector<1x256xi1> to vector<8x256xi1>
    %173 = vector.broadcast %cst_65 : f32 to vector<8x256xf32>
    %174 = arith.select %172, %170, %173 : vector<8x256xi1>, vector<8x256xf32>
    %c0_66 = arith.constant 0 : index
    %c16 = arith.constant 16 : index
    %175 = vector.load %arg2[%c0_66, %c16] : memref<8x128xf32, #tpu.memory_space<vmem>>, vector<8x1xf32>
    %176 = vector.broadcast %175 : vector<8x1xf32> to vector<8x256xf32>
    %177 = arith.mulf %174, %176 : vector<8x256xf32>
    %178 = arith.addf %146, %177 : vector<8x256xf32>
    %c0_67 = arith.constant 0 : index
    %c130 = arith.constant 130 : index
    %179 = vector.load %arg10[%c0_67, %c130] : memref<8x512xf32, #tpu.memory_space<vmem>>, vector<8x256xf32>
    %cst_68 = arith.constant 0.000000e+00 : f32
    %180 = vector.shape_cast %68 : vector<1x256xi1> to vector<1x256xi1>
    %181 = vector.broadcast %180 : vector<1x256xi1> to vector<8x256xi1>
    %182 = vector.broadcast %cst_68 : f32 to vector<8x256xf32>
    %183 = arith.select %181, %179, %182 : vector<8x256xi1>, vector<8x256xf32>
    %c0_69 = arith.constant 0 : index
    %c17 = arith.constant 17 : index
    %184 = vector.load %arg2[%c0_69, %c17] : memref<8x128xf32, #tpu.memory_space<vmem>>, vector<8x1xf32>
    %185 = vector.broadcast %184 : vector<8x1xf32> to vector<8x256xf32>
    %186 = arith.mulf %183, %185 : vector<8x256xf32>
    %187 = arith.addf %155, %186 : vector<8x256xf32>
    %c0_70 = arith.constant 0 : index
    %c142 = arith.constant 142 : index
    %188 = vector.load %arg10[%c0_70, %c142] : memref<8x512xf32, #tpu.memory_space<vmem>>, vector<8x256xf32>
    %cst_71 = arith.constant 0.000000e+00 : f32
    %189 = vector.shape_cast %41 : vector<1x256xi1> to vector<1x256xi1>
    %190 = vector.broadcast %189 : vector<1x256xi1> to vector<8x256xi1>
    %191 = vector.broadcast %cst_71 : f32 to vector<8x256xf32>
    %192 = arith.select %190, %188, %191 : vector<8x256xi1>, vector<8x256xf32>
    %c0_72 = arith.constant 0 : index
    %c18 = arith.constant 18 : index
    %193 = vector.load %arg2[%c0_72, %c18] : memref<8x128xf32, #tpu.memory_space<vmem>>, vector<8x1xf32>
    %194 = vector.broadcast %193 : vector<8x1xf32> to vector<8x256xf32>
    %195 = arith.mulf %192, %194 : vector<8x256xf32>
    %196 = arith.addf %164, %195 : vector<8x256xf32>
    %c0_73 = arith.constant 0 : index
    %c143 = arith.constant 143 : index
    %197 = vector.load %arg10[%c0_73, %c143] : memref<8x512xf32, #tpu.memory_space<vmem>>, vector<8x256xf32>
    %cst_74 = arith.constant 0.000000e+00 : f32
    %198 = vector.shape_cast %50 : vector<1x256xi1> to vector<1x256xi1>
    %199 = vector.broadcast %198 : vector<1x256xi1> to vector<8x256xi1>
    %200 = vector.broadcast %cst_74 : f32 to vector<8x256xf32>
    %201 = arith.select %199, %197, %200 : vector<8x256xi1>, vector<8x256xf32>
    %c0_75 = arith.constant 0 : index
    %c19 = arith.constant 19 : index
    %202 = vector.load %arg2[%c0_75, %c19] : memref<8x128xf32, #tpu.memory_space<vmem>>, vector<8x1xf32>
    %203 = vector.broadcast %202 : vector<8x1xf32> to vector<8x256xf32>
    %204 = arith.mulf %201, %203 : vector<8x256xf32>
    %205 = arith.addf %169, %204 : vector<8x256xf32>
    %c0_76 = arith.constant 0 : index
    %c144 = arith.constant 144 : index
    %206 = vector.load %arg10[%c0_76, %c144] : memref<8x512xf32, #tpu.memory_space<vmem>>, vector<8x256xf32>
    %c0_77 = arith.constant 0 : index
    %c20 = arith.constant 20 : index
    %207 = vector.load %arg2[%c0_77, %c20] : memref<8x128xf32, #tpu.memory_space<vmem>>, vector<8x1xf32>
    %208 = vector.broadcast %207 : vector<8x1xf32> to vector<8x256xf32>
    %209 = arith.mulf %206, %208 : vector<8x256xf32>
    %210 = arith.addf %178, %209 : vector<8x256xf32>
    %c0_78 = arith.constant 0 : index
    %c145 = arith.constant 145 : index
    %211 = vector.load %arg10[%c0_78, %c145] : memref<8x512xf32, #tpu.memory_space<vmem>>, vector<8x256xf32>
    %cst_79 = arith.constant 0.000000e+00 : f32
    %212 = vector.shape_cast %59 : vector<1x256xi1> to vector<1x256xi1>
    %213 = vector.broadcast %212 : vector<1x256xi1> to vector<8x256xi1>
    %214 = vector.broadcast %cst_79 : f32 to vector<8x256xf32>
    %215 = arith.select %213, %211, %214 : vector<8x256xi1>, vector<8x256xf32>
    %c0_80 = arith.constant 0 : index
    %c21 = arith.constant 21 : index
    %216 = vector.load %arg2[%c0_80, %c21] : memref<8x128xf32, #tpu.memory_space<vmem>>, vector<8x1xf32>
    %217 = vector.broadcast %216 : vector<8x1xf32> to vector<8x256xf32>
    %218 = arith.mulf %215, %217 : vector<8x256xf32>
    %219 = arith.addf %187, %218 : vector<8x256xf32>
    %c0_81 = arith.constant 0 : index
    %c146 = arith.constant 146 : index
    %220 = vector.load %arg10[%c0_81, %c146] : memref<8x512xf32, #tpu.memory_space<vmem>>, vector<8x256xf32>
    %cst_82 = arith.constant 0.000000e+00 : f32
    %221 = vector.shape_cast %68 : vector<1x256xi1> to vector<1x256xi1>
    %222 = vector.broadcast %221 : vector<1x256xi1> to vector<8x256xi1>
    %223 = vector.broadcast %cst_82 : f32 to vector<8x256xf32>
    %224 = arith.select %222, %220, %223 : vector<8x256xi1>, vector<8x256xf32>
    %c0_83 = arith.constant 0 : index
    %c22 = arith.constant 22 : index
    %225 = vector.load %arg2[%c0_83, %c22] : memref<8x128xf32, #tpu.memory_space<vmem>>, vector<8x1xf32>
    %226 = vector.broadcast %225 : vector<8x1xf32> to vector<8x256xf32>
    %227 = arith.mulf %224, %226 : vector<8x256xf32>
    %228 = arith.addf %196, %227 : vector<8x256xf32>
    %c0_84 = arith.constant 0 : index
    %c158 = arith.constant 158 : index
    %229 = vector.load %arg10[%c0_84, %c158] : memref<8x512xf32, #tpu.memory_space<vmem>>, vector<8x256xf32>
    %cst_85 = arith.constant 0.000000e+00 : f32
    %230 = vector.shape_cast %41 : vector<1x256xi1> to vector<1x256xi1>
    %231 = vector.broadcast %230 : vector<1x256xi1> to vector<8x256xi1>
    %232 = vector.broadcast %cst_85 : f32 to vector<8x256xf32>
    %233 = arith.select %231, %229, %232 : vector<8x256xi1>, vector<8x256xf32>
    %c0_86 = arith.constant 0 : index
    %c23 = arith.constant 23 : index
    %234 = vector.load %arg2[%c0_86, %c23] : memref<8x128xf32, #tpu.memory_space<vmem>>, vector<8x1xf32>
    %235 = vector.broadcast %234 : vector<8x1xf32> to vector<8x256xf32>
    %236 = arith.mulf %233, %235 : vector<8x256xf32>
    %237 = arith.addf %205, %236 : vector<8x256xf32>
    %c0_87 = arith.constant 0 : index
    %c159 = arith.constant 159 : index
    %238 = vector.load %arg10[%c0_87, %c159] : memref<8x512xf32, #tpu.memory_space<vmem>>, vector<8x256xf32>
    %cst_88 = arith.constant 0.000000e+00 : f32
    %239 = vector.shape_cast %50 : vector<1x256xi1> to vector<1x256xi1>
    %240 = vector.broadcast %239 : vector<1x256xi1> to vector<8x256xi1>
    %241 = vector.broadcast %cst_88 : f32 to vector<8x256xf32>
    %242 = arith.select %240, %238, %241 : vector<8x256xi1>, vector<8x256xf32>
    %c0_89 = arith.constant 0 : index
    %c24 = arith.constant 24 : index
    %243 = vector.load %arg2[%c0_89, %c24] : memref<8x128xf32, #tpu.memory_space<vmem>>, vector<8x1xf32>
    %244 = vector.broadcast %243 : vector<8x1xf32> to vector<8x256xf32>
    %245 = arith.mulf %242, %244 : vector<8x256xf32>
    %246 = arith.addf %210, %245 : vector<8x256xf32>
    %c0_90 = arith.constant 0 : index
    %c160 = arith.constant 160 : index
    %247 = vector.load %arg10[%c0_90, %c160] : memref<8x512xf32, #tpu.memory_space<vmem>>, vector<8x256xf32>
    %c0_91 = arith.constant 0 : index
    %c25 = arith.constant 25 : index
    %248 = vector.load %arg2[%c0_91, %c25] : memref<8x128xf32, #tpu.memory_space<vmem>>, vector<8x1xf32>
    %249 = vector.broadcast %248 : vector<8x1xf32> to vector<8x256xf32>
    %250 = arith.mulf %247, %249 : vector<8x256xf32>
    %251 = arith.addf %219, %250 : vector<8x256xf32>
    %c0_92 = arith.constant 0 : index
    %c161 = arith.constant 161 : index
    %252 = vector.load %arg10[%c0_92, %c161] : memref<8x512xf32, #tpu.memory_space<vmem>>, vector<8x256xf32>
    %cst_93 = arith.constant 0.000000e+00 : f32
    %253 = vector.shape_cast %59 : vector<1x256xi1> to vector<1x256xi1>
    %254 = vector.broadcast %253 : vector<1x256xi1> to vector<8x256xi1>
    %255 = vector.broadcast %cst_93 : f32 to vector<8x256xf32>
    %256 = arith.select %254, %252, %255 : vector<8x256xi1>, vector<8x256xf32>
    %c0_94 = arith.constant 0 : index
    %c26 = arith.constant 26 : index
    %257 = vector.load %arg2[%c0_94, %c26] : memref<8x128xf32, #tpu.memory_space<vmem>>, vector<8x1xf32>
    %258 = vector.broadcast %257 : vector<8x1xf32> to vector<8x256xf32>
    %259 = arith.mulf %256, %258 : vector<8x256xf32>
    %260 = arith.addf %228, %259 : vector<8x256xf32>
    %c0_95 = arith.constant 0 : index
    %c162 = arith.constant 162 : index
    %261 = vector.load %arg10[%c0_95, %c162] : memref<8x512xf32, #tpu.memory_space<vmem>>, vector<8x256xf32>
    %cst_96 = arith.constant 0.000000e+00 : f32
    %262 = vector.shape_cast %68 : vector<1x256xi1> to vector<1x256xi1>
    %263 = vector.broadcast %262 : vector<1x256xi1> to vector<8x256xi1>
    %264 = vector.broadcast %cst_96 : f32 to vector<8x256xf32>
    %265 = arith.select %263, %261, %264 : vector<8x256xi1>, vector<8x256xf32>
    %c0_97 = arith.constant 0 : index
    %c27 = arith.constant 27 : index
    %266 = vector.load %arg2[%c0_97, %c27] : memref<8x128xf32, #tpu.memory_space<vmem>>, vector<8x1xf32>
    %267 = vector.broadcast %266 : vector<8x1xf32> to vector<8x256xf32>
    %268 = arith.mulf %265, %267 : vector<8x256xf32>
    %269 = arith.addf %237, %268 : vector<8x256xf32>
    %270 = arith.addf %269, %246 : vector<8x256xf32>
    %271 = arith.addf %251, %260 : vector<8x256xf32>
    %272 = arith.addf %270, %271 : vector<8x256xf32>
    %c0_98 = arith.constant 0 : index
    %c28 = arith.constant 28 : index
    %273 = vector.load %arg2[%c0_98, %c28] : memref<8x128xf32, #tpu.memory_space<vmem>>, vector<8x1xf32>
    %274 = vector.broadcast %273 : vector<8x1xf32> to vector<8x256xf32>
    %275 = arith.addf %272, %274 : vector<8x256xf32>
    %cst_99 = arith.constant 0.000000e+00 : f32
    %276 = vector.broadcast %cst_99 : f32 to vector<8x256xf32>
    %c0_100 = arith.constant 0 : index
    %c0_101 = arith.constant 0 : index
    %277 = vector.load %arg11[%c0_100, %c0_101] : memref<8x768xf32, #tpu.memory_space<vmem>>, vector<8x256xf32>
    tpu.vector_store %arg11[%c0_100, %c0_101], %276 {strides = array<i32>} : memref<8x768xf32, #tpu.memory_space<vmem>>, vector<8x256xf32>,
    %cst_102 = arith.constant 0.000000e+00 : f32
    %278 = vector.broadcast %cst_102 : f32 to vector<8x256xf32>
    %c0_103 = arith.constant 0 : index
    %c512 = arith.constant 512 : index
    %279 = vector.load %arg11[%c0_103, %c512] : memref<8x768xf32, #tpu.memory_space<vmem>>, vector<8x256xf32>
    tpu.vector_store %arg11[%c0_103, %c512], %278 {strides = array<i32>} : memref<8x768xf32, #tpu.memory_space<vmem>>, vector<8x256xf32>,
    %c0_104 = arith.constant 0 : index
    %c256 = arith.constant 256 : index
    %280 = vector.load %arg11[%c0_104, %c256] : memref<8x768xf32, #tpu.memory_space<vmem>>, vector<8x256xf32>
    tpu.vector_store %arg11[%c0_104, %c256], %275 {strides = array<i32>} : memref<8x768xf32, #tpu.memory_space<vmem>>, vector<8x256xf32>,
    %c-9_i32 = arith.constant -9 : i32
    %281 = vector.broadcast %c-9_i32 : i32 to vector<1x256xi32>
    %282 = arith.addi %3, %281 : vector<1x256xi32>
    %c0_i32_105 = arith.constant 0 : i32
    %283 = vector.broadcast %c0_i32_105 : i32 to vector<1x256xi32>
    %284 = arith.cmpi sge, %282, %283 : vector<1x256xi32>
    %c-9_i32_106 = arith.constant -9 : i32
    %285 = vector.broadcast %c-9_i32_106 : i32 to vector<1x256xi32>
    %286 = arith.addi %3, %285 : vector<1x256xi32>
    %c16_i32_107 = arith.constant 16 : i32
    %287 = vector.broadcast %c16_i32_107 : i32 to vector<1x256xi32>
    %288 = arith.cmpi slt, %286, %287 : vector<1x256xi32>
    %289 = arith.andi %284, %288 : vector<1x256xi1>
    %c-6_i32 = arith.constant -6 : i32
    %290 = vector.broadcast %c-6_i32 : i32 to vector<1x256xi32>
    %291 = arith.addi %3, %290 : vector<1x256xi32>
    %c0_i32_108 = arith.constant 0 : i32
    %292 = vector.broadcast %c0_i32_108 : i32 to vector<1x256xi32>
    %293 = arith.cmpi sge, %291, %292 : vector<1x256xi32>
    %c-6_i32_109 = arith.constant -6 : i32
    %294 = vector.broadcast %c-6_i32_109 : i32 to vector<1x256xi32>
    %295 = arith.addi %3, %294 : vector<1x256xi32>
    %c16_i32_110 = arith.constant 16 : i32
    %296 = vector.broadcast %c16_i32_110 : i32 to vector<1x256xi32>
    %297 = arith.cmpi slt, %295, %296 : vector<1x256xi32>
    %298 = arith.andi %293, %297 : vector<1x256xi1>
    %c-3_i32 = arith.constant -3 : i32
    %299 = vector.broadcast %c-3_i32 : i32 to vector<1x256xi32>
    %300 = arith.addi %3, %299 : vector<1x256xi32>
    %c0_i32_111 = arith.constant 0 : i32
    %301 = vector.broadcast %c0_i32_111 : i32 to vector<1x256xi32>
    %302 = arith.cmpi sge, %300, %301 : vector<1x256xi32>
    %c-3_i32_112 = arith.constant -3 : i32
    %303 = vector.broadcast %c-3_i32_112 : i32 to vector<1x256xi32>
    %304 = arith.addi %3, %303 : vector<1x256xi32>
    %c16_i32_113 = arith.constant 16 : i32
    %305 = vector.broadcast %c16_i32_113 : i32 to vector<1x256xi32>
    %306 = arith.cmpi slt, %304, %305 : vector<1x256xi32>
    %307 = arith.andi %302, %306 : vector<1x256xi1>
    %c3_i32 = arith.constant 3 : i32
    %308 = vector.broadcast %c3_i32 : i32 to vector<1x256xi32>
    %309 = arith.addi %3, %308 : vector<1x256xi32>
    %c0_i32_114 = arith.constant 0 : i32
    %310 = vector.broadcast %c0_i32_114 : i32 to vector<1x256xi32>
    %311 = arith.cmpi sge, %309, %310 : vector<1x256xi32>
    %c3_i32_115 = arith.constant 3 : i32
    %312 = vector.broadcast %c3_i32_115 : i32 to vector<1x256xi32>
    %313 = arith.addi %3, %312 : vector<1x256xi32>
    %c16_i32_116 = arith.constant 16 : i32
    %314 = vector.broadcast %c16_i32_116 : i32 to vector<1x256xi32>
    %315 = arith.cmpi slt, %313, %314 : vector<1x256xi32>
    %316 = arith.andi %311, %315 : vector<1x256xi1>
    %c6_i32 = arith.constant 6 : i32
    %317 = vector.broadcast %c6_i32 : i32 to vector<1x256xi32>
    %318 = arith.addi %3, %317 : vector<1x256xi32>
    %c0_i32_117 = arith.constant 0 : i32
    %319 = vector.broadcast %c0_i32_117 : i32 to vector<1x256xi32>
    %320 = arith.cmpi sge, %318, %319 : vector<1x256xi32>
    %c6_i32_118 = arith.constant 6 : i32
    %321 = vector.broadcast %c6_i32_118 : i32 to vector<1x256xi32>
    %322 = arith.addi %3, %321 : vector<1x256xi32>
    %c16_i32_119 = arith.constant 16 : i32
    %323 = vector.broadcast %c16_i32_119 : i32 to vector<1x256xi32>
    %324 = arith.cmpi slt, %322, %323 : vector<1x256xi32>
    %325 = arith.andi %320, %324 : vector<1x256xi1>
    %c9_i32 = arith.constant 9 : i32
    %326 = vector.broadcast %c9_i32 : i32 to vector<1x256xi32>
    %327 = arith.addi %3, %326 : vector<1x256xi32>
    %c0_i32_120 = arith.constant 0 : i32
    %328 = vector.broadcast %c0_i32_120 : i32 to vector<1x256xi32>
    %329 = arith.cmpi sge, %327, %328 : vector<1x256xi32>
    %c9_i32_121 = arith.constant 9 : i32
    %330 = vector.broadcast %c9_i32_121 : i32 to vector<1x256xi32>
    %331 = arith.addi %3, %330 : vector<1x256xi32>
    %c16_i32_122 = arith.constant 16 : i32
    %332 = vector.broadcast %c16_i32_122 : i32 to vector<1x256xi32>
    %333 = arith.cmpi slt, %331, %332 : vector<1x256xi32>
    %334 = arith.andi %329, %333 : vector<1x256xi1>
    %c0_123 = arith.constant 0 : index
    %c103 = arith.constant 103 : index
    %335 = vector.load %arg11[%c0_123, %c103] : memref<8x768xf32, #tpu.memory_space<vmem>>, vector<8x256xf32>
    %cst_124 = arith.constant 0.000000e+00 : f32
    %336 = vector.shape_cast %289 : vector<1x256xi1> to vector<1x256xi1>
    %337 = vector.broadcast %336 : vector<1x256xi1> to vector<8x256xi1>
    %338 = vector.broadcast %cst_124 : f32 to vector<8x256xf32>
    %339 = arith.select %337, %335, %338 : vector<8x256xi1>, vector<8x256xf32>
    %c0_125 = arith.constant 0 : index
    %c29 = arith.constant 29 : index
    %340 = vector.load %arg2[%c0_125, %c29] : memref<8x128xf32, #tpu.memory_space<vmem>>, vector<8x1xf32>
    %341 = vector.broadcast %340 : vector<8x1xf32> to vector<8x256xf32>
    %342 = arith.mulf %339, %341 : vector<8x256xf32>
    %c0_126 = arith.constant 0 : index
    %c106 = arith.constant 106 : index
    %343 = vector.load %arg11[%c0_126, %c106] : memref<8x768xf32, #tpu.memory_space<vmem>>, vector<8x256xf32>
    %cst_127 = arith.constant 0.000000e+00 : f32
    %344 = vector.shape_cast %298 : vector<1x256xi1> to vector<1x256xi1>
    %345 = vector.broadcast %344 : vector<1x256xi1> to vector<8x256xi1>
    %346 = vector.broadcast %cst_127 : f32 to vector<8x256xf32>
    %347 = arith.select %345, %343, %346 : vector<8x256xi1>, vector<8x256xf32>
    %c0_128 = arith.constant 0 : index
    %c30 = arith.constant 30 : index
    %348 = vector.load %arg2[%c0_128, %c30] : memref<8x128xf32, #tpu.memory_space<vmem>>, vector<8x1xf32>
    %349 = vector.broadcast %348 : vector<8x1xf32> to vector<8x256xf32>
    %350 = arith.mulf %347, %349 : vector<8x256xf32>
    %c0_129 = arith.constant 0 : index
    %c109 = arith.constant 109 : index
    %351 = vector.load %arg11[%c0_129, %c109] : memref<8x768xf32, #tpu.memory_space<vmem>>, vector<8x256xf32>
    %cst_130 = arith.constant 0.000000e+00 : f32
    %352 = vector.shape_cast %307 : vector<1x256xi1> to vector<1x256xi1>
    %353 = vector.broadcast %352 : vector<1x256xi1> to vector<8x256xi1>
    %354 = vector.broadcast %cst_130 : f32 to vector<8x256xf32>
    %355 = arith.select %353, %351, %354 : vector<8x256xi1>, vector<8x256xf32>
    %c0_131 = arith.constant 0 : index
    %c31 = arith.constant 31 : index
    %356 = vector.load %arg2[%c0_131, %c31] : memref<8x128xf32, #tpu.memory_space<vmem>>, vector<8x1xf32>
    %357 = vector.broadcast %356 : vector<8x1xf32> to vector<8x256xf32>
    %358 = arith.mulf %355, %357 : vector<8x256xf32>
    %c0_132 = arith.constant 0 : index
    %c112_133 = arith.constant 112 : index
    %359 = vector.load %arg11[%c0_132, %c112_133] : memref<8x768xf32, #tpu.memory_space<vmem>>, vector<8x256xf32>
    %c0_134 = arith.constant 0 : index
    %c32 = arith.constant 32 : index
    %360 = vector.load %arg2[%c0_134, %c32] : memref<8x128xf32, #tpu.memory_space<vmem>>, vector<8x1xf32>
    %361 = vector.broadcast %360 : vector<8x1xf32> to vector<8x256xf32>
    %362 = arith.mulf %359, %361 : vector<8x256xf32>
    %c0_135 = arith.constant 0 : index
    %c115 = arith.constant 115 : index
    %363 = vector.load %arg11[%c0_135, %c115] : memref<8x768xf32, #tpu.memory_space<vmem>>, vector<8x256xf32>
    %cst_136 = arith.constant 0.000000e+00 : f32
    %364 = vector.shape_cast %316 : vector<1x256xi1> to vector<1x256xi1>
    %365 = vector.broadcast %364 : vector<1x256xi1> to vector<8x256xi1>
    %366 = vector.broadcast %cst_136 : f32 to vector<8x256xf32>
    %367 = arith.select %365, %363, %366 : vector<8x256xi1>, vector<8x256xf32>
    %c0_137 = arith.constant 0 : index
    %c33 = arith.constant 33 : index
    %368 = vector.load %arg2[%c0_137, %c33] : memref<8x128xf32, #tpu.memory_space<vmem>>, vector<8x1xf32>
    %369 = vector.broadcast %368 : vector<8x1xf32> to vector<8x256xf32>
    %370 = arith.mulf %367, %369 : vector<8x256xf32>
    %371 = arith.addf %342, %370 : vector<8x256xf32>
    %c0_138 = arith.constant 0 : index
    %c118 = arith.constant 118 : index
    %372 = vector.load %arg11[%c0_138, %c118] : memref<8x768xf32, #tpu.memory_space<vmem>>, vector<8x256xf32>
    %cst_139 = arith.constant 0.000000e+00 : f32
    %373 = vector.shape_cast %325 : vector<1x256xi1> to vector<1x256xi1>
    %374 = vector.broadcast %373 : vector<1x256xi1> to vector<8x256xi1>
    %375 = vector.broadcast %cst_139 : f32 to vector<8x256xf32>
    %376 = arith.select %374, %372, %375 : vector<8x256xi1>, vector<8x256xf32>
    %c0_140 = arith.constant 0 : index
    %c34 = arith.constant 34 : index
    %377 = vector.load %arg2[%c0_140, %c34] : memref<8x128xf32, #tpu.memory_space<vmem>>, vector<8x1xf32>
    %378 = vector.broadcast %377 : vector<8x1xf32> to vector<8x256xf32>
    %379 = arith.mulf %376, %378 : vector<8x256xf32>
    %380 = arith.addf %350, %379 : vector<8x256xf32>
    %c0_141 = arith.constant 0 : index
    %c121 = arith.constant 121 : index
    %381 = vector.load %arg11[%c0_141, %c121] : memref<8x768xf32, #tpu.memory_space<vmem>>, vector<8x256xf32>
    %cst_142 = arith.constant 0.000000e+00 : f32
    %382 = vector.shape_cast %334 : vector<1x256xi1> to vector<1x256xi1>
    %383 = vector.broadcast %382 : vector<1x256xi1> to vector<8x256xi1>
    %384 = vector.broadcast %cst_142 : f32 to vector<8x256xf32>
    %385 = arith.select %383, %381, %384 : vector<8x256xi1>, vector<8x256xf32>
    %c0_143 = arith.constant 0 : index
    %c35 = arith.constant 35 : index
    %386 = vector.load %arg2[%c0_143, %c35] : memref<8x128xf32, #tpu.memory_space<vmem>>, vector<8x1xf32>
    %387 = vector.broadcast %386 : vector<8x1xf32> to vector<8x256xf32>
    %388 = arith.mulf %385, %387 : vector<8x256xf32>
    %389 = arith.addf %358, %388 : vector<8x256xf32>
    %c0_144 = arith.constant 0 : index
    %c151 = arith.constant 151 : index
    %390 = vector.load %arg11[%c0_144, %c151] : memref<8x768xf32, #tpu.memory_space<vmem>>, vector<8x256xf32>
    %cst_145 = arith.constant 0.000000e+00 : f32
    %391 = vector.shape_cast %289 : vector<1x256xi1> to vector<1x256xi1>
    %392 = vector.broadcast %391 : vector<1x256xi1> to vector<8x256xi1>
    %393 = vector.broadcast %cst_145 : f32 to vector<8x256xf32>
    %394 = arith.select %392, %390, %393 : vector<8x256xi1>, vector<8x256xf32>
    %c0_146 = arith.constant 0 : index
    %c36 = arith.constant 36 : index
    %395 = vector.load %arg2[%c0_146, %c36] : memref<8x128xf32, #tpu.memory_space<vmem>>, vector<8x1xf32>
    %396 = vector.broadcast %395 : vector<8x1xf32> to vector<8x256xf32>
    %397 = arith.mulf %394, %396 : vector<8x256xf32>
    %398 = arith.addf %362, %397 : vector<8x256xf32>
    %c0_147 = arith.constant 0 : index
    %c154 = arith.constant 154 : index
    %399 = vector.load %arg11[%c0_147, %c154] : memref<8x768xf32, #tpu.memory_space<vmem>>, vector<8x256xf32>
    %cst_148 = arith.constant 0.000000e+00 : f32
    %400 = vector.shape_cast %298 : vector<1x256xi1> to vector<1x256xi1>
    %401 = vector.broadcast %400 : vector<1x256xi1> to vector<8x256xi1>
    %402 = vector.broadcast %cst_148 : f32 to vector<8x256xf32>
    %403 = arith.select %401, %399, %402 : vector<8x256xi1>, vector<8x256xf32>
    %c0_149 = arith.constant 0 : index
    %c37 = arith.constant 37 : index
    %404 = vector.load %arg2[%c0_149, %c37] : memref<8x128xf32, #tpu.memory_space<vmem>>, vector<8x1xf32>
    %405 = vector.broadcast %404 : vector<8x1xf32> to vector<8x256xf32>
    %406 = arith.mulf %403, %405 : vector<8x256xf32>
    %407 = arith.addf %371, %406 : vector<8x256xf32>
    %c0_150 = arith.constant 0 : index
    %c157 = arith.constant 157 : index
    %408 = vector.load %arg11[%c0_150, %c157] : memref<8x768xf32, #tpu.memory_space<vmem>>, vector<8x256xf32>
    %cst_151 = arith.constant 0.000000e+00 : f32
    %409 = vector.shape_cast %307 : vector<1x256xi1> to vector<1x256xi1>
    %410 = vector.broadcast %409 : vector<1x256xi1> to vector<8x256xi1>
    %411 = vector.broadcast %cst_151 : f32 to vector<8x256xf32>
    %412 = arith.select %410, %408, %411 : vector<8x256xi1>, vector<8x256xf32>
    %c0_152 = arith.constant 0 : index
    %c38 = arith.constant 38 : index
    %413 = vector.load %arg2[%c0_152, %c38] : memref<8x128xf32, #tpu.memory_space<vmem>>, vector<8x1xf32>
    %414 = vector.broadcast %413 : vector<8x1xf32> to vector<8x256xf32>
    %415 = arith.mulf %412, %414 : vector<8x256xf32>
    %416 = arith.addf %380, %415 : vector<8x256xf32>
    %c0_153 = arith.constant 0 : index
    %c160_154 = arith.constant 160 : index
    %417 = vector.load %arg11[%c0_153, %c160_154] : memref<8x768xf32, #tpu.memory_space<vmem>>, vector<8x256xf32>
    %c0_155 = arith.constant 0 : index
    %c39 = arith.constant 39 : index
    %418 = vector.load %arg2[%c0_155, %c39] : memref<8x128xf32, #tpu.memory_space<vmem>>, vector<8x1xf32>
    %419 = vector.broadcast %418 : vector<8x1xf32> to vector<8x256xf32>
    %420 = arith.mulf %417, %419 : vector<8x256xf32>
    %421 = arith.addf %389, %420 : vector<8x256xf32>
    %c0_156 = arith.constant 0 : index
    %c163 = arith.constant 163 : index
    %422 = vector.load %arg11[%c0_156, %c163] : memref<8x768xf32, #tpu.memory_space<vmem>>, vector<8x256xf32>
    %cst_157 = arith.constant 0.000000e+00 : f32
    %423 = vector.shape_cast %316 : vector<1x256xi1> to vector<1x256xi1>
    %424 = vector.broadcast %423 : vector<1x256xi1> to vector<8x256xi1>
    %425 = vector.broadcast %cst_157 : f32 to vector<8x256xf32>
    %426 = arith.select %424, %422, %425 : vector<8x256xi1>, vector<8x256xf32>
    %c0_158 = arith.constant 0 : index
    %c40 = arith.constant 40 : index
    %427 = vector.load %arg2[%c0_158, %c40] : memref<8x128xf32, #tpu.memory_space<vmem>>, vector<8x1xf32>
    %428 = vector.broadcast %427 : vector<8x1xf32> to vector<8x256xf32>
    %429 = arith.mulf %426, %428 : vector<8x256xf32>
    %430 = arith.addf %398, %429 : vector<8x256xf32>
    %c0_159 = arith.constant 0 : index
    %c166 = arith.constant 166 : index
    %431 = vector.load %arg11[%c0_159, %c166] : memref<8x768xf32, #tpu.memory_space<vmem>>, vector<8x256xf32>
    %cst_160 = arith.constant 0.000000e+00 : f32
    %432 = vector.shape_cast %325 : vector<1x256xi1> to vector<1x256xi1>
    %433 = vector.broadcast %432 : vector<1x256xi1> to vector<8x256xi1>
    %434 = vector.broadcast %cst_160 : f32 to vector<8x256xf32>
    %435 = arith.select %433, %431, %434 : vector<8x256xi1>, vector<8x256xf32>
    %c0_161 = arith.constant 0 : index
    %c41 = arith.constant 41 : index
    %436 = vector.load %arg2[%c0_161, %c41] : memref<8x128xf32, #tpu.memory_space<vmem>>, vector<8x1xf32>
    %437 = vector.broadcast %436 : vector<8x1xf32> to vector<8x256xf32>
    %438 = arith.mulf %435, %437 : vector<8x256xf32>
    %439 = arith.addf %407, %438 : vector<8x256xf32>
    %c0_162 = arith.constant 0 : index
    %c169 = arith.constant 169 : index
    %440 = vector.load %arg11[%c0_162, %c169] : memref<8x768xf32, #tpu.memory_space<vmem>>, vector<8x256xf32>
    %cst_163 = arith.constant 0.000000e+00 : f32
    %441 = vector.shape_cast %334 : vector<1x256xi1> to vector<1x256xi1>
    %442 = vector.broadcast %441 : vector<1x256xi1> to vector<8x256xi1>
    %443 = vector.broadcast %cst_163 : f32 to vector<8x256xf32>
    %444 = arith.select %442, %440, %443 : vector<8x256xi1>, vector<8x256xf32>
    %c0_164 = arith.constant 0 : index
    %c42 = arith.constant 42 : index
    %445 = vector.load %arg2[%c0_164, %c42] : memref<8x128xf32, #tpu.memory_space<vmem>>, vector<8x1xf32>
    %446 = vector.broadcast %445 : vector<8x1xf32> to vector<8x256xf32>
    %447 = arith.mulf %444, %446 : vector<8x256xf32>
    %448 = arith.addf %416, %447 : vector<8x256xf32>
    %c0_165 = arith.constant 0 : index
    %c199 = arith.constant 199 : index
    %449 = vector.load %arg11[%c0_165, %c199] : memref<8x768xf32, #tpu.memory_space<vmem>>, vector<8x256xf32>
    %cst_166 = arith.constant 0.000000e+00 : f32
    %450 = vector.shape_cast %289 : vector<1x256xi1> to vector<1x256xi1>
    %451 = vector.broadcast %450 : vector<1x256xi1> to vector<8x256xi1>
    %452 = vector.broadcast %cst_166 : f32 to vector<8x256xf32>
    %453 = arith.select %451, %449, %452 : vector<8x256xi1>, vector<8x256xf32>
    %c0_167 = arith.constant 0 : index
    %c43 = arith.constant 43 : index
    %454 = vector.load %arg2[%c0_167, %c43] : memref<8x128xf32, #tpu.memory_space<vmem>>, vector<8x1xf32>
    %455 = vector.broadcast %454 : vector<8x1xf32> to vector<8x256xf32>
    %456 = arith.mulf %453, %455 : vector<8x256xf32>
    %457 = arith.addf %421, %456 : vector<8x256xf32>
    %c0_168 = arith.constant 0 : index
    %c202 = arith.constant 202 : index
    %458 = vector.load %arg11[%c0_168, %c202] : memref<8x768xf32, #tpu.memory_space<vmem>>, vector<8x256xf32>
    %cst_169 = arith.constant 0.000000e+00 : f32
    %459 = vector.shape_cast %298 : vector<1x256xi1> to vector<1x256xi1>
    %460 = vector.broadcast %459 : vector<1x256xi1> to vector<8x256xi1>
    %461 = vector.broadcast %cst_169 : f32 to vector<8x256xf32>
    %462 = arith.select %460, %458, %461 : vector<8x256xi1>, vector<8x256xf32>
    %c0_170 = arith.constant 0 : index
    %c44 = arith.constant 44 : index
    %463 = vector.load %arg2[%c0_170, %c44] : memref<8x128xf32, #tpu.memory_space<vmem>>, vector<8x1xf32>
    %464 = vector.broadcast %463 : vector<8x1xf32> to vector<8x256xf32>
    %465 = arith.mulf %462, %464 : vector<8x256xf32>
    %466 = arith.addf %430, %465 : vector<8x256xf32>
    %c0_171 = arith.constant 0 : index
    %c205 = arith.constant 205 : index
    %467 = vector.load %arg11[%c0_171, %c205] : memref<8x768xf32, #tpu.memory_space<vmem>>, vector<8x256xf32>
    %cst_172 = arith.constant 0.000000e+00 : f32
    %468 = vector.shape_cast %307 : vector<1x256xi1> to vector<1x256xi1>
    %469 = vector.broadcast %468 : vector<1x256xi1> to vector<8x256xi1>
    %470 = vector.broadcast %cst_172 : f32 to vector<8x256xf32>
    %471 = arith.select %469, %467, %470 : vector<8x256xi1>, vector<8x256xf32>
    %c0_173 = arith.constant 0 : index
    %c45 = arith.constant 45 : index
    %472 = vector.load %arg2[%c0_173, %c45] : memref<8x128xf32, #tpu.memory_space<vmem>>, vector<8x1xf32>
    %473 = vector.broadcast %472 : vector<8x1xf32> to vector<8x256xf32>
    %474 = arith.mulf %471, %473 : vector<8x256xf32>
    %475 = arith.addf %439, %474 : vector<8x256xf32>
    %c0_174 = arith.constant 0 : index
    %c208 = arith.constant 208 : index
    %476 = vector.load %arg11[%c0_174, %c208] : memref<8x768xf32, #tpu.memory_space<vmem>>, vector<8x256xf32>
    %c0_175 = arith.constant 0 : index
    %c46 = arith.constant 46 : index
    %477 = vector.load %arg2[%c0_175, %c46] : memref<8x128xf32, #tpu.memory_space<vmem>>, vector<8x1xf32>
    %478 = vector.broadcast %477 : vector<8x1xf32> to vector<8x256xf32>
    %479 = arith.mulf %476, %478 : vector<8x256xf32>
    %480 = arith.addf %448, %479 : vector<8x256xf32>
    %c0_176 = arith.constant 0 : index
    %c211 = arith.constant 211 : index
    %481 = vector.load %arg11[%c0_176, %c211] : memref<8x768xf32, #tpu.memory_space<vmem>>, vector<8x256xf32>
    %cst_177 = arith.constant 0.000000e+00 : f32
    %482 = vector.shape_cast %316 : vector<1x256xi1> to vector<1x256xi1>
    %483 = vector.broadcast %482 : vector<1x256xi1> to vector<8x256xi1>
    %484 = vector.broadcast %cst_177 : f32 to vector<8x256xf32>
    %485 = arith.select %483, %481, %484 : vector<8x256xi1>, vector<8x256xf32>
    %c0_178 = arith.constant 0 : index
    %c47 = arith.constant 47 : index
    %486 = vector.load %arg2[%c0_178, %c47] : memref<8x128xf32, #tpu.memory_space<vmem>>, vector<8x1xf32>
    %487 = vector.broadcast %486 : vector<8x1xf32> to vector<8x256xf32>
    %488 = arith.mulf %485, %487 : vector<8x256xf32>
    %489 = arith.addf %457, %488 : vector<8x256xf32>
    %c0_179 = arith.constant 0 : index
    %c214 = arith.constant 214 : index
    %490 = vector.load %arg11[%c0_179, %c214] : memref<8x768xf32, #tpu.memory_space<vmem>>, vector<8x256xf32>
    %cst_180 = arith.constant 0.000000e+00 : f32
    %491 = vector.shape_cast %325 : vector<1x256xi1> to vector<1x256xi1>
    %492 = vector.broadcast %491 : vector<1x256xi1> to vector<8x256xi1>
    %493 = vector.broadcast %cst_180 : f32 to vector<8x256xf32>
    %494 = arith.select %492, %490, %493 : vector<8x256xi1>, vector<8x256xf32>
    %c0_181 = arith.constant 0 : index
    %c48 = arith.constant 48 : index
    %495 = vector.load %arg2[%c0_181, %c48] : memref<8x128xf32, #tpu.memory_space<vmem>>, vector<8x1xf32>
    %496 = vector.broadcast %495 : vector<8x1xf32> to vector<8x256xf32>
    %497 = arith.mulf %494, %496 : vector<8x256xf32>
    %498 = arith.addf %466, %497 : vector<8x256xf32>
    %c0_182 = arith.constant 0 : index
    %c217 = arith.constant 217 : index
    %499 = vector.load %arg11[%c0_182, %c217] : memref<8x768xf32, #tpu.memory_space<vmem>>, vector<8x256xf32>
    %cst_183 = arith.constant 0.000000e+00 : f32
    %500 = vector.shape_cast %334 : vector<1x256xi1> to vector<1x256xi1>
    %501 = vector.broadcast %500 : vector<1x256xi1> to vector<8x256xi1>
    %502 = vector.broadcast %cst_183 : f32 to vector<8x256xf32>
    %503 = arith.select %501, %499, %502 : vector<8x256xi1>, vector<8x256xf32>
    %c0_184 = arith.constant 0 : index
    %c49 = arith.constant 49 : index
    %504 = vector.load %arg2[%c0_184, %c49] : memref<8x128xf32, #tpu.memory_space<vmem>>, vector<8x1xf32>
    %505 = vector.broadcast %504 : vector<8x1xf32> to vector<8x256xf32>
    %506 = arith.mulf %503, %505 : vector<8x256xf32>
    %507 = arith.addf %475, %506 : vector<8x256xf32>
    %c0_185 = arith.constant 0 : index
    %c247 = arith.constant 247 : index
    %508 = vector.load %arg11[%c0_185, %c247] : memref<8x768xf32, #tpu.memory_space<vmem>>, vector<8x256xf32>
    %cst_186 = arith.constant 0.000000e+00 : f32
    %509 = vector.shape_cast %289 : vector<1x256xi1> to vector<1x256xi1>
    %510 = vector.broadcast %509 : vector<1x256xi1> to vector<8x256xi1>
    %511 = vector.broadcast %cst_186 : f32 to vector<8x256xf32>
    %512 = arith.select %510, %508, %511 : vector<8x256xi1>, vector<8x256xf32>
    %c0_187 = arith.constant 0 : index
    %c50 = arith.constant 50 : index
    %513 = vector.load %arg2[%c0_187, %c50] : memref<8x128xf32, #tpu.memory_space<vmem>>, vector<8x1xf32>
    %514 = vector.broadcast %513 : vector<8x1xf32> to vector<8x256xf32>
    %515 = arith.mulf %512, %514 : vector<8x256xf32>
    %516 = arith.addf %480, %515 : vector<8x256xf32>
    %c0_188 = arith.constant 0 : index
    %c250 = arith.constant 250 : index
    %517 = vector.load %arg11[%c0_188, %c250] : memref<8x768xf32, #tpu.memory_space<vmem>>, vector<8x256xf32>
    %cst_189 = arith.constant 0.000000e+00 : f32
    %518 = vector.shape_cast %298 : vector<1x256xi1> to vector<1x256xi1>
    %519 = vector.broadcast %518 : vector<1x256xi1> to vector<8x256xi1>
    %520 = vector.broadcast %cst_189 : f32 to vector<8x256xf32>
    %521 = arith.select %519, %517, %520 : vector<8x256xi1>, vector<8x256xf32>
    %c0_190 = arith.constant 0 : index
    %c51 = arith.constant 51 : index
    %522 = vector.load %arg2[%c0_190, %c51] : memref<8x128xf32, #tpu.memory_space<vmem>>, vector<8x1xf32>
    %523 = vector.broadcast %522 : vector<8x1xf32> to vector<8x256xf32>
    %524 = arith.mulf %521, %523 : vector<8x256xf32>
    %525 = arith.addf %489, %524 : vector<8x256xf32>
    %c0_191 = arith.constant 0 : index
    %c253 = arith.constant 253 : index
    %526 = vector.load %arg11[%c0_191, %c253] : memref<8x768xf32, #tpu.memory_space<vmem>>, vector<8x256xf32>
    %cst_192 = arith.constant 0.000000e+00 : f32
    %527 = vector.shape_cast %307 : vector<1x256xi1> to vector<1x256xi1>
    %528 = vector.broadcast %527 : vector<1x256xi1> to vector<8x256xi1>
    %529 = vector.broadcast %cst_192 : f32 to vector<8x256xf32>
    %530 = arith.select %528, %526, %529 : vector<8x256xi1>, vector<8x256xf32>
    %c0_193 = arith.constant 0 : index
    %c52 = arith.constant 52 : index
    %531 = vector.load %arg2[%c0_193, %c52] : memref<8x128xf32, #tpu.memory_space<vmem>>, vector<8x1xf32>
    %532 = vector.broadcast %531 : vector<8x1xf32> to vector<8x256xf32>
    %533 = arith.mulf %530, %532 : vector<8x256xf32>
    %534 = arith.addf %498, %533 : vector<8x256xf32>
    %c0_194 = arith.constant 0 : index
    %c256_195 = arith.constant 256 : index
    %535 = vector.load %arg11[%c0_194, %c256_195] : memref<8x768xf32, #tpu.memory_space<vmem>>, vector<8x256xf32>
    %c0_196 = arith.constant 0 : index
    %c53 = arith.constant 53 : index
    %536 = vector.load %arg2[%c0_196, %c53] : memref<8x128xf32, #tpu.memory_space<vmem>>, vector<8x1xf32>
    %537 = vector.broadcast %536 : vector<8x1xf32> to vector<8x256xf32>
    %538 = arith.mulf %535, %537 : vector<8x256xf32>
    %539 = arith.addf %507, %538 : vector<8x256xf32>
    %c0_197 = arith.constant 0 : index
    %c259 = arith.constant 259 : index
    %540 = vector.load %arg11[%c0_197, %c259] : memref<8x768xf32, #tpu.memory_space<vmem>>, vector<8x256xf32>
    %cst_198 = arith.constant 0.000000e+00 : f32
    %541 = vector.shape_cast %316 : vector<1x256xi1> to vector<1x256xi1>
    %542 = vector.broadcast %541 : vector<1x256xi1> to vector<8x256xi1>
    %543 = vector.broadcast %cst_198 : f32 to vector<8x256xf32>
    %544 = arith.select %542, %540, %543 : vector<8x256xi1>, vector<8x256xf32>
    %c0_199 = arith.constant 0 : index
    %c54 = arith.constant 54 : index
    %545 = vector.load %arg2[%c0_199, %c54] : memref<8x128xf32, #tpu.memory_space<vmem>>, vector<8x1xf32>
    %546 = vector.broadcast %545 : vector<8x1xf32> to vector<8x256xf32>
    %547 = arith.mulf %544, %546 : vector<8x256xf32>
    %548 = arith.addf %516, %547 : vector<8x256xf32>
    %c0_200 = arith.constant 0 : index
    %c262 = arith.constant 262 : index
    %549 = vector.load %arg11[%c0_200, %c262] : memref<8x768xf32, #tpu.memory_space<vmem>>, vector<8x256xf32>
    %cst_201 = arith.constant 0.000000e+00 : f32
    %550 = vector.shape_cast %325 : vector<1x256xi1> to vector<1x256xi1>
    %551 = vector.broadcast %550 : vector<1x256xi1> to vector<8x256xi1>
    %552 = vector.broadcast %cst_201 : f32 to vector<8x256xf32>
    %553 = arith.select %551, %549, %552 : vector<8x256xi1>, vector<8x256xf32>
    %c0_202 = arith.constant 0 : index
    %c55 = arith.constant 55 : index
    %554 = vector.load %arg2[%c0_202, %c55] : memref<8x128xf32, #tpu.memory_space<vmem>>, vector<8x1xf32>
    %555 = vector.broadcast %554 : vector<8x1xf32> to vector<8x256xf32>
    %556 = arith.mulf %553, %555 : vector<8x256xf32>
    %557 = arith.addf %525, %556 : vector<8x256xf32>
    %c0_203 = arith.constant 0 : index
    %c265 = arith.constant 265 : index
    %558 = vector.load %arg11[%c0_203, %c265] : memref<8x768xf32, #tpu.memory_space<vmem>>, vector<8x256xf32>
    %cst_204 = arith.constant 0.000000e+00 : f32
    %559 = vector.shape_cast %334 : vector<1x256xi1> to vector<1x256xi1>
    %560 = vector.broadcast %559 : vector<1x256xi1> to vector<8x256xi1>
    %561 = vector.broadcast %cst_204 : f32 to vector<8x256xf32>
    %562 = arith.select %560, %558, %561 : vector<8x256xi1>, vector<8x256xf32>
    %c0_205 = arith.constant 0 : index
    %c56 = arith.constant 56 : index
    %563 = vector.load %arg2[%c0_205, %c56] : memref<8x128xf32, #tpu.memory_space<vmem>>, vector<8x1xf32>
    %564 = vector.broadcast %563 : vector<8x1xf32> to vector<8x256xf32>
    %565 = arith.mulf %562, %564 : vector<8x256xf32>
    %566 = arith.addf %534, %565 : vector<8x256xf32>
    %c0_206 = arith.constant 0 : index
    %c295 = arith.constant 295 : index
    %567 = vector.load %arg11[%c0_206, %c295] : memref<8x768xf32, #tpu.memory_space<vmem>>, vector<8x256xf32>
    %cst_207 = arith.constant 0.000000e+00 : f32
    %568 = vector.shape_cast %289 : vector<1x256xi1> to vector<1x256xi1>
    %569 = vector.broadcast %568 : vector<1x256xi1> to vector<8x256xi1>
    %570 = vector.broadcast %cst_207 : f32 to vector<8x256xf32>
    %571 = arith.select %569, %567, %570 : vector<8x256xi1>, vector<8x256xf32>
    %c0_208 = arith.constant 0 : index
    %c57 = arith.constant 57 : index
    %572 = vector.load %arg2[%c0_208, %c57] : memref<8x128xf32, #tpu.memory_space<vmem>>, vector<8x1xf32>
    %573 = vector.broadcast %572 : vector<8x1xf32> to vector<8x256xf32>
    %574 = arith.mulf %571, %573 : vector<8x256xf32>
    %575 = arith.addf %539, %574 : vector<8x256xf32>
    %c0_209 = arith.constant 0 : index
    %c298 = arith.constant 298 : index
    %576 = vector.load %arg11[%c0_209, %c298] : memref<8x768xf32, #tpu.memory_space<vmem>>, vector<8x256xf32>
    %cst_210 = arith.constant 0.000000e+00 : f32
    %577 = vector.shape_cast %298 : vector<1x256xi1> to vector<1x256xi1>
    %578 = vector.broadcast %577 : vector<1x256xi1> to vector<8x256xi1>
    %579 = vector.broadcast %cst_210 : f32 to vector<8x256xf32>
    %580 = arith.select %578, %576, %579 : vector<8x256xi1>, vector<8x256xf32>
    %c0_211 = arith.constant 0 : index
    %c58 = arith.constant 58 : index
    %581 = vector.load %arg2[%c0_211, %c58] : memref<8x128xf32, #tpu.memory_space<vmem>>, vector<8x1xf32>
    %582 = vector.broadcast %581 : vector<8x1xf32> to vector<8x256xf32>
    %583 = arith.mulf %580, %582 : vector<8x256xf32>
    %584 = arith.addf %548, %583 : vector<8x256xf32>
    %c0_212 = arith.constant 0 : index
    %c301 = arith.constant 301 : index
    %585 = vector.load %arg11[%c0_212, %c301] : memref<8x768xf32, #tpu.memory_space<vmem>>, vector<8x256xf32>
    %cst_213 = arith.constant 0.000000e+00 : f32
    %586 = vector.shape_cast %307 : vector<1x256xi1> to vector<1x256xi1>
    %587 = vector.broadcast %586 : vector<1x256xi1> to vector<8x256xi1>
    %588 = vector.broadcast %cst_213 : f32 to vector<8x256xf32>
    %589 = arith.select %587, %585, %588 : vector<8x256xi1>, vector<8x256xf32>
    %c0_214 = arith.constant 0 : index
    %c59 = arith.constant 59 : index
    %590 = vector.load %arg2[%c0_214, %c59] : memref<8x128xf32, #tpu.memory_space<vmem>>, vector<8x1xf32>
    %591 = vector.broadcast %590 : vector<8x1xf32> to vector<8x256xf32>
    %592 = arith.mulf %589, %591 : vector<8x256xf32>
    %593 = arith.addf %557, %592 : vector<8x256xf32>
    %c0_215 = arith.constant 0 : index
    %c304 = arith.constant 304 : index
    %594 = vector.load %arg11[%c0_215, %c304] : memref<8x768xf32, #tpu.memory_space<vmem>>, vector<8x256xf32>
    %c0_216 = arith.constant 0 : index
    %c60 = arith.constant 60 : index
    %595 = vector.load %arg2[%c0_216, %c60] : memref<8x128xf32, #tpu.memory_space<vmem>>, vector<8x1xf32>
    %596 = vector.broadcast %595 : vector<8x1xf32> to vector<8x256xf32>
    %597 = arith.mulf %594, %596 : vector<8x256xf32>
    %598 = arith.addf %566, %597 : vector<8x256xf32>
    %c0_217 = arith.constant 0 : index
    %c307 = arith.constant 307 : index
    %599 = vector.load %arg11[%c0_217, %c307] : memref<8x768xf32, #tpu.memory_space<vmem>>, vector<8x256xf32>
    %cst_218 = arith.constant 0.000000e+00 : f32
    %600 = vector.shape_cast %316 : vector<1x256xi1> to vector<1x256xi1>
    %601 = vector.broadcast %600 : vector<1x256xi1> to vector<8x256xi1>
    %602 = vector.broadcast %cst_218 : f32 to vector<8x256xf32>
    %603 = arith.select %601, %599, %602 : vector<8x256xi1>, vector<8x256xf32>
    %c0_219 = arith.constant 0 : index
    %c61 = arith.constant 61 : index
    %604 = vector.load %arg2[%c0_219, %c61] : memref<8x128xf32, #tpu.memory_space<vmem>>, vector<8x1xf32>
    %605 = vector.broadcast %604 : vector<8x1xf32> to vector<8x256xf32>
    %606 = arith.mulf %603, %605 : vector<8x256xf32>
    %607 = arith.addf %575, %606 : vector<8x256xf32>
    %c0_220 = arith.constant 0 : index
    %c310 = arith.constant 310 : index
    %608 = vector.load %arg11[%c0_220, %c310] : memref<8x768xf32, #tpu.memory_space<vmem>>, vector<8x256xf32>
    %cst_221 = arith.constant 0.000000e+00 : f32
    %609 = vector.shape_cast %325 : vector<1x256xi1> to vector<1x256xi1>
    %610 = vector.broadcast %609 : vector<1x256xi1> to vector<8x256xi1>
    %611 = vector.broadcast %cst_221 : f32 to vector<8x256xf32>
    %612 = arith.select %610, %608, %611 : vector<8x256xi1>, vector<8x256xf32>
    %c0_222 = arith.constant 0 : index
    %c62 = arith.constant 62 : index
    %613 = vector.load %arg2[%c0_222, %c62] : memref<8x128xf32, #tpu.memory_space<vmem>>, vector<8x1xf32>
    %614 = vector.broadcast %613 : vector<8x1xf32> to vector<8x256xf32>
    %615 = arith.mulf %612, %614 : vector<8x256xf32>
    %616 = arith.addf %584, %615 : vector<8x256xf32>
    %c0_223 = arith.constant 0 : index
    %c313 = arith.constant 313 : index
    %617 = vector.load %arg11[%c0_223, %c313] : memref<8x768xf32, #tpu.memory_space<vmem>>, vector<8x256xf32>
    %cst_224 = arith.constant 0.000000e+00 : f32
    %618 = vector.shape_cast %334 : vector<1x256xi1> to vector<1x256xi1>
    %619 = vector.broadcast %618 : vector<1x256xi1> to vector<8x256xi1>
    %620 = vector.broadcast %cst_224 : f32 to vector<8x256xf32>
    %621 = arith.select %619, %617, %620 : vector<8x256xi1>, vector<8x256xf32>
    %c0_225 = arith.constant 0 : index
    %c63 = arith.constant 63 : index
    %622 = vector.load %arg2[%c0_225, %c63] : memref<8x128xf32, #tpu.memory_space<vmem>>, vector<8x1xf32>
    %623 = vector.broadcast %622 : vector<8x1xf32> to vector<8x256xf32>
    %624 = arith.mulf %621, %623 : vector<8x256xf32>
    %625 = arith.addf %593, %624 : vector<8x256xf32>
    %c0_226 = arith.constant 0 : index
    %c343 = arith.constant 343 : index
    %626 = vector.load %arg11[%c0_226, %c343] : memref<8x768xf32, #tpu.memory_space<vmem>>, vector<8x256xf32>
    %cst_227 = arith.constant 0.000000e+00 : f32
    %627 = vector.shape_cast %289 : vector<1x256xi1> to vector<1x256xi1>
    %628 = vector.broadcast %627 : vector<1x256xi1> to vector<8x256xi1>
    %629 = vector.broadcast %cst_227 : f32 to vector<8x256xf32>
    %630 = arith.select %628, %626, %629 : vector<8x256xi1>, vector<8x256xf32>
    %c0_228 = arith.constant 0 : index
    %c64 = arith.constant 64 : index
    %631 = vector.load %arg2[%c0_228, %c64] : memref<8x128xf32, #tpu.memory_space<vmem>>, vector<8x1xf32>
    %632 = vector.broadcast %631 : vector<8x1xf32> to vector<8x256xf32>
    %633 = arith.mulf %630, %632 : vector<8x256xf32>
    %634 = arith.addf %598, %633 : vector<8x256xf32>
    %c0_229 = arith.constant 0 : index
    %c346 = arith.constant 346 : index
    %635 = vector.load %arg11[%c0_229, %c346] : memref<8x768xf32, #tpu.memory_space<vmem>>, vector<8x256xf32>
    %cst_230 = arith.constant 0.000000e+00 : f32
    %636 = vector.shape_cast %298 : vector<1x256xi1> to vector<1x256xi1>
    %637 = vector.broadcast %636 : vector<1x256xi1> to vector<8x256xi1>
    %638 = vector.broadcast %cst_230 : f32 to vector<8x256xf32>
    %639 = arith.select %637, %635, %638 : vector<8x256xi1>, vector<8x256xf32>
    %c0_231 = arith.constant 0 : index
    %c65 = arith.constant 65 : index
    %640 = vector.load %arg2[%c0_231, %c65] : memref<8x128xf32, #tpu.memory_space<vmem>>, vector<8x1xf32>
    %641 = vector.broadcast %640 : vector<8x1xf32> to vector<8x256xf32>
    %642 = arith.mulf %639, %641 : vector<8x256xf32>
    %643 = arith.addf %607, %642 : vector<8x256xf32>
    %c0_232 = arith.constant 0 : index
    %c349 = arith.constant 349 : index
    %644 = vector.load %arg11[%c0_232, %c349] : memref<8x768xf32, #tpu.memory_space<vmem>>, vector<8x256xf32>
    %cst_233 = arith.constant 0.000000e+00 : f32
    %645 = vector.shape_cast %307 : vector<1x256xi1> to vector<1x256xi1>
    %646 = vector.broadcast %645 : vector<1x256xi1> to vector<8x256xi1>
    %647 = vector.broadcast %cst_233 : f32 to vector<8x256xf32>
    %648 = arith.select %646, %644, %647 : vector<8x256xi1>, vector<8x256xf32>
    %c0_234 = arith.constant 0 : index
    %c66 = arith.constant 66 : index
    %649 = vector.load %arg2[%c0_234, %c66] : memref<8x128xf32, #tpu.memory_space<vmem>>, vector<8x1xf32>
    %650 = vector.broadcast %649 : vector<8x1xf32> to vector<8x256xf32>
    %651 = arith.mulf %648, %650 : vector<8x256xf32>
    %652 = arith.addf %616, %651 : vector<8x256xf32>
    %c0_235 = arith.constant 0 : index
    %c352 = arith.constant 352 : index
    %653 = vector.load %arg11[%c0_235, %c352] : memref<8x768xf32, #tpu.memory_space<vmem>>, vector<8x256xf32>
    %c0_236 = arith.constant 0 : index
    %c67 = arith.constant 67 : index
    %654 = vector.load %arg2[%c0_236, %c67] : memref<8x128xf32, #tpu.memory_space<vmem>>, vector<8x1xf32>
    %655 = vector.broadcast %654 : vector<8x1xf32> to vector<8x256xf32>
    %656 = arith.mulf %653, %655 : vector<8x256xf32>
    %657 = arith.addf %625, %656 : vector<8x256xf32>
    %c0_237 = arith.constant 0 : index
    %c355 = arith.constant 355 : index
    %658 = vector.load %arg11[%c0_237, %c355] : memref<8x768xf32, #tpu.memory_space<vmem>>, vector<8x256xf32>
    %cst_238 = arith.constant 0.000000e+00 : f32
    %659 = vector.shape_cast %316 : vector<1x256xi1> to vector<1x256xi1>
    %660 = vector.broadcast %659 : vector<1x256xi1> to vector<8x256xi1>
    %661 = vector.broadcast %cst_238 : f32 to vector<8x256xf32>
    %662 = arith.select %660, %658, %661 : vector<8x256xi1>, vector<8x256xf32>
    %c0_239 = arith.constant 0 : index
    %c68 = arith.constant 68 : index
    %663 = vector.load %arg2[%c0_239, %c68] : memref<8x128xf32, #tpu.memory_space<vmem>>, vector<8x1xf32>
    %664 = vector.broadcast %663 : vector<8x1xf32> to vector<8x256xf32>
    %665 = arith.mulf %662, %664 : vector<8x256xf32>
    %666 = arith.addf %634, %665 : vector<8x256xf32>
    %c0_240 = arith.constant 0 : index
    %c358 = arith.constant 358 : index
    %667 = vector.load %arg11[%c0_240, %c358] : memref<8x768xf32, #tpu.memory_space<vmem>>, vector<8x256xf32>
    %cst_241 = arith.constant 0.000000e+00 : f32
    %668 = vector.shape_cast %325 : vector<1x256xi1> to vector<1x256xi1>
    %669 = vector.broadcast %668 : vector<1x256xi1> to vector<8x256xi1>
    %670 = vector.broadcast %cst_241 : f32 to vector<8x256xf32>
    %671 = arith.select %669, %667, %670 : vector<8x256xi1>, vector<8x256xf32>
    %c0_242 = arith.constant 0 : index
    %c69 = arith.constant 69 : index
    %672 = vector.load %arg2[%c0_242, %c69] : memref<8x128xf32, #tpu.memory_space<vmem>>, vector<8x1xf32>
    %673 = vector.broadcast %672 : vector<8x1xf32> to vector<8x256xf32>
    %674 = arith.mulf %671, %673 : vector<8x256xf32>
    %675 = arith.addf %643, %674 : vector<8x256xf32>
    %c0_243 = arith.constant 0 : index
    %c361 = arith.constant 361 : index
    %676 = vector.load %arg11[%c0_243, %c361] : memref<8x768xf32, #tpu.memory_space<vmem>>, vector<8x256xf32>
    %cst_244 = arith.constant 0.000000e+00 : f32
    %677 = vector.shape_cast %334 : vector<1x256xi1> to vector<1x256xi1>
    %678 = vector.broadcast %677 : vector<1x256xi1> to vector<8x256xi1>
    %679 = vector.broadcast %cst_244 : f32 to vector<8x256xf32>
    %680 = arith.select %678, %676, %679 : vector<8x256xi1>, vector<8x256xf32>
    %c0_245 = arith.constant 0 : index
    %c70 = arith.constant 70 : index
    %681 = vector.load %arg2[%c0_245, %c70] : memref<8x128xf32, #tpu.memory_space<vmem>>, vector<8x1xf32>
    %682 = vector.broadcast %681 : vector<8x1xf32> to vector<8x256xf32>
    %683 = arith.mulf %680, %682 : vector<8x256xf32>
    %684 = arith.addf %652, %683 : vector<8x256xf32>
    %c0_246 = arith.constant 0 : index
    %c391 = arith.constant 391 : index
    %685 = vector.load %arg11[%c0_246, %c391] : memref<8x768xf32, #tpu.memory_space<vmem>>, vector<8x256xf32>
    %cst_247 = arith.constant 0.000000e+00 : f32
    %686 = vector.shape_cast %289 : vector<1x256xi1> to vector<1x256xi1>
    %687 = vector.broadcast %686 : vector<1x256xi1> to vector<8x256xi1>
    %688 = vector.broadcast %cst_247 : f32 to vector<8x256xf32>
    %689 = arith.select %687, %685, %688 : vector<8x256xi1>, vector<8x256xf32>
    %c0_248 = arith.constant 0 : index
    %c71 = arith.constant 71 : index
    %690 = vector.load %arg2[%c0_248, %c71] : memref<8x128xf32, #tpu.memory_space<vmem>>, vector<8x1xf32>
    %691 = vector.broadcast %690 : vector<8x1xf32> to vector<8x256xf32>
    %692 = arith.mulf %689, %691 : vector<8x256xf32>
    %693 = arith.addf %657, %692 : vector<8x256xf32>
    %c0_249 = arith.constant 0 : index
    %c394 = arith.constant 394 : index
    %694 = vector.load %arg11[%c0_249, %c394] : memref<8x768xf32, #tpu.memory_space<vmem>>, vector<8x256xf32>
    %cst_250 = arith.constant 0.000000e+00 : f32
    %695 = vector.shape_cast %298 : vector<1x256xi1> to vector<1x256xi1>
    %696 = vector.broadcast %695 : vector<1x256xi1> to vector<8x256xi1>
    %697 = vector.broadcast %cst_250 : f32 to vector<8x256xf32>
    %698 = arith.select %696, %694, %697 : vector<8x256xi1>, vector<8x256xf32>
    %c0_251 = arith.constant 0 : index
    %c72 = arith.constant 72 : index
    %699 = vector.load %arg2[%c0_251, %c72] : memref<8x128xf32, #tpu.memory_space<vmem>>, vector<8x1xf32>
    %700 = vector.broadcast %699 : vector<8x1xf32> to vector<8x256xf32>
    %701 = arith.mulf %698, %700 : vector<8x256xf32>
    %702 = arith.addf %666, %701 : vector<8x256xf32>
    %c0_252 = arith.constant 0 : index
    %c397 = arith.constant 397 : index
    %703 = vector.load %arg11[%c0_252, %c397] : memref<8x768xf32, #tpu.memory_space<vmem>>, vector<8x256xf32>
    %cst_253 = arith.constant 0.000000e+00 : f32
    %704 = vector.shape_cast %307 : vector<1x256xi1> to vector<1x256xi1>
    %705 = vector.broadcast %704 : vector<1x256xi1> to vector<8x256xi1>
    %706 = vector.broadcast %cst_253 : f32 to vector<8x256xf32>
    %707 = arith.select %705, %703, %706 : vector<8x256xi1>, vector<8x256xf32>
    %c0_254 = arith.constant 0 : index
    %c73 = arith.constant 73 : index
    %708 = vector.load %arg2[%c0_254, %c73] : memref<8x128xf32, #tpu.memory_space<vmem>>, vector<8x1xf32>
    %709 = vector.broadcast %708 : vector<8x1xf32> to vector<8x256xf32>
    %710 = arith.mulf %707, %709 : vector<8x256xf32>
    %711 = arith.addf %675, %710 : vector<8x256xf32>
    %c0_255 = arith.constant 0 : index
    %c400 = arith.constant 400 : index
    %712 = vector.load %arg11[%c0_255, %c400] : memref<8x768xf32, #tpu.memory_space<vmem>>, vector<8x256xf32>
    %c0_256 = arith.constant 0 : index
    %c74 = arith.constant 74 : index
    %713 = vector.load %arg2[%c0_256, %c74] : memref<8x128xf32, #tpu.memory_space<vmem>>, vector<8x1xf32>
    %714 = vector.broadcast %713 : vector<8x1xf32> to vector<8x256xf32>
    %715 = arith.mulf %712, %714 : vector<8x256xf32>
    %716 = arith.addf %684, %715 : vector<8x256xf32>
    %c0_257 = arith.constant 0 : index
    %c403 = arith.constant 403 : index
    %717 = vector.load %arg11[%c0_257, %c403] : memref<8x768xf32, #tpu.memory_space<vmem>>, vector<8x256xf32>
    %cst_258 = arith.constant 0.000000e+00 : f32
    %718 = vector.shape_cast %316 : vector<1x256xi1> to vector<1x256xi1>
    %719 = vector.broadcast %718 : vector<1x256xi1> to vector<8x256xi1>
    %720 = vector.broadcast %cst_258 : f32 to vector<8x256xf32>
    %721 = arith.select %719, %717, %720 : vector<8x256xi1>, vector<8x256xf32>
    %c0_259 = arith.constant 0 : index
    %c75 = arith.constant 75 : index
    %722 = vector.load %arg2[%c0_259, %c75] : memref<8x128xf32, #tpu.memory_space<vmem>>, vector<8x1xf32>
    %723 = vector.broadcast %722 : vector<8x1xf32> to vector<8x256xf32>
    %724 = arith.mulf %721, %723 : vector<8x256xf32>
    %725 = arith.addf %693, %724 : vector<8x256xf32>
    %c0_260 = arith.constant 0 : index
    %c406 = arith.constant 406 : index
    %726 = vector.load %arg11[%c0_260, %c406] : memref<8x768xf32, #tpu.memory_space<vmem>>, vector<8x256xf32>
    %cst_261 = arith.constant 0.000000e+00 : f32
    %727 = vector.shape_cast %325 : vector<1x256xi1> to vector<1x256xi1>
    %728 = vector.broadcast %727 : vector<1x256xi1> to vector<8x256xi1>
    %729 = vector.broadcast %cst_261 : f32 to vector<8x256xf32>
    %730 = arith.select %728, %726, %729 : vector<8x256xi1>, vector<8x256xf32>
    %c0_262 = arith.constant 0 : index
    %c76 = arith.constant 76 : index
    %731 = vector.load %arg2[%c0_262, %c76] : memref<8x128xf32, #tpu.memory_space<vmem>>, vector<8x1xf32>
    %732 = vector.broadcast %731 : vector<8x1xf32> to vector<8x256xf32>
    %733 = arith.mulf %730, %732 : vector<8x256xf32>
    %734 = arith.addf %702, %733 : vector<8x256xf32>
    %c0_263 = arith.constant 0 : index
    %c409 = arith.constant 409 : index
    %735 = vector.load %arg11[%c0_263, %c409] : memref<8x768xf32, #tpu.memory_space<vmem>>, vector<8x256xf32>
    %cst_264 = arith.constant 0.000000e+00 : f32
    %736 = vector.shape_cast %334 : vector<1x256xi1> to vector<1x256xi1>
    %737 = vector.broadcast %736 : vector<1x256xi1> to vector<8x256xi1>
    %738 = vector.broadcast %cst_264 : f32 to vector<8x256xf32>
    %739 = arith.select %737, %735, %738 : vector<8x256xi1>, vector<8x256xf32>
    %c0_265 = arith.constant 0 : index
    %c77 = arith.constant 77 : index
    %740 = vector.load %arg2[%c0_265, %c77] : memref<8x128xf32, #tpu.memory_space<vmem>>, vector<8x1xf32>
    %741 = vector.broadcast %740 : vector<8x1xf32> to vector<8x256xf32>
    %742 = arith.mulf %739, %741 : vector<8x256xf32>
    %743 = arith.addf %711, %742 : vector<8x256xf32>
    %744 = arith.addf %743, %716 : vector<8x256xf32>
    %745 = arith.addf %725, %734 : vector<8x256xf32>
    %746 = arith.addf %744, %745 : vector<8x256xf32>
    %c0_266 = arith.constant 0 : index
    %c78 = arith.constant 78 : index
    %747 = vector.load %arg2[%c0_266, %c78] : memref<8x128xf32, #tpu.memory_space<vmem>>, vector<8x1xf32>
    %748 = vector.broadcast %747 : vector<8x1xf32> to vector<8x256xf32>
    %749 = arith.addf %746, %748 : vector<8x256xf32>
    %c0_267 = arith.constant 0 : index
    %c0_268 = arith.constant 0 : index
    %750 = vector.load %arg5[%c0_267, %c0_268] : memref<16x8xf32, #tpu.memory_space<vmem>>, vector<16x8xf32>
    %cst_269 = arith.constant dense<0.000000e+00> : vector<16x256xf32>
    %751 = tpu.matmul %750, %749, %cst_269 {dimension_numbers = #tpu.dot_dimension_numbers<[1], [0], [0], [1], [0, 0, 1, 1], [], []>} : vector<16x8xf32>, vector<8x256xf32>, vector<16x256xf32> -> vector<16x256xf32>
    %752 = vector.extract_strided_slice %751 {offsets = [0, 0], sizes = [8, 256], strides = [1, 1]} : vector<16x256xf32> to vector<8x256xf32>
    %c0_270 = arith.constant 0 : index
    %c79 = arith.constant 79 : index
    %753 = vector.load %arg2[%c0_270, %c79] : memref<8x128xf32, #tpu.memory_space<vmem>>, vector<8x1xf32>
    %754 = vector.broadcast %753 : vector<8x1xf32> to vector<8x256xf32>
    %755 = arith.addf %752, %754 : vector<8x256xf32>
    %756 = vector.extract_strided_slice %751 {offsets = [8, 0], sizes = [8, 256], strides = [1, 1]} : vector<16x256xf32> to vector<8x256xf32>
    %c0_271 = arith.constant 0 : index
    %c80 = arith.constant 80 : index
    %757 = vector.load %arg2[%c0_271, %c80] : memref<8x128xf32, #tpu.memory_space<vmem>>, vector<8x1xf32>
    %758 = vector.broadcast %757 : vector<8x1xf32> to vector<8x256xf32>
    %759 = arith.addf %756, %758 : vector<8x256xf32>
    %760 = arith.negf %759 : vector<8x256xf32>
    %761 = math.exp %760 : vector<8x256xf32>
    %cst_272 = arith.constant 1.000000e+00 : f32
    %762 = vector.broadcast %cst_272 : f32 to vector<8x256xf32>
    %763 = arith.addf %762, %761 : vector<8x256xf32>
    %764 = arith.divf %762, %763 : vector<8x256xf32>
    %765 = arith.mulf %764, %755 : vector<8x256xf32>
    %c0_273 = arith.constant 0 : index
    %c0_274 = arith.constant 0 : index
    %766 = vector.load %arg6[%c0_273, %c0_274] : memref<8x8xf32, #tpu.memory_space<vmem>>, vector<8x8xf32>
    %cst_275 = arith.constant dense<0.000000e+00> : vector<8x256xf32>
    %767 = tpu.matmul %766, %765, %cst_275 {dimension_numbers = #tpu.dot_dimension_numbers<[1], [0], [0], [1], [0, 0, 1, 1], [], []>} : vector<8x8xf32>, vector<8x256xf32>, vector<8x256xf32> -> vector<8x256xf32>
    %c0_276 = arith.constant 0 : index
    %c81 = arith.constant 81 : index
    %768 = vector.load %arg2[%c0_276, %c81] : memref<8x128xf32, #tpu.memory_space<vmem>>, vector<8x1xf32>
    %769 = vector.broadcast %768 : vector<8x1xf32> to vector<8x256xf32>
    %770 = arith.addf %767, %769 : vector<8x256xf32>
    %771 = arith.addf %770, %9 : vector<8x256xf32>
    %c0_277 = arith.constant 0 : index
    %c82 = arith.constant 82 : index
    %772 = vector.load %arg2[%c0_277, %c82] : memref<8x128xf32, #tpu.memory_space<vmem>>, vector<8x1xf32>
    %773 = vector.broadcast %772 : vector<8x1xf32> to vector<8x256xf32>
    %774 = arith.mulf %773, %771 : vector<8x256xf32>
    %775 = arith.addf %0, %774 : vector<8x256xf32>
    %c0_278 = arith.constant 0 : index
    %c0_279 = arith.constant 0 : index
    %776 = vector.load %arg7[%c0_278, %c0_279] : memref<32x8xf32, #tpu.memory_space<vmem>>, vector<32x8xf32>
    %cst_280 = arith.constant dense<0.000000e+00> : vector<32x256xf32>
    %777 = tpu.matmul %776, %775, %cst_280 {dimension_numbers = #tpu.dot_dimension_numbers<[1], [0], [0], [1], [0, 0, 1, 1], [], []>} : vector<32x8xf32>, vector<8x256xf32>, vector<32x256xf32> -> vector<32x256xf32>
    %c0_281 = arith.constant 0 : index
    %c0_282 = arith.constant 0 : index
    %778 = vector.load %arg3[%c0_281, %c0_282] : memref<32x128xf32, #tpu.memory_space<vmem>>, vector<32x1xf32>
    %779 = vector.broadcast %778 : vector<32x1xf32> to vector<32x256xf32>
    %780 = arith.addf %777, %779 : vector<32x256xf32>
    %cst_283 = arith.constant 0.000000e+00 : f32
    %781 = vector.broadcast %cst_283 : f32 to vector<32x128xf32>
    %c0_284 = arith.constant 0 : index
    %c0_285 = arith.constant 0 : index
    %782 = vector.load %arg12[%c0_284, %c0_285] : memref<32x512xf32, #tpu.memory_space<vmem>>, vector<32x128xf32>
    tpu.vector_store %arg12[%c0_284, %c0_285], %781 {strides = array<i32>} : memref<32x512xf32, #tpu.memory_space<vmem>>, vector<32x128xf32>,
    %cst_286 = arith.constant 0.000000e+00 : f32
    %783 = vector.broadcast %cst_286 : f32 to vector<32x128xf32>
    %c0_287 = arith.constant 0 : index
    %c384_288 = arith.constant 384 : index
    %784 = vector.load %arg12[%c0_287, %c384_288] : memref<32x512xf32, #tpu.memory_space<vmem>>, vector<32x128xf32>
    tpu.vector_store %arg12[%c0_287, %c384_288], %783 {strides = array<i32>} : memref<32x512xf32, #tpu.memory_space<vmem>>, vector<32x128xf32>,
    %c0_289 = arith.constant 0 : index
    %c128_290 = arith.constant 128 : index
    %785 = vector.load %arg12[%c0_289, %c128_290] : memref<32x512xf32, #tpu.memory_space<vmem>>, vector<32x256xf32>
    tpu.vector_store %arg12[%c0_289, %c128_290], %780 {strides = array<i32>} : memref<32x512xf32, #tpu.memory_space<vmem>>, vector<32x256xf32>,
    %c-1_i32_291 = arith.constant -1 : i32
    %786 = vector.broadcast %c-1_i32_291 : i32 to vector<1x256xi32>
    %787 = arith.addi %3, %786 : vector<1x256xi32>
    %c0_i32_292 = arith.constant 0 : i32
    %788 = vector.broadcast %c0_i32_292 : i32 to vector<1x256xi32>
    %789 = arith.cmpi sge, %787, %788 : vector<1x256xi32>
    %c-1_i32_293 = arith.constant -1 : i32
    %790 = vector.broadcast %c-1_i32_293 : i32 to vector<1x256xi32>
    %791 = arith.addi %3, %790 : vector<1x256xi32>
    %c16_i32_294 = arith.constant 16 : i32
    %792 = vector.broadcast %c16_i32_294 : i32 to vector<1x256xi32>
    %793 = arith.cmpi slt, %791, %792 : vector<1x256xi32>
    %794 = arith.andi %789, %793 : vector<1x256xi1>
    %c1_i32_295 = arith.constant 1 : i32
    %795 = vector.broadcast %c1_i32_295 : i32 to vector<1x256xi32>
    %796 = arith.addi %3, %795 : vector<1x256xi32>
    %c0_i32_296 = arith.constant 0 : i32
    %797 = vector.broadcast %c0_i32_296 : i32 to vector<1x256xi32>
    %798 = arith.cmpi sge, %796, %797 : vector<1x256xi32>
    %c1_i32_297 = arith.constant 1 : i32
    %799 = vector.broadcast %c1_i32_297 : i32 to vector<1x256xi32>
    %800 = arith.addi %3, %799 : vector<1x256xi32>
    %c16_i32_298 = arith.constant 16 : i32
    %801 = vector.broadcast %c16_i32_298 : i32 to vector<1x256xi32>
    %802 = arith.cmpi slt, %800, %801 : vector<1x256xi32>
    %803 = arith.andi %798, %802 : vector<1x256xi1>
    %c0_299 = arith.constant 0 : index
    %c111_300 = arith.constant 111 : index
    %804 = vector.load %arg12[%c0_299, %c111_300] : memref<32x512xf32, #tpu.memory_space<vmem>>, vector<32x256xf32>
    %cst_301 = arith.constant 0.000000e+00 : f32
    %805 = vector.shape_cast %794 : vector<1x256xi1> to vector<1x256xi1>
    %806 = vector.broadcast %805 : vector<1x256xi1> to vector<32x256xi1>
    %807 = vector.broadcast %cst_301 : f32 to vector<32x256xf32>
    %808 = arith.select %806, %804, %807 : vector<32x256xi1>, vector<32x256xf32>
    %c0_302 = arith.constant 0 : index
    %c1_303 = arith.constant 1 : index
    %809 = vector.load %arg3[%c0_302, %c1_303] : memref<32x128xf32, #tpu.memory_space<vmem>>, vector<32x1xf32>
    %810 = vector.broadcast %809 : vector<32x1xf32> to vector<32x256xf32>
    %811 = arith.mulf %808, %810 : vector<32x256xf32>
    %c0_304 = arith.constant 0 : index
    %c112_305 = arith.constant 112 : index
    %812 = vector.load %arg12[%c0_304, %c112_305] : memref<32x512xf32, #tpu.memory_space<vmem>>, vector<32x256xf32>
    %c0_306 = arith.constant 0 : index
    %c2_307 = arith.constant 2 : index
    %813 = vector.load %arg3[%c0_306, %c2_307] : memref<32x128xf32, #tpu.memory_space<vmem>>, vector<32x1xf32>
    %814 = vector.broadcast %813 : vector<32x1xf32> to vector<32x256xf32>
    %815 = arith.mulf %812, %814 : vector<32x256xf32>
    %c0_308 = arith.constant 0 : index
    %c113_309 = arith.constant 113 : index
    %816 = vector.load %arg12[%c0_308, %c113_309] : memref<32x512xf32, #tpu.memory_space<vmem>>, vector<32x256xf32>
    %cst_310 = arith.constant 0.000000e+00 : f32
    %817 = vector.shape_cast %803 : vector<1x256xi1> to vector<1x256xi1>
    %818 = vector.broadcast %817 : vector<1x256xi1> to vector<32x256xi1>
    %819 = vector.broadcast %cst_310 : f32 to vector<32x256xf32>
    %820 = arith.select %818, %816, %819 : vector<32x256xi1>, vector<32x256xf32>
    %c0_311 = arith.constant 0 : index
    %c3_312 = arith.constant 3 : index
    %821 = vector.load %arg3[%c0_311, %c3_312] : memref<32x128xf32, #tpu.memory_space<vmem>>, vector<32x1xf32>
    %822 = vector.broadcast %821 : vector<32x1xf32> to vector<32x256xf32>
    %823 = arith.mulf %820, %822 : vector<32x256xf32>
    %c0_313 = arith.constant 0 : index
    %c127_314 = arith.constant 127 : index
    %824 = vector.load %arg12[%c0_313, %c127_314] : memref<32x512xf32, #tpu.memory_space<vmem>>, vector<32x256xf32>
    %cst_315 = arith.constant 0.000000e+00 : f32
    %825 = vector.shape_cast %794 : vector<1x256xi1> to vector<1x256xi1>
    %826 = vector.broadcast %825 : vector<1x256xi1> to vector<32x256xi1>
    %827 = vector.broadcast %cst_315 : f32 to vector<32x256xf32>
    %828 = arith.select %826, %824, %827 : vector<32x256xi1>, vector<32x256xf32>
    %c0_316 = arith.constant 0 : index
    %c4_317 = arith.constant 4 : index
    %829 = vector.load %arg3[%c0_316, %c4_317] : memref<32x128xf32, #tpu.memory_space<vmem>>, vector<32x1xf32>
    %830 = vector.broadcast %829 : vector<32x1xf32> to vector<32x256xf32>
    %831 = arith.mulf %828, %830 : vector<32x256xf32>
    %c0_318 = arith.constant 0 : index
    %c128_319 = arith.constant 128 : index
    %832 = vector.load %arg12[%c0_318, %c128_319] : memref<32x512xf32, #tpu.memory_space<vmem>>, vector<32x256xf32>
    %c0_320 = arith.constant 0 : index
    %c5_321 = arith.constant 5 : index
    %833 = vector.load %arg3[%c0_320, %c5_321] : memref<32x128xf32, #tpu.memory_space<vmem>>, vector<32x1xf32>
    %834 = vector.broadcast %833 : vector<32x1xf32> to vector<32x256xf32>
    %835 = arith.mulf %832, %834 : vector<32x256xf32>
    %836 = arith.addf %811, %835 : vector<32x256xf32>
    %c0_322 = arith.constant 0 : index
    %c129_323 = arith.constant 129 : index
    %837 = vector.load %arg12[%c0_322, %c129_323] : memref<32x512xf32, #tpu.memory_space<vmem>>, vector<32x256xf32>
    %cst_324 = arith.constant 0.000000e+00 : f32
    %838 = vector.shape_cast %803 : vector<1x256xi1> to vector<1x256xi1>
    %839 = vector.broadcast %838 : vector<1x256xi1> to vector<32x256xi1>
    %840 = vector.broadcast %cst_324 : f32 to vector<32x256xf32>
    %841 = arith.select %839, %837, %840 : vector<32x256xi1>, vector<32x256xf32>
    %c0_325 = arith.constant 0 : index
    %c6_326 = arith.constant 6 : index
    %842 = vector.load %arg3[%c0_325, %c6_326] : memref<32x128xf32, #tpu.memory_space<vmem>>, vector<32x1xf32>
    %843 = vector.broadcast %842 : vector<32x1xf32> to vector<32x256xf32>
    %844 = arith.mulf %841, %843 : vector<32x256xf32>
    %845 = arith.addf %815, %844 : vector<32x256xf32>
    %c0_327 = arith.constant 0 : index
    %c143_328 = arith.constant 143 : index
    %846 = vector.load %arg12[%c0_327, %c143_328] : memref<32x512xf32, #tpu.memory_space<vmem>>, vector<32x256xf32>
    %cst_329 = arith.constant 0.000000e+00 : f32
    %847 = vector.shape_cast %794 : vector<1x256xi1> to vector<1x256xi1>
    %848 = vector.broadcast %847 : vector<1x256xi1> to vector<32x256xi1>
    %849 = vector.broadcast %cst_329 : f32 to vector<32x256xf32>
    %850 = arith.select %848, %846, %849 : vector<32x256xi1>, vector<32x256xf32>
    %c0_330 = arith.constant 0 : index
    %c7_331 = arith.constant 7 : index
    %851 = vector.load %arg3[%c0_330, %c7_331] : memref<32x128xf32, #tpu.memory_space<vmem>>, vector<32x1xf32>
    %852 = vector.broadcast %851 : vector<32x1xf32> to vector<32x256xf32>
    %853 = arith.mulf %850, %852 : vector<32x256xf32>
    %854 = arith.addf %823, %853 : vector<32x256xf32>
    %c0_332 = arith.constant 0 : index
    %c144_333 = arith.constant 144 : index
    %855 = vector.load %arg12[%c0_332, %c144_333] : memref<32x512xf32, #tpu.memory_space<vmem>>, vector<32x256xf32>
    %c0_334 = arith.constant 0 : index
    %c8_335 = arith.constant 8 : index
    %856 = vector.load %arg3[%c0_334, %c8_335] : memref<32x128xf32, #tpu.memory_space<vmem>>, vector<32x1xf32>
    %857 = vector.broadcast %856 : vector<32x1xf32> to vector<32x256xf32>
    %858 = arith.mulf %855, %857 : vector<32x256xf32>
    %859 = arith.addf %831, %858 : vector<32x256xf32>
    %c0_336 = arith.constant 0 : index
    %c145_337 = arith.constant 145 : index
    %860 = vector.load %arg12[%c0_336, %c145_337] : memref<32x512xf32, #tpu.memory_space<vmem>>, vector<32x256xf32>
    %cst_338 = arith.constant 0.000000e+00 : f32
    %861 = vector.shape_cast %803 : vector<1x256xi1> to vector<1x256xi1>
    %862 = vector.broadcast %861 : vector<1x256xi1> to vector<32x256xi1>
    %863 = vector.broadcast %cst_338 : f32 to vector<32x256xf32>
    %864 = arith.select %862, %860, %863 : vector<32x256xi1>, vector<32x256xf32>
    %c0_339 = arith.constant 0 : index
    %c9_340 = arith.constant 9 : index
    %865 = vector.load %arg3[%c0_339, %c9_340] : memref<32x128xf32, #tpu.memory_space<vmem>>, vector<32x1xf32>
    %866 = vector.broadcast %865 : vector<32x1xf32> to vector<32x256xf32>
    %867 = arith.mulf %864, %866 : vector<32x256xf32>
    %868 = arith.addf %836, %867 : vector<32x256xf32>
    %869 = arith.addf %868, %845 : vector<32x256xf32>
    %870 = arith.addf %854, %859 : vector<32x256xf32>
    %871 = arith.addf %869, %870 : vector<32x256xf32>
    %c0_341 = arith.constant 0 : index
    %c10_342 = arith.constant 10 : index
    %872 = vector.load %arg3[%c0_341, %c10_342] : memref<32x128xf32, #tpu.memory_space<vmem>>, vector<32x1xf32>
    %873 = vector.broadcast %872 : vector<32x1xf32> to vector<32x256xf32>
    %874 = arith.addf %871, %873 : vector<32x256xf32>
    %cst_343 = arith.constant 5.000000e-01 : f32
    %875 = vector.broadcast %cst_343 : f32 to vector<32x256xf32>
    %876 = arith.mulf %875, %874 : vector<32x256xf32>
    %cst_344 = arith.constant 4.471500e-02 : f32
    %877 = vector.broadcast %cst_344 : f32 to vector<32x256xf32>
    %878 = arith.mulf %877, %874 : vector<32x256xf32>
    %879 = arith.mulf %878, %874 : vector<32x256xf32>
    %880 = arith.mulf %879, %874 : vector<32x256xf32>
    %881 = arith.addf %874, %880 : vector<32x256xf32>
    %cst_345 = arith.constant 0.797884583 : f32
    %882 = vector.broadcast %cst_345 : f32 to vector<32x256xf32>
    %883 = arith.mulf %882, %881 : vector<32x256xf32>
    %884 = math.tanh %883 : vector<32x256xf32>
    %cst_346 = arith.constant 1.000000e+00 : f32
    %885 = vector.broadcast %cst_346 : f32 to vector<32x256xf32>
    %886 = arith.addf %885, %884 : vector<32x256xf32>
    %887 = arith.mulf %876, %886 : vector<32x256xf32>
    %c0_347 = arith.constant 0 : index
    %c0_348 = arith.constant 0 : index
    %888 = vector.load %arg8[%c0_347, %c0_348] : memref<8x32xf32, #tpu.memory_space<vmem>>, vector<8x32xf32>
    %cst_349 = arith.constant dense<0.000000e+00> : vector<8x256xf32>
    %889 = tpu.matmul %888, %887, %cst_349 {dimension_numbers = #tpu.dot_dimension_numbers<[1], [0], [0], [1], [0, 0, 1, 1], [], []>} : vector<8x32xf32>, vector<32x256xf32>, vector<8x256xf32> -> vector<8x256xf32>
    %c0_350 = arith.constant 0 : index
    %c83 = arith.constant 83 : index
    %890 = vector.load %arg2[%c0_350, %c83] : memref<8x128xf32, #tpu.memory_space<vmem>>, vector<8x1xf32>
    %891 = vector.broadcast %890 : vector<8x1xf32> to vector<8x256xf32>
    %892 = arith.addf %889, %891 : vector<8x256xf32>
    %c0_351 = arith.constant 0 : index
    %c84 = arith.constant 84 : index
    %893 = vector.load %arg2[%c0_351, %c84] : memref<8x128xf32, #tpu.memory_space<vmem>>, vector<8x1xf32>
    %894 = vector.broadcast %893 : vector<8x1xf32> to vector<8x256xf32>
    %895 = arith.mulf %894, %892 : vector<8x256xf32>
    %896 = arith.addf %775, %895 : vector<8x256xf32>
    %c0_352 = arith.constant 0 : index
    %c0_353 = arith.constant 0 : index
    %897 = vector.load %arg9[%c0_352, %c0_353] : memref<8x256xf32, #tpu.memory_space<vmem>>, vector<8x256xf32>
    tpu.vector_store %arg9[%c0_352, %c0_353], %896 {strides = array<i32>} : memref<8x256xf32, #tpu.memory_space<vmem>>, vector<8x256xf32>,
    return
  }
  func.func @transform_0(%arg0: i32) -> (i32, i32) {
    %c0_i32 = arith.constant 0 : i32
    %c0_i32_0 = arith.constant 0 : i32
    %c0_i32_1 = arith.constant 0 : i32
    return %c0_i32, %c0_i32_0 : i32, i32
  }
  func.func @transform_1(%arg0: i32) -> (i32, i32) {
    %c0_i32 = arith.constant 0 : i32
    %c0_i32_0 = arith.constant 0 : i32
    %c0_i32_1 = arith.constant 0 : i32
    return %c0_i32, %c0_i32_0 : i32, i32
  }
  func.func @transform_2(%arg0: i32) -> (i32, i32) {
    %c0_i32 = arith.constant 0 : i32
    %c0_i32_0 = arith.constant 0 : i32
    %c0_i32_1 = arith.constant 0 : i32
    return %c0_i32, %c0_i32_0 : i32, i32
  }
  func.func @transform_3(%arg0: i32) -> (i32, i32) {
    %c0_i32 = arith.constant 0 : i32
    %c0_i32_0 = arith.constant 0 : i32
    %c0_i32_1 = arith.constant 0 : i32
    return %c0_i32, %c0_i32_0 : i32, i32
  }
  func.func @transform_4(%arg0: i32) -> (i32, i32) {
    %c0_i32 = arith.constant 0 : i32
    %c0_i32_0 = arith.constant 0 : i32
    %c0_i32_1 = arith.constant 0 : i32
    return %c0_i32, %c0_i32_0 : i32, i32
  }
  func.func @transform_5(%arg0: i32) -> (i32, i32) {
    %c0_i32 = arith.constant 0 : i32
    %c0_i32_0 = arith.constant 0 : i32
    %c0_i32_1 = arith.constant 0 : i32
    return %c0_i32, %c0_i32_0 : i32, i32
  }
  func.func @transform_6(%arg0: i32) -> (i32, i32) {
    %c0_i32 = arith.constant 0 : i32
    %c0_i32_0 = arith.constant 0 : i32
    %c0_i32_1 = arith.constant 0 : i32
    return %c0_i32, %c0_i32_0 : i32, i32
  }
  func.func @transform_7(%arg0: i32) -> (i32, i32) {
    %c0_i32 = arith.constant 0 : i32
    %c0_i32_0 = arith.constant 0 : i32
    %c0_i32_1 = arith.constant 0 : i32
    return %c0_i32, %c0_i32_0 : i32, i32
  }
  func.func @transform_8(%arg0: i32) -> (i32, i32) {
    %c0_i32 = arith.constant 0 : i32
    %c0_i32_0 = arith.constant 0 : i32
    %c0_i32_1 = arith.constant 0 : i32
    return %c0_i32, %c0_i32_0 : i32, i32
  }
}

</mosaic_0001>

<llo_original>
// kernel: tpu_custom_call.1
$region0: #{tpu_custom_call.1}
  #allocation0 [shape = 'u32[]', space=smem, size = 0x4, offset = 0x4, fixed_abs, tag = 'smem constant byte address 0x4 - core index']
  #allocation1 [shape = 'u32[72,128]{1,0:T(1,128)}', space=vmem, size = 0x9000, scoped, tag = 'internal scratch']
  #allocation2 [shape = 'f32[8,512]{1,0:T(8,128)}', space=vmem, size = 0x4000, scoped, tag = 'scratch operand']
  #allocation3 [shape = 'f32[8,768]{1,0:T(8,128)}', space=vmem, size = 0x6000, scoped, tag = 'scratch operand']
  #allocation4 [shape = 'f32[32,512]{1,0:T(8,128)}', space=vmem, size = 0x10000, scoped, tag = 'scratch operand']
  %s0 = inlined_call_operand.vmem [shape: f32[8,256], index: 0, kind: input, shape index: {}]
  %s1 = inlined_call_operand.vmem [shape: f32[8,128], index: 1, kind: input, shape index: {}]
  %s2 = inlined_call_operand.vmem [shape: f32[32,128], index: 2, kind: input, shape index: {}]
  %s3 = inlined_call_operand.hbm [shape: f32[8,8], index: 3, kind: input, shape index: {}]
  %s4 = inlined_call_operand.vmem [shape: f32[16,8], index: 4, kind: input, shape index: {}]
  %s5 = inlined_call_operand.hbm [shape: f32[8,8], index: 5, kind: input, shape index: {}]
  %s6 = inlined_call_operand.vmem [shape: f32[32,8], index: 6, kind: input, shape index: {}]
  %s7 = inlined_call_operand.hbm [shape: f32[8,32], index: 7, kind: input, shape index: {}]
  %s8 = inlined_call_operand.hbm [shape: f32[8,256], index: 8, kind: output, shape index: {}]
  %s9 = sld [smem:[#allocation0]]
  $region54: #{tpu_custom_call.1} parent=0
    _
  %s11 = ssub.s32 1, %s9
  %s12 = scalar_select 0, %s11, %s9
  $region1: #{tpu_custom_call.1} parent=0
    #allocation5 [shape = 'u8[4096]{0}', space=vmem, size = 0x1000, scoped, tag = 'input window, operand 3, single buffered']
    #allocation6 [shape = 's32[1]{0}', space=sflag, size = 0x4, scoped, tag = 'scoped memory for tpu_custom_call.1']
    #allocation7 [shape = 's32[1]{0}', space=sflag, size = 0x4, scoped, tag = 'scoped memory for tpu_custom_call.1']
    #allocation8 [shape = 'u8[4096]{0}', space=vmem, size = 0x1000, scoped, tag = 'input window, operand 5, single buffered']
    #allocation9 [shape = 's32[1]{0}', space=sflag, size = 0x4, scoped, tag = 'scoped memory for tpu_custom_call.1']
    #allocation10 [shape = 'u8[4096]{0}', space=vmem, size = 0x1000, scoped, tag = 'input window, operand 7, single buffered']
    #allocation11 [shape = 'u8[8192]{0}', space=vmem, size = 0x2000, scoped, tag = 'output window, operand 0, single buffered']
    %13 = vsyncpa [#allocation6], 0
    %14 = vsyncpa [#allocation9], 0
    %15 = vsyncpa [#allocation7], 0
    // Predicated region
    $region2: #{tpu_custom_call.1} parent=1 // pred_check
      _
    $region3: #{tpu_custom_call.1} parent=1 // pred_check_branch
      %17 = sbr.rel (0) target = $region5
    $region4: #{tpu_custom_call.1} parent=1 // pred_region
      _
    $region5: #{tpu_custom_call.1} parent=1 // pred_fallthru
      _
    // Predicated region
    $region6: #{tpu_custom_call.1} parent=1 // pred_check
      _
    $region7: #{tpu_custom_call.1} parent=1 // pred_check_branch
      %19 = sbr.rel (0) target = $region9
    $region8: #{tpu_custom_call.1} parent=1 // pred_region
      _
    $region9: #{tpu_custom_call.1} parent=1 // pred_fallthru
      _
    // Predicated region
    $region10: #{tpu_custom_call.1} parent=1 // pred_check
      _
    $region11: #{tpu_custom_call.1} parent=1 // pred_check_branch
      %21 = sbr.rel (0) target = $region13
    $region12: #{tpu_custom_call.1} parent=1 // pred_region
      _
    $region13: #{tpu_custom_call.1} parent=1 // pred_fallthru
      _
    // Predicated region
    $region14: #{tpu_custom_call.1} parent=1 // pred_check
      _
    $region15: #{tpu_custom_call.1} parent=1 // pred_check_branch
      %23 = sbr.rel (0) target = $region17
    $region16: #{tpu_custom_call.1} parent=1 // pred_region
      %25 = vsyncadd [#allocation6], 0
      %s27 = sshll.u32 %s3, 4
      %s28 = int_to_ptr.hbm [resolvable:$true] %s27
      %s29 = sshll.u32 [#allocation5], 4
      %s30 = int_to_ptr.vmem [resolvable:$true] %s29
      %32 = dma.hbm_to_vmem [thread:$0]  %s28, 128, %s30, [#allocation6]
    $region17: #{tpu_custom_call.1} parent=1 // pred_fallthru
      _
    // Predicated region
    $region18: #{tpu_custom_call.1} parent=1 // pred_check
      _
    $region19: #{tpu_custom_call.1} parent=1 // pred_check_branch
      %34 = sbr.rel (0) target = $region21
    $region20: #{tpu_custom_call.1} parent=1 // pred_region
      _
    $region21: #{tpu_custom_call.1} parent=1 // pred_fallthru
      _
    // Predicated region
    $region22: #{tpu_custom_call.1} parent=1 // pred_check
      _
    $region23: #{tpu_custom_call.1} parent=1 // pred_check_branch
      %36 = sbr.rel (0) target = $region25
    $region24: #{tpu_custom_call.1} parent=1 // pred_region
      %38 = vsyncadd [#allocation9], 0
      %s40 = sshll.u32 %s5, 4
      %s41 = int_to_ptr.hbm [resolvable:$true] %s40
      %s42 = sshll.u32 [#allocation8], 4
      %s43 = int_to_ptr.vmem [resolvable:$true] %s42
      %45 = dma.hbm_to_vmem [thread:$0]  %s41, 128, %s43, [#allocation9]
    $region25: #{tpu_custom_call.1} parent=1 // pred_fallthru
      _
    // Predicated region
    $region26: #{tpu_custom_call.1} parent=1 // pred_check
      _
    $region27: #{tpu_custom_call.1} parent=1 // pred_check_branch
      %47 = sbr.rel (0) target = $region29
    $region28: #{tpu_custom_call.1} parent=1 // pred_region
      _
    $region29: #{tpu_custom_call.1} parent=1 // pred_fallthru
      _
    // Predicated region
    $region30: #{tpu_custom_call.1} parent=1 // pred_check
      _
    $region31: #{tpu_custom_call.1} parent=1 // pred_check_branch
      %49 = sbr.rel (0) target = $region33
    $region32: #{tpu_custom_call.1} parent=1 // pred_region
      %51 = vsyncadd [#allocation9], 0
      %s53 = sshll.u32 %s7, 4
      %s54 = int_to_ptr.hbm [resolvable:$true] %s53
      %s55 = sshll.u32 [#allocation10], 4
      %s56 = int_to_ptr.vmem [resolvable:$true] %s55
      %58 = dma.hbm_to_vmem [thread:$0]  %s54, 128, %s56, [#allocation9]
    $region33: #{tpu_custom_call.1} parent=1 // pred_fallthru
      _
    // Predicated region
    $region34: #{tpu_custom_call.1} parent=1 // pred_check
      _
    $region35: #{tpu_custom_call.1} parent=1 // pred_check_branch
      %60 = sbr.rel (0) target = $region37
    $region36: #{tpu_custom_call.1} parent=1 // pred_region
      %62 = dma.done [#allocation6], 128
    $region37: #{tpu_custom_call.1} parent=1 // pred_fallthru
      _
    // Predicated region
    $region38: #{tpu_custom_call.1} parent=1 // pred_check
      _
    $region39: #{tpu_custom_call.1} parent=1 // pred_check_branch
      %64 = sbr.rel (0) target = $region41
    $region40: #{tpu_custom_call.1} parent=1 // pred_region
      %66 = dma.done [#allocation9], 128
    $region41: #{tpu_custom_call.1} parent=1 // pred_fallthru
      _
    // Predicated region
    $region42: #{tpu_custom_call.1} parent=1 // pred_check
      _
    $region43: #{tpu_custom_call.1} parent=1 // pred_check_branch
      %68 = sbr.rel (0) target = $region45
    $region44: #{tpu_custom_call.1} parent=1 // pred_region
      %70 = dma.done [#allocation9], 128
    $region45: #{tpu_custom_call.1} parent=1 // pred_fallthru
      _
    %v71 = vld [vmem:[%s0] sm:$0xff]
    %v72 = vld [vmem:[%s0 + $0x8] sm:$0xff]
    %v73 = vlaneseq
    %v74 = vand.u32 %v73, 127
    %v75 = vadd.s32 %v74, 128
    %v76 = vand.u32 %v74, 15
    %v77 = vand.u32 %v75, 15
    %v78 = vld [vmem:[%s1] sm:$0xff]
    %80 = vset.pattern.permute.xlu0 0
    %81 = vperm.xlu0 %80, %v78
    %v82 = vpop.permute.xlu0 %81
    %v84 = vmul.f32 %v71, %v82
    %v85 = vmul.f32 %v72, %v82
    %86 = vset.pattern.permute.xlu0 1
    %87 = vperm.xlu0 %86, %v78
    %v88 = vpop.permute.xlu0 %87
    %v90 = vadd.f32 %v84, %v88
    %v91 = vadd.f32 %v85, %v88
    %v92 = vld [vmem:[#allocation5] sm:$0xff]
    %93 = vset.pattern.permute.xlu0 2
    %94 = vperm.xlu0 %93, %v78
    %v95 = vpop.permute.xlu0 %94
    %vm97 = vcmask 64512
    %v99 = vsel %vm97, %v92, 0
    %101 = vmatpush.msra.mxu0 0.0
    %102 = vmatpush.msra.mxu0 0.0
    %103 = vmatpush.msra.mxu0 0.0
    %104 = vmatpush.msra.mxu0 0.0
    %105 = vmatpush.msra.mxu0 0.0
    %106 = vmatpush.msra.mxu0 0.0
    %107 = vmatpush.msra.mxu0 0.0
    %108 = vmatpush.msra.mxu0 0.0
    %109 = vmatpush.msra.mxu0 0.0
    %110 = vmatpush.msra.mxu0 0.0
    %111 = vmatpush.msra.mxu0 0.0
    %112 = vmatpush.msra.mxu0 0.0
    %113 = vmatpush.msra.mxu0 0.0
    %114 = vmatpush.msra.mxu0 0.0
    %115 = vmatpush.msra.mxu0 0.0
    %116 = vmatpush.msra.mxu0 %v90
    %117 = vmatmul.f32.gmra.mxu0 %v99
    %v118 = vpop.f32.mrf.mxu0
    %v119 = vadd.f32 %v95, %v118
    %120 = vdwg.mxu0
    %121 = vmatpush.msra.mxu0 0.0
    %122 = vmatpush.msra.mxu0 0.0
    %123 = vmatpush.msra.mxu0 0.0
    %124 = vmatpush.msra.mxu0 0.0
    %125 = vmatpush.msra.mxu0 0.0
    %126 = vmatpush.msra.mxu0 0.0
    %127 = vmatpush.msra.mxu0 0.0
    %128 = vmatpush.msra.mxu0 0.0
    %129 = vmatpush.msra.mxu0 0.0
    %130 = vmatpush.msra.mxu0 0.0
    %131 = vmatpush.msra.mxu0 0.0
    %132 = vmatpush.msra.mxu0 0.0
    %133 = vmatpush.msra.mxu0 0.0
    %134 = vmatpush.msra.mxu0 0.0
    %135 = vmatpush.msra.mxu0 0.0
    %136 = vmatpush.msra.mxu0 %v91
    %137 = vmatmul.f32.gmra.mxu0 %v99
    %v138 = vpop.f32.mrf.mxu0
    %v139 = vadd.f32 %v95, %v138
    %140 = vdwg.mxu0
    %v141 = vmul.f32 %v119, 0.5
    %v142 = vmul.f32 %v139, 0.5
    %v143 = vmul.f32 %v119, 0.044715
    %v144 = vmul.f32 %v139, 0.044715
    %v145 = vmul.f32 %v143, %v119
    %v146 = vmul.f32 %v144, %v139
    %v147 = vmul.f32 %v145, %v119
    %v148 = vmul.f32 %v146, %v139
    %v149 = vadd.f32 %v119, %v147
    %v150 = vadd.f32 %v139, %v148
    %v151 = vmul.f32 %v149, 0.7978846
    %v152 = vmul.f32 %v150, 0.7978846
    %v153 = vtanh.pop %v151
    %v154 = vtanh.pop %v152
    %v155 = vadd.f32 %v153, 1.0
    %v156 = vadd.f32 %v154, 1.0
    %v157 = vmul.f32 %v141, %v155
    %v158 = vmul.f32 %v142, %v156
    %159 = vst [vmem:[#allocation2] sm:$0xff] 0.0
    %160 = vst [vmem:[#allocation2 + $0x18] sm:$0xff] 0.0
    %161 = vst [vmem:[#allocation2 + $0x8] sm:$0xff] %v157
    %162 = vst [vmem:[#allocation2 + $0x10] sm:$0xff] %v158
    %v163 = vadd.s32 %v76, 4294967294
    %v164 = vadd.s32 %v77, 4294967294
    %vm165 = vcmp.ge.s32.totalorder %v163, 0
    %vm166 = vcmp.ge.s32.totalorder %v164, 0
    %vm167 = vcmp.lt.s32.totalorder %v163, 16
    %vm168 = vcmp.lt.s32.totalorder %v164, 16
    %vm169 = vmand %vm165, %vm167
    %vm170 = vmand %vm166, %vm168
    %v171 = vadd.s32 %v76, 4294967295
    %v172 = vadd.s32 %v77, 4294967295
    %vm173 = vcmp.ge.s32.totalorder %v171, 0
    %vm174 = vcmp.ge.s32.totalorder %v172, 0
    %vm175 = vcmp.lt.s32.totalorder %v171, 16
    %vm176 = vcmp.lt.s32.totalorder %v172, 16
    %vm177 = vmand %vm173, %vm175
    %vm178 = vmand %vm174, %vm176
    %v179 = vadd.s32 %v76, 1
    %v180 = vadd.s32 %v77, 1
    %vm181 = vcmp.ge.s32.totalorder %v179, 0
    %vm182 = vcmp.ge.s32.totalorder %v180, 0
    %vm183 = vcmp.lt.s32.totalorder %v179, 16
    %vm184 = vcmp.lt.s32.totalorder %v180, 16
    %vm185 = vmand %vm181, %vm183
    %vm186 = vmand %vm182, %vm184
    %v187 = vadd.s32 %v76, 2
    %v188 = vadd.s32 %v77, 2
    %vm189 = vcmp.ge.s32.totalorder %v187, 0
    %vm190 = vcmp.ge.s32.totalorder %v188, 0
    %vm191 = vcmp.lt.s32.totalorder %v187, 16
    %vm192 = vcmp.lt.s32.totalorder %v188, 16
    %vm193 = vmand %vm189, %vm191
    %vm194 = vmand %vm190, %vm192
    %v195 = vld [vmem:[#allocation2] sm:$0xff]
    %v196 = vld [vmem:[#allocation2 + $0x8] sm:$0xff]
    %v197 = vld [vmem:[#allocation2 + $0x10] sm:$0xff]
    %v198 = vsel %vm169, 1, 0
    %v199 = vsel %vm170, 1, 0
    %vm200 = vcmp.eq.s32.totalorder %v198, 1
    %vm201 = vcmp.eq.s32.totalorder %v199, 1
    %205 = vrot.lane.b32.xlu0 %v195, 34
    %v206 = vpop.permute.xlu0 %205
    %207 = vrot.lane.b32.xlu0 %v196, 34
    %v208 = vpop.permute.xlu0 %207
    %209 = vrot.lane.b32.xlu0 %v197, 34
    %v210 = vpop.permute.xlu0 %209
    %vm211 = vcmask 277504
    %v212 = vsel %vm211, %v206, %v208
    %v213 = vsel %vm211, %v208, %v210
    %v216 = vsel %vm200, %v212, 0.0
    %v217 = vsel %vm201, %v213, 0.0
    %v218 = vld [vmem:[%s1] sm:$0xff]
    %220 = vset.pattern.permute.xlu0 3
    %221 = vperm.xlu0 %220, %v218
    %v222 = vpop.permute.xlu0 %221
    %v224 = vmul.f32 %v216, %v222
    %v225 = vmul.f32 %v217, %v222
    %v226 = vsel %vm177, 1, 0
    %v227 = vsel %vm178, 1, 0
    %vm228 = vcmp.eq.s32.totalorder %v226, 1
    %vm229 = vcmp.eq.s32.totalorder %v227, 1
    %230 = vrot.lane.b32.xlu0 %v195, 33
    %v231 = vpop.permute.xlu0 %230
    %232 = vrot.lane.b32.xlu0 %v196, 33
    %v233 = vpop.permute.xlu0 %232
    %234 = vrot.lane.b32.xlu0 %v197, 33
    %v235 = vpop.permute.xlu0 %234
    %vm236 = vcmask 269312
    %v237 = vsel %vm236, %v231, %v233
    %v238 = vsel %vm236, %v233, %v235
    %v241 = vsel %vm228, %v237, 0.0
    %v242 = vsel %vm229, %v238, 0.0
    %243 = vset.pattern.permute.xlu0 4
    %244 = vperm.xlu0 %243, %v218
    %v245 = vpop.permute.xlu0 %244
    %v247 = vmul.f32 %v241, %v245
    %v248 = vmul.f32 %v242, %v245
    %249 = vset.pattern.permute.xlu0 5
    %250 = vperm.xlu0 %249, %v218
    %v251 = vpop.permute.xlu0 %250
    %v253 = vmul.f32 %v195, %v251
    %v254 = vmul.f32 %v196, %v251
    %v255 = vmul.f32 %v197, %v251
    %v256 = vsel %vm185, 1, 0
    %v257 = vsel %vm186, 1, 0
    %vm258 = vcmp.eq.s32.totalorder %v256, 1
    %vm259 = vcmp.eq.s32.totalorder %v257, 1
    %260 = vrot.lane.b32.xlu0 %v195, 31
    %v261 = vpop.permute.xlu0 %260
    %262 = vrot.lane.b32.xlu0 %v196, 31
    %v263 = vpop.permute.xlu0 %262
    %264 = vrot.lane.b32.xlu0 %v197, 31
    %v265 = vpop.permute.xlu0 %264
    %vm266 = vcmask 252928
    %v267 = vsel %vm266, %v261, %v263
    %v268 = vsel %vm266, %v263, %v265
    %v271 = vsel %vm258, %v267, 0.0
    %v272 = vsel %vm259, %v268, 0.0
    %273 = vset.pattern.permute.xlu0 6
    %274 = vperm.xlu0 %273, %v218
    %v275 = vpop.permute.xlu0 %274
    %v277 = vmul.f32 %v271, %v275
    %v278 = vmul.f32 %v272, %v275
    %v279 = vsel %vm193, 1, 0
    %v280 = vsel %vm194, 1, 0
    %vm281 = vcmp.eq.s32.totalorder %v279, 1
    %vm282 = vcmp.eq.s32.totalorder %v280, 1
    %283 = vrot.lane.b32.xlu0 %v195, 30
    %v284 = vpop.permute.xlu0 %283
    %285 = vrot.lane.b32.xlu0 %v196, 30
    %v286 = vpop.permute.xlu0 %285
    %287 = vrot.lane.b32.xlu0 %v197, 30
    %v288 = vpop.permute.xlu0 %287
    %vm289 = vcmask 244736
    %v290 = vsel %vm289, %v284, %v286
    %v291 = vsel %vm289, %v286, %v288
    %v294 = vsel %vm281, %v290, 0.0
    %v295 = vsel %vm282, %v291, 0.0
    %296 = vset.pattern.permute.xlu0 7
    %297 = vperm.xlu0 %296, %v218
    %v298 = vpop.permute.xlu0 %297
    %v300 = vmul.f32 %v294, %v298
    %v301 = vmul.f32 %v295, %v298
    %v302 = vadd.f32 %v224, %v300
    %v303 = vadd.f32 %v225, %v301
    %304 = vrot.lane.b32.xlu0 %v195, 18
    %v305 = vpop.permute.xlu0 %304
    %306 = vrot.lane.b32.xlu0 %v196, 18
    %v307 = vpop.permute.xlu0 %306
    %308 = vrot.lane.b32.xlu0 %v197, 18
    %v309 = vpop.permute.xlu0 %308
    %vm310 = vcmask 146432
    %v311 = vsel %vm310, %v305, %v307
    %v312 = vsel %vm310, %v307, %v309
    %v315 = vsel %vm200, %v311, 0.0
    %v316 = vsel %vm201, %v312, 0.0
    %317 = vset.pattern.permute.xlu0 8
    %318 = vperm.xlu0 %317, %v218
    %v319 = vpop.permute.xlu0 %318
    %v321 = vmul.f32 %v315, %v319
    %v322 = vmul.f32 %v316, %v319
    %v323 = vadd.f32 %v247, %v321
    %v324 = vadd.f32 %v248, %v322
    %325 = vrot.lane.b32.xlu0 %v195, 17
    %v326 = vpop.permute.xlu0 %325
    %327 = vrot.lane.b32.xlu0 %v196, 17
    %v328 = vpop.permute.xlu0 %327
    %329 = vrot.lane.b32.xlu0 %v197, 17
    %v330 = vpop.permute.xlu0 %329
    %vm331 = vcmask 138240
    %v332 = vsel %vm331, %v326, %v328
    %v333 = vsel %vm331, %v328, %v330
    %v336 = vsel %vm228, %v332, 0.0
    %v337 = vsel %vm229, %v333, 0.0
    %338 = vset.pattern.permute.xlu0 9
    %339 = vperm.xlu0 %338, %v218
    %v340 = vpop.permute.xlu0 %339
    %v342 = vmul.f32 %v336, %v340
    %v343 = vmul.f32 %v337, %v340
    %346 = vrot.lane.b32.xlu0 %v342, 96
    %v347 = vpop.permute.xlu0 %346
    %348 = vrot.lane.b32.xlu0 %v343, 96
    %v349 = vpop.permute.xlu0 %348
    %vm350 = vcmask 785408
    %v351 = vsel %vm350, %v347, %v349
    %v355 = vadd.f32 %v253, %v347
    %v356 = vadd.f32 %v254, %v351
    %v357 = vadd.f32 %v255, %v349
    %358 = vset.pattern.permute.xlu0 10
    %359 = vperm.xlu0 %358, %v218
    %v360 = vpop.permute.xlu0 %359
    %v362 = vmul.f32 %v195, %v360
    %v363 = vmul.f32 %v196, %v360
    %v364 = vmul.f32 %v197, %v360
    %368 = vrot.lane.b32.xlu0 %v362, 16
    %v369 = vpop.permute.xlu0 %368
    %370 = vrot.lane.b32.xlu0 %v363, 16
    %v371 = vpop.permute.xlu0 %370
    %372 = vrot.lane.b32.xlu0 %v364, 16
    %v373 = vpop.permute.xlu0 %372
    %vm374 = vcmask 130048
    %v375 = vsel %vm374, %v369, %v371
    %v376 = vsel %vm374, %v371, %v373
    %v379 = vadd.f32 %v277, %v375
    %v380 = vadd.f32 %v278, %v376
    %381 = vrot.lane.b32.xlu0 %v195, 15
    %v382 = vpop.permute.xlu0 %381
    %383 = vrot.lane.b32.xlu0 %v196, 15
    %v384 = vpop.permute.xlu0 %383
    %385 = vrot.lane.b32.xlu0 %v197, 15
    %v386 = vpop.permute.xlu0 %385
    %vm387 = vcmask 121856
    %v388 = vsel %vm387, %v382, %v384
    %v389 = vsel %vm387, %v384, %v386
    %v392 = vsel %vm258, %v388, 0.0
    %v393 = vsel %vm259, %v389, 0.0
    %394 = vset.pattern.permute.xlu0 11
    %395 = vperm.xlu0 %394, %v218
    %v396 = vpop.permute.xlu0 %395
    %v398 = vmul.f32 %v392, %v396
    %v399 = vmul.f32 %v393, %v396
    %v400 = vadd.f32 %v302, %v398
    %v401 = vadd.f32 %v303, %v399
    %402 = vrot.lane.b32.xlu0 %v195, 14
    %v403 = vpop.permute.xlu0 %402
    %404 = vrot.lane.b32.xlu0 %v196, 14
    %v405 = vpop.permute.xlu0 %404
    %406 = vrot.lane.b32.xlu0 %v197, 14
    %v407 = vpop.permute.xlu0 %406
    %vm408 = vcmask 113664
    %v409 = vsel %vm408, %v403, %v405
    %v410 = vsel %vm408, %v405, %v407
    %v413 = vsel %vm281, %v409, 0.0
    %v414 = vsel %vm282, %v410, 0.0
    %415 = vset.pattern.permute.xlu0 12
    %416 = vperm.xlu0 %415, %v218
    %v417 = vpop.permute.xlu0 %416
    %v419 = vmul.f32 %v413, %v417
    %v420 = vmul.f32 %v414, %v417
    %v421 = vadd.f32 %v323, %v419
    %v422 = vadd.f32 %v324, %v420
    %423 = vrot.lane.b32.xlu0 %v195, 2
    %v424 = vpop.permute.xlu0 %423
    %425 = vrot.lane.b32.xlu0 %v196, 2
    %v426 = vpop.permute.xlu0 %425
    %427 = vrot.lane.b32.xlu0 %v197, 2
    %v428 = vpop.permute.xlu0 %427
    %vm429 = vcmask 15360
    %v430 = vsel %vm429, %v424, %v426
    %v431 = vsel %vm429, %v426, %v428
    %v434 = vsel %vm200, %v430, 0.0
    %v435 = vsel %vm201, %v431, 0.0
    %436 = vset.pattern.permute.xlu0 13
    %437 = vperm.xlu0 %436, %v218
    %v438 = vpop.permute.xlu0 %437
    %v440 = vmul.f32 %v434, %v438
    %v441 = vmul.f32 %v435, %v438
    %444 = vrot.lane.b32.xlu0 %v440, 96
    %v445 = vpop.permute.xlu0 %444
    %446 = vrot.lane.b32.xlu0 %v441, 96
    %v447 = vpop.permute.xlu0 %446
    %v448 = vsel %vm350, %v445, %v447
    %v452 = vadd.f32 %v355, %v445
    %v453 = vadd.f32 %v356, %v448
    %v454 = vadd.f32 %v357, %v447
    %455 = vrot.lane.b32.xlu0 %v195, 1
    %v456 = vpop.permute.xlu0 %455
    %457 = vrot.lane.b32.xlu0 %v196, 1
    %v458 = vpop.permute.xlu0 %457
    %459 = vrot.lane.b32.xlu0 %v197, 1
    %v460 = vpop.permute.xlu0 %459
    %vm461 = vcmask 7168
    %v462 = vsel %vm461, %v456, %v458
    %v463 = vsel %vm461, %v458, %v460
    %v466 = vsel %vm228, %v462, 0.0
    %v467 = vsel %vm229, %v463, 0.0
    %468 = vset.pattern.permute.xlu0 14
    %469 = vperm.xlu0 %468, %v218
    %v470 = vpop.permute.xlu0 %469
    %v472 = vmul.f32 %v466, %v470
    %v473 = vmul.f32 %v467, %v470
    %v474 = vadd.f32 %v379, %v472
    %v475 = vadd.f32 %v380, %v473
    %476 = vset.pattern.permute.xlu0 15
    %477 = vperm.xlu0 %476, %v218
    %v478 = vpop.permute.xlu0 %477
    %v480 = vmul.f32 %v196, %v478
    %v481 = vmul.f32 %v197, %v478
    %v482 = vadd.f32 %v400, %v480
    %v483 = vadd.f32 %v401, %v481
    %v484 = vld [vmem:[#allocation2 + $0x8] sm:$0xff]
    %v485 = vld [vmem:[#allocation2 + $0x10] sm:$0xff]
    %v486 = vld [vmem:[#allocation2 + $0x18] sm:$0xff]
    %490 = vrot.lane.b32.xlu0 %v484, 127
    %v491 = vpop.permute.xlu0 %490
    %492 = vrot.lane.b32.xlu0 %v485, 127
    %v493 = vpop.permute.xlu0 %492
    %494 = vrot.lane.b32.xlu0 %v486, 127
    %v495 = vpop.permute.xlu0 %494
    %vm496 = vcmask 1039360
    %v497 = vsel %vm496, %v491, %v493
    %v498 = vsel %vm496, %v493, %v495
    %v501 = vsel %vm258, %v497, 0.0
    %v502 = vsel %vm259, %v498, 0.0
    %503 = vset.pattern.permute.xlu0 16
    %504 = vperm.xlu0 %503, %v218
    %v505 = vpop.permute.xlu0 %504
    %v507 = vmul.f32 %v501, %v505
    %v508 = vmul.f32 %v502, %v505
    %v509 = vadd.f32 %v421, %v507
    %v510 = vadd.f32 %v422, %v508
    %511 = vrot.lane.b32.xlu0 %v484, 126
    %v512 = vpop.permute.xlu0 %511
    %513 = vrot.lane.b32.xlu0 %v485, 126
    %v514 = vpop.permute.xlu0 %513
    %515 = vrot.lane.b32.xlu0 %v486, 126
    %v516 = vpop.permute.xlu0 %515
    %vm517 = vcmask 1031168
    %v518 = vsel %vm517, %v512, %v514
    %v519 = vsel %vm517, %v514, %v516
    %v522 = vsel %vm281, %v518, 0.0
    %v523 = vsel %vm282, %v519, 0.0
    %524 = vset.pattern.permute.xlu0 17
    %525 = vperm.xlu0 %524, %v218
    %v526 = vpop.permute.xlu0 %525
    %v528 = vmul.f32 %v522, %v526
    %v529 = vmul.f32 %v523, %v526
    %532 = vrot.lane.b32.xlu0 %v528, 96
    %v533 = vpop.permute.xlu0 %532
    %534 = vrot.lane.b32.xlu0 %v529, 96
    %v535 = vpop.permute.xlu0 %534
    %v536 = vsel %vm350, %v533, %v535
    %v540 = vadd.f32 %v452, %v533
    %v541 = vadd.f32 %v453, %v536
    %v542 = vadd.f32 %v454, %v535
    %543 = vrot.lane.b32.xlu0 %v484, 114
    %v544 = vpop.permute.xlu0 %543
    %545 = vrot.lane.b32.xlu0 %v485, 114
    %v546 = vpop.permute.xlu0 %545
    %547 = vrot.lane.b32.xlu0 %v486, 114
    %v548 = vpop.permute.xlu0 %547
    %vm549 = vcmask 932864
    %v550 = vsel %vm549, %v544, %v546
    %v551 = vsel %vm549, %v546, %v548
    %v554 = vsel %vm200, %v550, 0.0
    %v555 = vsel %vm201, %v551, 0.0
    %556 = vset.pattern.permute.xlu0 18
    %557 = vperm.xlu0 %556, %v218
    %v558 = vpop.permute.xlu0 %557
    %v560 = vmul.f32 %v554, %v558
    %v561 = vmul.f32 %v555, %v558
    %v562 = vadd.f32 %v474, %v560
    %v563 = vadd.f32 %v475, %v561
    %564 = vrot.lane.b32.xlu0 %v484, 113
    %v565 = vpop.permute.xlu0 %564
    %566 = vrot.lane.b32.xlu0 %v485, 113
    %v567 = vpop.permute.xlu0 %566
    %568 = vrot.lane.b32.xlu0 %v486, 113
    %v569 = vpop.permute.xlu0 %568
    %vm570 = vcmask 924672
    %v571 = vsel %vm570, %v565, %v567
    %v572 = vsel %vm570, %v567, %v569
    %v575 = vsel %vm228, %v571, 0.0
    %v576 = vsel %vm229, %v572, 0.0
    %577 = vset.pattern.permute.xlu0 19
    %578 = vperm.xlu0 %577, %v218
    %v579 = vpop.permute.xlu0 %578
    %v581 = vmul.f32 %v575, %v579
    %v582 = vmul.f32 %v576, %v579
    %v583 = vadd.f32 %v482, %v581
    %v584 = vadd.f32 %v483, %v582
    %585 = vset.pattern.permute.xlu0 20
    %586 = vperm.xlu0 %585, %v218
    %v587 = vpop.permute.xlu0 %586
    %v589 = vmul.f32 %v484, %v587
    %v590 = vmul.f32 %v485, %v587
    %v591 = vmul.f32 %v486, %v587
    %595 = vrot.lane.b32.xlu0 %v589, 112
    %v596 = vpop.permute.xlu0 %595
    %597 = vrot.lane.b32.xlu0 %v590, 112
    %v598 = vpop.permute.xlu0 %597
    %599 = vrot.lane.b32.xlu0 %v591, 112
    %v600 = vpop.permute.xlu0 %599
    %vm601 = vcmask 916480
    %v602 = vsel %vm601, %v596, %v598
    %v603 = vsel %vm601, %v598, %v600
    %v606 = vadd.f32 %v509, %v602
    %v607 = vadd.f32 %v510, %v603
    %608 = vrot.lane.b32.xlu0 %v484, 111
    %v609 = vpop.permute.xlu0 %608
    %610 = vrot.lane.b32.xlu0 %v485, 111
    %v611 = vpop.permute.xlu0 %610
    %612 = vrot.lane.b32.xlu0 %v486, 111
    %v613 = vpop.permute.xlu0 %612
    %vm614 = vcmask 908288
    %v615 = vsel %vm614, %v609, %v611
    %v616 = vsel %vm614, %v611, %v613
    %v619 = vsel %vm258, %v615, 0.0
    %v620 = vsel %vm259, %v616, 0.0
    %621 = vset.pattern.permute.xlu0 21
    %622 = vperm.xlu0 %621, %v218
    %v623 = vpop.permute.xlu0 %622
    %v625 = vmul.f32 %v619, %v623
    %v626 = vmul.f32 %v620, %v623
    %629 = vrot.lane.b32.xlu0 %v625, 96
    %v630 = vpop.permute.xlu0 %629
    %631 = vrot.lane.b32.xlu0 %v626, 96
    %v632 = vpop.permute.xlu0 %631
    %v633 = vsel %vm350, %v630, %v632
    %v637 = vadd.f32 %v540, %v630
    %v638 = vadd.f32 %v541, %v633
    %v639 = vadd.f32 %v542, %v632
    %640 = vrot.lane.b32.xlu0 %v484, 110
    %v641 = vpop.permute.xlu0 %640
    %642 = vrot.lane.b32.xlu0 %v485, 110
    %v643 = vpop.permute.xlu0 %642
    %644 = vrot.lane.b32.xlu0 %v486, 110
    %v645 = vpop.permute.xlu0 %644
    %vm646 = vcmask 900096
    %v647 = vsel %vm646, %v641, %v643
    %v648 = vsel %vm646, %v643, %v645
    %v651 = vsel %vm281, %v647, 0.0
    %v652 = vsel %vm282, %v648, 0.0
    %653 = vset.pattern.permute.xlu0 22
    %654 = vperm.xlu0 %653, %v218
    %v655 = vpop.permute.xlu0 %654
    %v657 = vmul.f32 %v651, %v655
    %v658 = vmul.f32 %v652, %v655
    %v659 = vadd.f32 %v562, %v657
    %v660 = vadd.f32 %v563, %v658
    %661 = vrot.lane.b32.xlu0 %v484, 98
    %v662 = vpop.permute.xlu0 %661
    %663 = vrot.lane.b32.xlu0 %v485, 98
    %v664 = vpop.permute.xlu0 %663
    %665 = vrot.lane.b32.xlu0 %v486, 98
    %v666 = vpop.permute.xlu0 %665
    %vm667 = vcmask 801792
    %v668 = vsel %vm667, %v662, %v664
    %v669 = vsel %vm667, %v664, %v666
    %v672 = vsel %vm200, %v668, 0.0
    %v673 = vsel %vm201, %v669, 0.0
    %674 = vset.pattern.permute.xlu0 23
    %675 = vperm.xlu0 %674, %v218
    %v676 = vpop.permute.xlu0 %675
    %v678 = vmul.f32 %v672, %v676
    %v679 = vmul.f32 %v673, %v676
    %v680 = vadd.f32 %v583, %v678
    %v681 = vadd.f32 %v584, %v679
    %682 = vrot.lane.b32.xlu0 %v484, 97
    %v683 = vpop.permute.xlu0 %682
    %684 = vrot.lane.b32.xlu0 %v485, 97
    %v685 = vpop.permute.xlu0 %684
    %686 = vrot.lane.b32.xlu0 %v486, 97
    %v687 = vpop.permute.xlu0 %686
    %vm688 = vcmask 793600
    %v689 = vsel %vm688, %v683, %v685
    %v690 = vsel %vm688, %v685, %v687
    %v693 = vsel %vm228, %v689, 0.0
    %v694 = vsel %vm229, %v690, 0.0
    %695 = vset.pattern.permute.xlu0 24
    %696 = vperm.xlu0 %695, %v218
    %v697 = vpop.permute.xlu0 %696
    %v699 = vmul.f32 %v693, %v697
    %v700 = vmul.f32 %v694, %v697
    %v701 = vadd.f32 %v606, %v699
    %v702 = vadd.f32 %v607, %v700
    %703 = vset.pattern.permute.xlu0 25
    %704 = vperm.xlu0 %703, %v218
    %v705 = vpop.permute.xlu0 %704
    %v707 = vmul.f32 %v484, %v705
    %v708 = vmul.f32 %v485, %v705
    %v709 = vmul.f32 %v486, %v705
    %713 = vrot.lane.b32.xlu0 %v707, 64
    %v714 = vpop.permute.xlu0 %713
    %715 = vrot.lane.b32.xlu0 %v708, 64
    %v716 = vpop.permute.xlu0 %715
    %717 = vrot.lane.b32.xlu0 %v709, 64
    %v718 = vpop.permute.xlu0 %717
    %vm719 = vcmask 523264
    %v720 = vsel %vm719, %v714, %v716
    %v721 = vsel %vm719, %v716, %v718
    %v725 = vadd.f32 %v637, %v714
    %v726 = vadd.f32 %v638, %v720
    %v727 = vadd.f32 %v639, %v721
    %728 = vrot.lane.b32.xlu0 %v484, 95
    %v729 = vpop.permute.xlu0 %728
    %730 = vrot.lane.b32.xlu0 %v485, 95
    %v731 = vpop.permute.xlu0 %730
    %732 = vrot.lane.b32.xlu0 %v486, 95
    %v733 = vpop.permute.xlu0 %732
    %vm734 = vcmask 777216
    %v735 = vsel %vm734, %v729, %v731
    %v736 = vsel %vm734, %v731, %v733
    %v739 = vsel %vm258, %v735, 0.0
    %v740 = vsel %vm259, %v736, 0.0
    %741 = vset.pattern.permute.xlu0 26
    %742 = vperm.xlu0 %741, %v218
    %v743 = vpop.permute.xlu0 %742
    %v745 = vmul.f32 %v739, %v743
    %v746 = vmul.f32 %v740, %v743
    %v747 = vadd.f32 %v659, %v745
    %v748 = vadd.f32 %v660, %v746
    %749 = vrot.lane.b32.xlu0 %v484, 94
    %v750 = vpop.permute.xlu0 %749
    %751 = vrot.lane.b32.xlu0 %v485, 94
    %v752 = vpop.permute.xlu0 %751
    %753 = vrot.lane.b32.xlu0 %v486, 94
    %v754 = vpop.permute.xlu0 %753
    %vm755 = vcmask 769024
    %v756 = vsel %vm755, %v750, %v752
    %v757 = vsel %vm755, %v752, %v754
    %v760 = vsel %vm281, %v756, 0.0
    %v761 = vsel %vm282, %v757, 0.0
    %762 = vset.pattern.permute.xlu0 27
    %763 = vperm.xlu0 %762, %v218
    %v764 = vpop.permute.xlu0 %763
    %v766 = vmul.f32 %v760, %v764
    %v767 = vmul.f32 %v761, %v764
    %v768 = vadd.f32 %v680, %v766
    %v769 = vadd.f32 %v681, %v767
    %v770 = vadd.f32 %v768, %v701
    %v771 = vadd.f32 %v769, %v702
    %774 = vrot.lane.b32.xlu0 %v747, 96
    %v775 = vpop.permute.xlu0 %774
    %776 = vrot.lane.b32.xlu0 %v748, 96
    %v777 = vpop.permute.xlu0 %776
    %v778 = vsel %vm350, %v775, %v777
    %v782 = vadd.f32 %v725, %v775
    %v783 = vadd.f32 %v726, %v778
    %v784 = vadd.f32 %v727, %v777
    %788 = vrot.lane.b32.xlu0 %v782, 32
    %v789 = vpop.permute.xlu0 %788
    %790 = vrot.lane.b32.xlu0 %v783, 32
    %v791 = vpop.permute.xlu0 %790
    %792 = vrot.lane.b32.xlu0 %v784, 32
    %v793 = vpop.permute.xlu0 %792
    %vm794 = vcmask 261120
    %v795 = vsel %vm794, %v789, %v791
    %v796 = vsel %vm794, %v791, %v793
    %v799 = vadd.f32 %v770, %v795
    %v800 = vadd.f32 %v771, %v796
    %801 = vset.pattern.permute.xlu0 28
    %802 = vperm.xlu0 %801, %v218
    %v803 = vpop.permute.xlu0 %802
    %v805 = vadd.f32 %v799, %v803
    %v806 = vadd.f32 %v800, %v803
    %807 = vst [vmem:[#allocation3] sm:$0xff] 0.0
    %808 = vst [vmem:[#allocation3 + $0x8] sm:$0xff] 0.0
    %809 = vst [vmem:[#allocation3 + $0x20] sm:$0xff] 0.0
    %810 = vst [vmem:[#allocation3 + $0x28] sm:$0xff] 0.0
    %811 = vst [vmem:[#allocation3 + $0x10] sm:$0xff] %v805
    %812 = vst [vmem:[#allocation3 + $0x18] sm:$0xff] %v806
    %v813 = vadd.s32 %v76, 4294967287
    %v814 = vadd.s32 %v77, 4294967287
    %vm815 = vcmp.ge.s32.totalorder %v813, 0
    %vm816 = vcmp.ge.s32.totalorder %v814, 0
    %vm817 = vcmp.lt.s32.totalorder %v813, 16
    %vm818 = vcmp.lt.s32.totalorder %v814, 16
    %vm819 = vmand %vm815, %vm817
    %vm820 = vmand %vm816, %vm818
    %v821 = vadd.s32 %v76, 4294967290
    %v822 = vadd.s32 %v77, 4294967290
    %vm823 = vcmp.ge.s32.totalorder %v821, 0
    %vm824 = vcmp.ge.s32.totalorder %v822, 0
    %vm825 = vcmp.lt.s32.totalorder %v821, 16
    %vm826 = vcmp.lt.s32.totalorder %v822, 16
    %vm827 = vmand %vm823, %vm825
    %vm828 = vmand %vm824, %vm826
    %v829 = vadd.s32 %v76, 4294967293
    %v830 = vadd.s32 %v77, 4294967293
    %vm831 = vcmp.ge.s32.totalorder %v829, 0
    %vm832 = vcmp.ge.s32.totalorder %v830, 0
    %vm833 = vcmp.lt.s32.totalorder %v829, 16
    %vm834 = vcmp.lt.s32.totalorder %v830, 16
    %vm835 = vmand %vm831, %vm833
    %vm836 = vmand %vm832, %vm834
    %v837 = vadd.s32 %v76, 3
    %v838 = vadd.s32 %v77, 3
    %vm839 = vcmp.ge.s32.totalorder %v837, 0
    %vm840 = vcmp.ge.s32.totalorder %v838, 0
    %vm841 = vcmp.lt.s32.totalorder %v837, 16
    %vm842 = vcmp.lt.s32.totalorder %v838, 16
    %vm843 = vmand %vm839, %vm841
    %vm844 = vmand %vm840, %vm842
    %v845 = vadd.s32 %v76, 6
    %v846 = vadd.s32 %v77, 6
    %vm847 = vcmp.ge.s32.totalorder %v845, 0
    %vm848 = vcmp.ge.s32.totalorder %v846, 0
    %vm849 = vcmp.lt.s32.totalorder %v845, 16
    %vm850 = vcmp.lt.s32.totalorder %v846, 16
    %vm851 = vmand %vm847, %vm849
    %vm852 = vmand %vm848, %vm850
    %v853 = vadd.s32 %v76, 9
    %v854 = vadd.s32 %v77, 9
    %vm855 = vcmp.ge.s32.totalorder %v853, 0
    %vm856 = vcmp.ge.s32.totalorder %v854, 0
    %vm857 = vcmp.lt.s32.totalorder %v853, 16
    %vm858 = vcmp.lt.s32.totalorder %v854, 16
    %vm859 = vmand %vm855, %vm857
    %vm860 = vmand %vm856, %vm858
    %v861 = vld [vmem:[#allocation3] sm:$0xff]
    %v862 = vld [vmem:[#allocation3 + $0x8] sm:$0xff]
    %v863 = vld [vmem:[#allocation3 + $0x10] sm:$0xff]
    %v864 = vsel %vm819, 1, 0
    %v865 = vsel %vm820, 1, 0
    %vm866 = vcmp.eq.s32.totalorder %v864, 1
    %vm867 = vcmp.eq.s32.totalorder %v865, 1
    %871 = vrot.lane.b32.xlu0 %v861, 25
    %v872 = vpop.permute.xlu0 %871
    %873 = vrot.lane.b32.xlu0 %v862, 25
    %v874 = vpop.permute.xlu0 %873
    %875 = vrot.lane.b32.xlu0 %v863, 25
    %v876 = vpop.permute.xlu0 %875
    %vm877 = vcmask 203776
    %v878 = vsel %vm877, %v872, %v874
    %v879 = vsel %vm877, %v874, %v876
    %v882 = vsel %vm866, %v878, 0.0
    %v883 = vsel %vm867, %v879, 0.0
    %v884 = vld [vmem:[%s1] sm:$0xff]
    %886 = vset.pattern.permute.xlu0 29
    %887 = vperm.xlu0 %886, %v884
    %v888 = vpop.permute.xlu0 %887
    %v890 = vmul.f32 %v882, %v888
    %v891 = vmul.f32 %v883, %v888
    %v892 = vsel %vm827, 1, 0
    %v893 = vsel %vm828, 1, 0
    %vm894 = vcmp.eq.s32.totalorder %v892, 1
    %vm895 = vcmp.eq.s32.totalorder %v893, 1
    %896 = vrot.lane.b32.xlu0 %v861, 22
    %v897 = vpop.permute.xlu0 %896
    %898 = vrot.lane.b32.xlu0 %v862, 22
    %v899 = vpop.permute.xlu0 %898
    %900 = vrot.lane.b32.xlu0 %v863, 22
    %v901 = vpop.permute.xlu0 %900
    %vm902 = vcmask 179200
    %v903 = vsel %vm902, %v897, %v899
    %v904 = vsel %vm902, %v899, %v901
    %v907 = vsel %vm894, %v903, 0.0
    %v908 = vsel %vm895, %v904, 0.0
    %909 = vset.pattern.permute.xlu0 30
    %910 = vperm.xlu0 %909, %v884
    %v911 = vpop.permute.xlu0 %910
    %v913 = vmul.f32 %v907, %v911
    %v914 = vmul.f32 %v908, %v911
    %v915 = vsel %vm835, 1, 0
    %v916 = vsel %vm836, 1, 0
    %vm917 = vcmp.eq.s32.totalorder %v915, 1
    %vm918 = vcmp.eq.s32.totalorder %v916, 1
    %919 = vrot.lane.b32.xlu0 %v861, 19
    %v920 = vpop.permute.xlu0 %919
    %921 = vrot.lane.b32.xlu0 %v862, 19
    %v922 = vpop.permute.xlu0 %921
    %923 = vrot.lane.b32.xlu0 %v863, 19
    %v924 = vpop.permute.xlu0 %923
    %vm925 = vcmask 154624
    %v926 = vsel %vm925, %v920, %v922
    %v927 = vsel %vm925, %v922, %v924
    %v930 = vsel %vm917, %v926, 0.0
    %v931 = vsel %vm918, %v927, 0.0
    %932 = vset.pattern.permute.xlu0 31
    %933 = vperm.xlu0 %932, %v884
    %v934 = vpop.permute.xlu0 %933
    %v936 = vmul.f32 %v930, %v934
    %v937 = vmul.f32 %v931, %v934
    %938 = vset.pattern.permute.xlu0 32
    %939 = vperm.xlu0 %938, %v884
    %v940 = vpop.permute.xlu0 %939
    %v942 = vmul.f32 %v861, %v940
    %v943 = vmul.f32 %v862, %v940
    %v944 = vmul.f32 %v863, %v940
    %v945 = vsel %vm843, 1, 0
    %v946 = vsel %vm844, 1, 0
    %vm947 = vcmp.eq.s32.totalorder %v945, 1
    %vm948 = vcmp.eq.s32.totalorder %v946, 1
    %949 = vrot.lane.b32.xlu0 %v861, 13
    %v950 = vpop.permute.xlu0 %949
    %951 = vrot.lane.b32.xlu0 %v862, 13
    %v952 = vpop.permute.xlu0 %951
    %953 = vrot.lane.b32.xlu0 %v863, 13
    %v954 = vpop.permute.xlu0 %953
    %vm955 = vcmask 105472
    %v956 = vsel %vm955, %v950, %v952
    %v957 = vsel %vm955, %v952, %v954
    %v960 = vsel %vm947, %v956, 0.0
    %v961 = vsel %vm948, %v957, 0.0
    %962 = vset.pattern.permute.xlu0 33
    %963 = vperm.xlu0 %962, %v884
    %v964 = vpop.permute.xlu0 %963
    %v966 = vmul.f32 %v960, %v964
    %v967 = vmul.f32 %v961, %v964
    %v968 = vadd.f32 %v890, %v966
    %v969 = vadd.f32 %v891, %v967
    %v970 = vsel %vm851, 1, 0
    %v971 = vsel %vm852, 1, 0
    %vm972 = vcmp.eq.s32.totalorder %v970, 1
    %vm973 = vcmp.eq.s32.totalorder %v971, 1
    %974 = vrot.lane.b32.xlu0 %v861, 10
    %v975 = vpop.permute.xlu0 %974
    %976 = vrot.lane.b32.xlu0 %v862, 10
    %v977 = vpop.permute.xlu0 %976
    %978 = vrot.lane.b32.xlu0 %v863, 10
    %v979 = vpop.permute.xlu0 %978
    %vm980 = vcmask 80896
    %v981 = vsel %vm980, %v975, %v977
    %v982 = vsel %vm980, %v977, %v979
    %v985 = vsel %vm972, %v981, 0.0
    %v986 = vsel %vm973, %v982, 0.0
    %987 = vset.pattern.permute.xlu0 34
    %988 = vperm.xlu0 %987, %v884
    %v989 = vpop.permute.xlu0 %988
    %v991 = vmul.f32 %v985, %v989
    %v992 = vmul.f32 %v986, %v989
    %v993 = vadd.f32 %v913, %v991
    %v994 = vadd.f32 %v914, %v992
    %v995 = vsel %vm859, 1, 0
    %v996 = vsel %vm860, 1, 0
    %vm997 = vcmp.eq.s32.totalorder %v995, 1
    %vm998 = vcmp.eq.s32.totalorder %v996, 1
    %999 = vrot.lane.b32.xlu0 %v861, 7
    %v1000 = vpop.permute.xlu0 %999
    %1001 = vrot.lane.b32.xlu0 %v862, 7
    %v1002 = vpop.permute.xlu0 %1001
    %1003 = vrot.lane.b32.xlu0 %v863, 7
    %v1004 = vpop.permute.xlu0 %1003
    %vm1005 = vcmask 56320
    %v1006 = vsel %vm1005, %v1000, %v1002
    %v1007 = vsel %vm1005, %v1002, %v1004
    %v1010 = vsel %vm997, %v1006, 0.0
    %v1011 = vsel %vm998, %v1007, 0.0
    %1012 = vset.pattern.permute.xlu0 35
    %1013 = vperm.xlu0 %1012, %v884
    %v1014 = vpop.permute.xlu0 %1013
    %v1016 = vmul.f32 %v1010, %v1014
    %v1017 = vmul.f32 %v1011, %v1014
    %v1018 = vadd.f32 %v936, %v1016
    %v1019 = vadd.f32 %v937, %v1017
    %v1020 = vld [vmem:[#allocation3 + $0x8] sm:$0xff]
    %v1021 = vld [vmem:[#allocation3 + $0x10] sm:$0xff]
    %v1022 = vld [vmem:[#allocation3 + $0x18] sm:$0xff]
    %1026 = vrot.lane.b32.xlu0 %v1020, 105
    %v1027 = vpop.permute.xlu0 %1026
    %1028 = vrot.lane.b32.xlu0 %v1021, 105
    %v1029 = vpop.permute.xlu0 %1028
    %1030 = vrot.lane.b32.xlu0 %v1022, 105
    %v1031 = vpop.permute.xlu0 %1030
    %vm1032 = vcmask 859136
    %v1033 = vsel %vm1032, %v1027, %v1029
    %v1034 = vsel %vm1032, %v1029, %v1031
    %v1037 = vsel %vm866, %v1033, 0.0
    %v1038 = vsel %vm867, %v1034, 0.0
    %1039 = vset.pattern.permute.xlu0 36
    %1040 = vperm.xlu0 %1039, %v884
    %v1041 = vpop.permute.xlu0 %1040
    %v1043 = vmul.f32 %v1037, %v1041
    %v1044 = vmul.f32 %v1038, %v1041
    %1047 = vrot.lane.b32.xlu0 %v1043, 112
    %v1048 = vpop.permute.xlu0 %1047
    %1049 = vrot.lane.b32.xlu0 %v1044, 112
    %v1050 = vpop.permute.xlu0 %1049
    %v1051 = vsel %vm601, %v1048, %v1050
    %v1055 = vadd.f32 %v942, %v1048
    %v1056 = vadd.f32 %v943, %v1051
    %v1057 = vadd.f32 %v944, %v1050
    %1058 = vrot.lane.b32.xlu0 %v1020, 102
    %v1059 = vpop.permute.xlu0 %1058
    %1060 = vrot.lane.b32.xlu0 %v1021, 102
    %v1061 = vpop.permute.xlu0 %1060
    %1062 = vrot.lane.b32.xlu0 %v1022, 102
    %v1063 = vpop.permute.xlu0 %1062
    %vm1064 = vcmask 834560
    %v1065 = vsel %vm1064, %v1059, %v1061
    %v1066 = vsel %vm1064, %v1061, %v1063
    %v1069 = vsel %vm894, %v1065, 0.0
    %v1070 = vsel %vm895, %v1066, 0.0
    %1071 = vset.pattern.permute.xlu0 37
    %1072 = vperm.xlu0 %1071, %v884
    %v1073 = vpop.permute.xlu0 %1072
    %v1075 = vmul.f32 %v1069, %v1073
    %v1076 = vmul.f32 %v1070, %v1073
    %v1077 = vadd.f32 %v968, %v1075
    %v1078 = vadd.f32 %v969, %v1076
    %1079 = vrot.lane.b32.xlu0 %v1020, 99
    %v1080 = vpop.permute.xlu0 %1079
    %1081 = vrot.lane.b32.xlu0 %v1021, 99
    %v1082 = vpop.permute.xlu0 %1081
    %1083 = vrot.lane.b32.xlu0 %v1022, 99
    %v1084 = vpop.permute.xlu0 %1083
    %vm1085 = vcmask 809984
    %v1086 = vsel %vm1085, %v1080, %v1082
    %v1087 = vsel %vm1085, %v1082, %v1084
    %v1090 = vsel %vm917, %v1086, 0.0
    %v1091 = vsel %vm918, %v1087, 0.0
    %1092 = vset.pattern.permute.xlu0 38
    %1093 = vperm.xlu0 %1092, %v884
    %v1094 = vpop.permute.xlu0 %1093
    %v1096 = vmul.f32 %v1090, %v1094
    %v1097 = vmul.f32 %v1091, %v1094
    %v1098 = vadd.f32 %v993, %v1096
    %v1099 = vadd.f32 %v994, %v1097
    %1100 = vset.pattern.permute.xlu0 39
    %1101 = vperm.xlu0 %1100, %v884
    %v1102 = vpop.permute.xlu0 %1101
    %v1104 = vmul.f32 %v1020, %v1102
    %v1105 = vmul.f32 %v1021, %v1102
    %v1106 = vmul.f32 %v1022, %v1102
    %1110 = vrot.lane.b32.xlu0 %v1104, 96
    %v1111 = vpop.permute.xlu0 %1110
    %1112 = vrot.lane.b32.xlu0 %v1105, 96
    %v1113 = vpop.permute.xlu0 %1112
    %1114 = vrot.lane.b32.xlu0 %v1106, 96
    %v1115 = vpop.permute.xlu0 %1114
    %v1116 = vsel %vm350, %v1111, %v1113
    %v1117 = vsel %vm350, %v1113, %v1115
    %v1120 = vadd.f32 %v1018, %v1116
    %v1121 = vadd.f32 %v1019, %v1117
    %1122 = vrot.lane.b32.xlu0 %v1020, 93
    %v1123 = vpop.permute.xlu0 %1122
    %1124 = vrot.lane.b32.xlu0 %v1021, 93
    %v1125 = vpop.permute.xlu0 %1124
    %1126 = vrot.lane.b32.xlu0 %v1022, 93
    %v1127 = vpop.permute.xlu0 %1126
    %vm1128 = vcmask 760832
    %v1129 = vsel %vm1128, %v1123, %v1125
    %v1130 = vsel %vm1128, %v1125, %v1127
    %v1133 = vsel %vm947, %v1129, 0.0
    %v1134 = vsel %vm948, %v1130, 0.0
    %1135 = vset.pattern.permute.xlu0 40
    %1136 = vperm.xlu0 %1135, %v884
    %v1137 = vpop.permute.xlu0 %1136
    %v1139 = vmul.f32 %v1133, %v1137
    %v1140 = vmul.f32 %v1134, %v1137
    %1143 = vrot.lane.b32.xlu0 %v1139, 112
    %v1144 = vpop.permute.xlu0 %1143
    %1145 = vrot.lane.b32.xlu0 %v1140, 112
    %v1146 = vpop.permute.xlu0 %1145
    %v1147 = vsel %vm601, %v1144, %v1146
    %v1151 = vadd.f32 %v1055, %v1144
    %v1152 = vadd.f32 %v1056, %v1147
    %v1153 = vadd.f32 %v1057, %v1146
    %1154 = vrot.lane.b32.xlu0 %v1020, 90
    %v1155 = vpop.permute.xlu0 %1154
    %1156 = vrot.lane.b32.xlu0 %v1021, 90
    %v1157 = vpop.permute.xlu0 %1156
    %1158 = vrot.lane.b32.xlu0 %v1022, 90
    %v1159 = vpop.permute.xlu0 %1158
    %vm1160 = vcmask 736256
    %v1161 = vsel %vm1160, %v1155, %v1157
    %v1162 = vsel %vm1160, %v1157, %v1159
    %v1165 = vsel %vm972, %v1161, 0.0
    %v1166 = vsel %vm973, %v1162, 0.0
    %1167 = vset.pattern.permute.xlu0 41
    %1168 = vperm.xlu0 %1167, %v884
    %v1169 = vpop.permute.xlu0 %1168
    %v1171 = vmul.f32 %v1165, %v1169
    %v1172 = vmul.f32 %v1166, %v1169
    %v1173 = vadd.f32 %v1077, %v1171
    %v1174 = vadd.f32 %v1078, %v1172
    %1175 = vrot.lane.b32.xlu0 %v1020, 87
    %v1176 = vpop.permute.xlu0 %1175
    %1177 = vrot.lane.b32.xlu0 %v1021, 87
    %v1178 = vpop.permute.xlu0 %1177
    %1179 = vrot.lane.b32.xlu0 %v1022, 87
    %v1180 = vpop.permute.xlu0 %1179
    %vm1181 = vcmask 711680
    %v1182 = vsel %vm1181, %v1176, %v1178
    %v1183 = vsel %vm1181, %v1178, %v1180
    %v1186 = vsel %vm997, %v1182, 0.0
    %v1187 = vsel %vm998, %v1183, 0.0
    %1188 = vset.pattern.permute.xlu0 42
    %1189 = vperm.xlu0 %1188, %v884
    %v1190 = vpop.permute.xlu0 %1189
    %v1192 = vmul.f32 %v1186, %v1190
    %v1193 = vmul.f32 %v1187, %v1190
    %v1194 = vadd.f32 %v1098, %v1192
    %v1195 = vadd.f32 %v1099, %v1193
    %1196 = vrot.lane.b32.xlu0 %v1020, 57
    %v1197 = vpop.permute.xlu0 %1196
    %1198 = vrot.lane.b32.xlu0 %v1021, 57
    %v1199 = vpop.permute.xlu0 %1198
    %1200 = vrot.lane.b32.xlu0 %v1022, 57
    %v1201 = vpop.permute.xlu0 %1200
    %vm1202 = vcmask 465920
    %v1203 = vsel %vm1202, %v1197, %v1199
    %v1204 = vsel %vm1202, %v1199, %v1201
    %v1207 = vsel %vm866, %v1203, 0.0
    %v1208 = vsel %vm867, %v1204, 0.0
    %1209 = vset.pattern.permute.xlu0 43
    %1210 = vperm.xlu0 %1209, %v884
    %v1211 = vpop.permute.xlu0 %1210
    %v1213 = vmul.f32 %v1207, %v1211
    %v1214 = vmul.f32 %v1208, %v1211
    %v1215 = vadd.f32 %v1120, %v1213
    %v1216 = vadd.f32 %v1121, %v1214
    %1217 = vrot.lane.b32.xlu0 %v1020, 54
    %v1218 = vpop.permute.xlu0 %1217
    %1219 = vrot.lane.b32.xlu0 %v1021, 54
    %v1220 = vpop.permute.xlu0 %1219
    %1221 = vrot.lane.b32.xlu0 %v1022, 54
    %v1222 = vpop.permute.xlu0 %1221
    %vm1223 = vcmask 441344
    %v1224 = vsel %vm1223, %v1218, %v1220
    %v1225 = vsel %vm1223, %v1220, %v1222
    %v1228 = vsel %vm894, %v1224, 0.0
    %v1229 = vsel %vm895, %v1225, 0.0
    %1230 = vset.pattern.permute.xlu0 44
    %1231 = vperm.xlu0 %1230, %v884
    %v1232 = vpop.permute.xlu0 %1231
    %v1234 = vmul.f32 %v1228, %v1232
    %v1235 = vmul.f32 %v1229, %v1232
    %1238 = vrot.lane.b32.xlu0 %v1234, 112
    %v1239 = vpop.permute.xlu0 %1238
    %1240 = vrot.lane.b32.xlu0 %v1235, 112
    %v1241 = vpop.permute.xlu0 %1240
    %v1242 = vsel %vm601, %v1239, %v1241
    %v1246 = vadd.f32 %v1151, %v1239
    %v1247 = vadd.f32 %v1152, %v1242
    %v1248 = vadd.f32 %v1153, %v1241
    %1249 = vrot.lane.b32.xlu0 %v1020, 51
    %v1250 = vpop.permute.xlu0 %1249
    %1251 = vrot.lane.b32.xlu0 %v1021, 51
    %v1252 = vpop.permute.xlu0 %1251
    %1253 = vrot.lane.b32.xlu0 %v1022, 51
    %v1254 = vpop.permute.xlu0 %1253
    %vm1255 = vcmask 416768
    %v1256 = vsel %vm1255, %v1250, %v1252
    %v1257 = vsel %vm1255, %v1252, %v1254
    %v1260 = vsel %vm917, %v1256, 0.0
    %v1261 = vsel %vm918, %v1257, 0.0
    %1262 = vset.pattern.permute.xlu0 45
    %1263 = vperm.xlu0 %1262, %v884
    %v1264 = vpop.permute.xlu0 %1263
    %v1266 = vmul.f32 %v1260, %v1264
    %v1267 = vmul.f32 %v1261, %v1264
    %v1268 = vadd.f32 %v1173, %v1266
    %v1269 = vadd.f32 %v1174, %v1267
    %1270 = vset.pattern.permute.xlu0 46
    %1271 = vperm.xlu0 %1270, %v884
    %v1272 = vpop.permute.xlu0 %1271
    %v1274 = vmul.f32 %v1020, %v1272
    %v1275 = vmul.f32 %v1021, %v1272
    %v1276 = vmul.f32 %v1022, %v1272
    %1280 = vrot.lane.b32.xlu0 %v1274, 48
    %v1281 = vpop.permute.xlu0 %1280
    %1282 = vrot.lane.b32.xlu0 %v1275, 48
    %v1283 = vpop.permute.xlu0 %1282
    %1284 = vrot.lane.b32.xlu0 %v1276, 48
    %v1285 = vpop.permute.xlu0 %1284
    %vm1286 = vcmask 392192
    %v1287 = vsel %vm1286, %v1281, %v1283
    %v1288 = vsel %vm1286, %v1283, %v1285
    %v1291 = vadd.f32 %v1194, %v1287
    %v1292 = vadd.f32 %v1195, %v1288
    %1293 = vrot.lane.b32.xlu0 %v1020, 45
    %v1294 = vpop.permute.xlu0 %1293
    %1295 = vrot.lane.b32.xlu0 %v1021, 45
    %v1296 = vpop.permute.xlu0 %1295
    %1297 = vrot.lane.b32.xlu0 %v1022, 45
    %v1298 = vpop.permute.xlu0 %1297
    %vm1299 = vcmask 367616
    %v1300 = vsel %vm1299, %v1294, %v1296
    %v1301 = vsel %vm1299, %v1296, %v1298
    %v1304 = vsel %vm947, %v1300, 0.0
    %v1305 = vsel %vm948, %v1301, 0.0
    %1306 = vset.pattern.permute.xlu0 47
    %1307 = vperm.xlu0 %1306, %v884
    %v1308 = vpop.permute.xlu0 %1307
    %v1310 = vmul.f32 %v1304, %v1308
    %v1311 = vmul.f32 %v1305, %v1308
    %v1312 = vadd.f32 %v1215, %v1310
    %v1313 = vadd.f32 %v1216, %v1311
    %1314 = vrot.lane.b32.xlu0 %v1020, 42
    %v1315 = vpop.permute.xlu0 %1314
    %1316 = vrot.lane.b32.xlu0 %v1021, 42
    %v1317 = vpop.permute.xlu0 %1316
    %1318 = vrot.lane.b32.xlu0 %v1022, 42
    %v1319 = vpop.permute.xlu0 %1318
    %vm1320 = vcmask 343040
    %v1321 = vsel %vm1320, %v1315, %v1317
    %v1322 = vsel %vm1320, %v1317, %v1319
    %v1325 = vsel %vm972, %v1321, 0.0
    %v1326 = vsel %vm973, %v1322, 0.0
    %1327 = vset.pattern.permute.xlu0 48
    %1328 = vperm.xlu0 %1327, %v884
    %v1329 = vpop.permute.xlu0 %1328
    %v1331 = vmul.f32 %v1325, %v1329
    %v1332 = vmul.f32 %v1326, %v1329
    %1335 = vrot.lane.b32.xlu0 %v1331, 112
    %v1336 = vpop.permute.xlu0 %1335
    %1337 = vrot.lane.b32.xlu0 %v1332, 112
    %v1338 = vpop.permute.xlu0 %1337
    %v1339 = vsel %vm601, %v1336, %v1338
    %v1343 = vadd.f32 %v1246, %v1336
    %v1344 = vadd.f32 %v1247, %v1339
    %v1345 = vadd.f32 %v1248, %v1338
    %1346 = vrot.lane.b32.xlu0 %v1020, 39
    %v1347 = vpop.permute.xlu0 %1346
    %1348 = vrot.lane.b32.xlu0 %v1021, 39
    %v1349 = vpop.permute.xlu0 %1348
    %1350 = vrot.lane.b32.xlu0 %v1022, 39
    %v1351 = vpop.permute.xlu0 %1350
    %vm1352 = vcmask 318464
    %v1353 = vsel %vm1352, %v1347, %v1349
    %v1354 = vsel %vm1352, %v1349, %v1351
    %v1357 = vsel %vm997, %v1353, 0.0
    %v1358 = vsel %vm998, %v1354, 0.0
    %1359 = vset.pattern.permute.xlu0 49
    %1360 = vperm.xlu0 %1359, %v884
    %v1361 = vpop.permute.xlu0 %1360
    %v1363 = vmul.f32 %v1357, %v1361
    %v1364 = vmul.f32 %v1358, %v1361
    %v1365 = vadd.f32 %v1268, %v1363
    %v1366 = vadd.f32 %v1269, %v1364
    %1367 = vrot.lane.b32.xlu0 %v1020, 9
    %v1368 = vpop.permute.xlu0 %1367
    %1369 = vrot.lane.b32.xlu0 %v1021, 9
    %v1370 = vpop.permute.xlu0 %1369
    %1371 = vrot.lane.b32.xlu0 %v1022, 9
    %v1372 = vpop.permute.xlu0 %1371
    %vm1373 = vcmask 72704
    %v1374 = vsel %vm1373, %v1368, %v1370
    %v1375 = vsel %vm1373, %v1370, %v1372
    %v1378 = vsel %vm866, %v1374, 0.0
    %v1379 = vsel %vm867, %v1375, 0.0
    %1380 = vset.pattern.permute.xlu0 50
    %1381 = vperm.xlu0 %1380, %v884
    %v1382 = vpop.permute.xlu0 %1381
    %v1384 = vmul.f32 %v1378, %v1382
    %v1385 = vmul.f32 %v1379, %v1382
    %v1386 = vadd.f32 %v1291, %v1384
    %v1387 = vadd.f32 %v1292, %v1385
    %1388 = vrot.lane.b32.xlu0 %v1020, 6
    %v1389 = vpop.permute.xlu0 %1388
    %1390 = vrot.lane.b32.xlu0 %v1021, 6
    %v1391 = vpop.permute.xlu0 %1390
    %1392 = vrot.lane.b32.xlu0 %v1022, 6
    %v1393 = vpop.permute.xlu0 %1392
    %vm1394 = vcmask 48128
    %v1395 = vsel %vm1394, %v1389, %v1391
    %v1396 = vsel %vm1394, %v1391, %v1393
    %v1399 = vsel %vm894, %v1395, 0.0
    %v1400 = vsel %vm895, %v1396, 0.0
    %1401 = vset.pattern.permute.xlu0 51
    %1402 = vperm.xlu0 %1401, %v884
    %v1403 = vpop.permute.xlu0 %1402
    %v1405 = vmul.f32 %v1399, %v1403
    %v1406 = vmul.f32 %v1400, %v1403
    %v1407 = vadd.f32 %v1312, %v1405
    %v1408 = vadd.f32 %v1313, %v1406
    %1409 = vrot.lane.b32.xlu0 %v1020, 3
    %v1410 = vpop.permute.xlu0 %1409
    %1411 = vrot.lane.b32.xlu0 %v1021, 3
    %v1412 = vpop.permute.xlu0 %1411
    %1413 = vrot.lane.b32.xlu0 %v1022, 3
    %v1414 = vpop.permute.xlu0 %1413
    %vm1415 = vcmask 23552
    %v1416 = vsel %vm1415, %v1410, %v1412
    %v1417 = vsel %vm1415, %v1412, %v1414
    %v1420 = vsel %vm917, %v1416, 0.0
    %v1421 = vsel %vm918, %v1417, 0.0
    %1422 = vset.pattern.permute.xlu0 52
    %1423 = vperm.xlu0 %1422, %v884
    %v1424 = vpop.permute.xlu0 %1423
    %v1426 = vmul.f32 %v1420, %v1424
    %v1427 = vmul.f32 %v1421, %v1424
    %1430 = vrot.lane.b32.xlu0 %v1426, 112
    %v1431 = vpop.permute.xlu0 %1430
    %1432 = vrot.lane.b32.xlu0 %v1427, 112
    %v1433 = vpop.permute.xlu0 %1432
    %v1434 = vsel %vm601, %v1431, %v1433
    %v1438 = vadd.f32 %v1343, %v1431
    %v1439 = vadd.f32 %v1344, %v1434
    %v1440 = vadd.f32 %v1345, %v1433
    %1441 = vset.pattern.permute.xlu0 53
    %1442 = vperm.xlu0 %1441, %v884
    %v1443 = vpop.permute.xlu0 %1442
    %v1445 = vmul.f32 %v1021, %v1443
    %v1446 = vmul.f32 %v1022, %v1443
    %v1447 = vadd.f32 %v1365, %v1445
    %v1448 = vadd.f32 %v1366, %v1446
    %v1449 = vld [vmem:[#allocation3 + $0x10] sm:$0xff]
    %v1450 = vld [vmem:[#allocation3 + $0x18] sm:$0xff]
    %v1451 = vld [vmem:[#allocation3 + $0x20] sm:$0xff]
    %1455 = vrot.lane.b32.xlu0 %v1449, 125
    %v1456 = vpop.permute.xlu0 %1455
    %1457 = vrot.lane.b32.xlu0 %v1450, 125
    %v1458 = vpop.permute.xlu0 %1457
    %1459 = vrot.lane.b32.xlu0 %v1451, 125
    %v1460 = vpop.permute.xlu0 %1459
    %vm1461 = vcmask 1022976
    %v1462 = vsel %vm1461, %v1456, %v1458
    %v1463 = vsel %vm1461, %v1458, %v1460
    %v1466 = vsel %vm947, %v1462, 0.0
    %v1467 = vsel %vm948, %v1463, 0.0
    %1468 = vset.pattern.permute.xlu0 54
    %1469 = vperm.xlu0 %1468, %v884
    %v1470 = vpop.permute.xlu0 %1469
    %v1472 = vmul.f32 %v1466, %v1470
    %v1473 = vmul.f32 %v1467, %v1470
    %v1474 = vadd.f32 %v1386, %v1472
    %v1475 = vadd.f32 %v1387, %v1473
    %1476 = vrot.lane.b32.xlu0 %v1449, 122
    %v1477 = vpop.permute.xlu0 %1476
    %1478 = vrot.lane.b32.xlu0 %v1450, 122
    %v1479 = vpop.permute.xlu0 %1478
    %1480 = vrot.lane.b32.xlu0 %v1451, 122
    %v1481 = vpop.permute.xlu0 %1480
    %vm1482 = vcmask 998400
    %v1483 = vsel %vm1482, %v1477, %v1479
    %v1484 = vsel %vm1482, %v1479, %v1481
    %v1487 = vsel %vm972, %v1483, 0.0
    %v1488 = vsel %vm973, %v1484, 0.0
    %1489 = vset.pattern.permute.xlu0 55
    %1490 = vperm.xlu0 %1489, %v884
    %v1491 = vpop.permute.xlu0 %1490
    %v1493 = vmul.f32 %v1487, %v1491
    %v1494 = vmul.f32 %v1488, %v1491
    %v1495 = vadd.f32 %v1407, %v1493
    %v1496 = vadd.f32 %v1408, %v1494
    %1497 = vrot.lane.b32.xlu0 %v1449, 119
    %v1498 = vpop.permute.xlu0 %1497
    %1499 = vrot.lane.b32.xlu0 %v1450, 119
    %v1500 = vpop.permute.xlu0 %1499
    %1501 = vrot.lane.b32.xlu0 %v1451, 119
    %v1502 = vpop.permute.xlu0 %1501
    %vm1503 = vcmask 973824
    %v1504 = vsel %vm1503, %v1498, %v1500
    %v1505 = vsel %vm1503, %v1500, %v1502
    %v1508 = vsel %vm997, %v1504, 0.0
    %v1509 = vsel %vm998, %v1505, 0.0
    %1510 = vset.pattern.permute.xlu0 56
    %1511 = vperm.xlu0 %1510, %v884
    %v1512 = vpop.permute.xlu0 %1511
    %v1514 = vmul.f32 %v1508, %v1512
    %v1515 = vmul.f32 %v1509, %v1512
    %1518 = vrot.lane.b32.xlu0 %v1514, 112
    %v1519 = vpop.permute.xlu0 %1518
    %1520 = vrot.lane.b32.xlu0 %v1515, 112
    %v1521 = vpop.permute.xlu0 %1520
    %v1522 = vsel %vm601, %v1519, %v1521
    %v1526 = vadd.f32 %v1438, %v1519
    %v1527 = vadd.f32 %v1439, %v1522
    %v1528 = vadd.f32 %v1440, %v1521
    %1529 = vrot.lane.b32.xlu0 %v1449, 89
    %v1530 = vpop.permute.xlu0 %1529
    %1531 = vrot.lane.b32.xlu0 %v1450, 89
    %v1532 = vpop.permute.xlu0 %1531
    %1533 = vrot.lane.b32.xlu0 %v1451, 89
    %v1534 = vpop.permute.xlu0 %1533
    %vm1535 = vcmask 728064
    %v1536 = vsel %vm1535, %v1530, %v1532
    %v1537 = vsel %vm1535, %v1532, %v1534
    %v1540 = vsel %vm866, %v1536, 0.0
    %v1541 = vsel %vm867, %v1537, 0.0
    %1542 = vset.pattern.permute.xlu0 57
    %1543 = vperm.xlu0 %1542, %v884
    %v1544 = vpop.permute.xlu0 %1543
    %v1546 = vmul.f32 %v1540, %v1544
    %v1547 = vmul.f32 %v1541, %v1544
    %v1548 = vadd.f32 %v1447, %v1546
    %v1549 = vadd.f32 %v1448, %v1547
    %1550 = vrot.lane.b32.xlu0 %v1449, 86
    %v1551 = vpop.permute.xlu0 %1550
    %1552 = vrot.lane.b32.xlu0 %v1450, 86
    %v1553 = vpop.permute.xlu0 %1552
    %1554 = vrot.lane.b32.xlu0 %v1451, 86
    %v1555 = vpop.permute.xlu0 %1554
    %vm1556 = vcmask 703488
    %v1557 = vsel %vm1556, %v1551, %v1553
    %v1558 = vsel %vm1556, %v1553, %v1555
    %v1561 = vsel %vm894, %v1557, 0.0
    %v1562 = vsel %vm895, %v1558, 0.0
    %1563 = vset.pattern.permute.xlu0 58
    %1564 = vperm.xlu0 %1563, %v884
    %v1565 = vpop.permute.xlu0 %1564
    %v1567 = vmul.f32 %v1561, %v1565
    %v1568 = vmul.f32 %v1562, %v1565
    %v1569 = vadd.f32 %v1474, %v1567
    %v1570 = vadd.f32 %v1475, %v1568
    %1571 = vrot.lane.b32.xlu0 %v1449, 83
    %v1572 = vpop.permute.xlu0 %1571
    %1573 = vrot.lane.b32.xlu0 %v1450, 83
    %v1574 = vpop.permute.xlu0 %1573
    %1575 = vrot.lane.b32.xlu0 %v1451, 83
    %v1576 = vpop.permute.xlu0 %1575
    %vm1577 = vcmask 678912
    %v1578 = vsel %vm1577, %v1572, %v1574
    %v1579 = vsel %vm1577, %v1574, %v1576
    %v1582 = vsel %vm917, %v1578, 0.0
    %v1583 = vsel %vm918, %v1579, 0.0
    %1584 = vset.pattern.permute.xlu0 59
    %1585 = vperm.xlu0 %1584, %v884
    %v1586 = vpop.permute.xlu0 %1585
    %v1588 = vmul.f32 %v1582, %v1586
    %v1589 = vmul.f32 %v1583, %v1586
    %v1590 = vadd.f32 %v1495, %v1588
    %v1591 = vadd.f32 %v1496, %v1589
    %1592 = vset.pattern.permute.xlu0 60
    %1593 = vperm.xlu0 %1592, %v884
    %v1594 = vpop.permute.xlu0 %1593
    %v1596 = vmul.f32 %v1449, %v1594
    %v1597 = vmul.f32 %v1450, %v1594
    %v1598 = vmul.f32 %v1451, %v1594
    %1602 = vrot.lane.b32.xlu0 %v1596, 64
    %v1603 = vpop.permute.xlu0 %1602
    %1604 = vrot.lane.b32.xlu0 %v1597, 64
    %v1605 = vpop.permute.xlu0 %1604
    %1606 = vrot.lane.b32.xlu0 %v1598, 64
    %v1607 = vpop.permute.xlu0 %1606
    %v1608 = vsel %vm719, %v1603, %v1605
    %v1609 = vsel %vm719, %v1605, %v1607
    %v1613 = vadd.f32 %v1526, %v1603
    %v1614 = vadd.f32 %v1527, %v1608
    %v1615 = vadd.f32 %v1528, %v1609
    %1616 = vrot.lane.b32.xlu0 %v1449, 77
    %v1617 = vpop.permute.xlu0 %1616
    %1618 = vrot.lane.b32.xlu0 %v1450, 77
    %v1619 = vpop.permute.xlu0 %1618
    %1620 = vrot.lane.b32.xlu0 %v1451, 77
    %v1621 = vpop.permute.xlu0 %1620
    %vm1622 = vcmask 629760
    %v1623 = vsel %vm1622, %v1617, %v1619
    %v1624 = vsel %vm1622, %v1619, %v1621
    %v1627 = vsel %vm947, %v1623, 0.0
    %v1628 = vsel %vm948, %v1624, 0.0
    %1629 = vset.pattern.permute.xlu0 61
    %1630 = vperm.xlu0 %1629, %v884
    %v1631 = vpop.permute.xlu0 %1630
    %v1633 = vmul.f32 %v1627, %v1631
    %v1634 = vmul.f32 %v1628, %v1631
    %v1635 = vadd.f32 %v1548, %v1633
    %v1636 = vadd.f32 %v1549, %v1634
    %1637 = vrot.lane.b32.xlu0 %v1449, 74
    %v1638 = vpop.permute.xlu0 %1637
    %1639 = vrot.lane.b32.xlu0 %v1450, 74
    %v1640 = vpop.permute.xlu0 %1639
    %1641 = vrot.lane.b32.xlu0 %v1451, 74
    %v1642 = vpop.permute.xlu0 %1641
    %vm1643 = vcmask 605184
    %v1644 = vsel %vm1643, %v1638, %v1640
    %v1645 = vsel %vm1643, %v1640, %v1642
    %v1648 = vsel %vm972, %v1644, 0.0
    %v1649 = vsel %vm973, %v1645, 0.0
    %1650 = vset.pattern.permute.xlu0 62
    %1651 = vperm.xlu0 %1650, %v884
    %v1652 = vpop.permute.xlu0 %1651
    %v1654 = vmul.f32 %v1648, %v1652
    %v1655 = vmul.f32 %v1649, %v1652
    %v1656 = vadd.f32 %v1569, %v1654
    %v1657 = vadd.f32 %v1570, %v1655
    %1658 = vrot.lane.b32.xlu0 %v1449, 71
    %v1659 = vpop.permute.xlu0 %1658
    %1660 = vrot.lane.b32.xlu0 %v1450, 71
    %v1661 = vpop.permute.xlu0 %1660
    %1662 = vrot.lane.b32.xlu0 %v1451, 71
    %v1663 = vpop.permute.xlu0 %1662
    %vm1664 = vcmask 580608
    %v1665 = vsel %vm1664, %v1659, %v1661
    %v1666 = vsel %vm1664, %v1661, %v1663
    %v1669 = vsel %vm997, %v1665, 0.0
    %v1670 = vsel %vm998, %v1666, 0.0
    %1671 = vset.pattern.permute.xlu0 63
    %1672 = vperm.xlu0 %1671, %v884
    %v1673 = vpop.permute.xlu0 %1672
    %v1675 = vmul.f32 %v1669, %v1673
    %v1676 = vmul.f32 %v1670, %v1673
    %v1677 = vadd.f32 %v1590, %v1675
    %v1678 = vadd.f32 %v1591, %v1676
    %1679 = vrot.lane.b32.xlu0 %v1449, 41
    %v1680 = vpop.permute.xlu0 %1679
    %1681 = vrot.lane.b32.xlu0 %v1450, 41
    %v1682 = vpop.permute.xlu0 %1681
    %1683 = vrot.lane.b32.xlu0 %v1451, 41
    %v1684 = vpop.permute.xlu0 %1683
    %vm1685 = vcmask 334848
    %v1686 = vsel %vm1685, %v1680, %v1682
    %v1687 = vsel %vm1685, %v1682, %v1684
    %v1690 = vsel %vm866, %v1686, 0.0
    %v1691 = vsel %vm867, %v1687, 0.0
    %1692 = vset.pattern.permute.xlu0 64
    %1693 = vperm.xlu0 %1692, %v884
    %v1694 = vpop.permute.xlu0 %1693
    %v1696 = vmul.f32 %v1690, %v1694
    %v1697 = vmul.f32 %v1691, %v1694
    %1700 = vrot.lane.b32.xlu0 %v1696, 112
    %v1701 = vpop.permute.xlu0 %1700
    %1702 = vrot.lane.b32.xlu0 %v1697, 112
    %v1703 = vpop.permute.xlu0 %1702
    %v1704 = vsel %vm601, %v1701, %v1703
    %v1708 = vadd.f32 %v1613, %v1701
    %v1709 = vadd.f32 %v1614, %v1704
    %v1710 = vadd.f32 %v1615, %v1703
    %1711 = vrot.lane.b32.xlu0 %v1449, 38
    %v1712 = vpop.permute.xlu0 %1711
    %1713 = vrot.lane.b32.xlu0 %v1450, 38
    %v1714 = vpop.permute.xlu0 %1713
    %1715 = vrot.lane.b32.xlu0 %v1451, 38
    %v1716 = vpop.permute.xlu0 %1715
    %vm1717 = vcmask 310272
    %v1718 = vsel %vm1717, %v1712, %v1714
    %v1719 = vsel %vm1717, %v1714, %v1716
    %v1722 = vsel %vm894, %v1718, 0.0
    %v1723 = vsel %vm895, %v1719, 0.0
    %1724 = vset.pattern.permute.xlu0 65
    %1725 = vperm.xlu0 %1724, %v884
    %v1726 = vpop.permute.xlu0 %1725
    %v1728 = vmul.f32 %v1722, %v1726
    %v1729 = vmul.f32 %v1723, %v1726
    %v1730 = vadd.f32 %v1635, %v1728
    %v1731 = vadd.f32 %v1636, %v1729
    %1732 = vrot.lane.b32.xlu0 %v1449, 35
    %v1733 = vpop.permute.xlu0 %1732
    %1734 = vrot.lane.b32.xlu0 %v1450, 35
    %v1735 = vpop.permute.xlu0 %1734
    %1736 = vrot.lane.b32.xlu0 %v1451, 35
    %v1737 = vpop.permute.xlu0 %1736
    %vm1738 = vcmask 285696
    %v1739 = vsel %vm1738, %v1733, %v1735
    %v1740 = vsel %vm1738, %v1735, %v1737
    %v1743 = vsel %vm917, %v1739, 0.0
    %v1744 = vsel %vm918, %v1740, 0.0
    %1745 = vset.pattern.permute.xlu0 66
    %1746 = vperm.xlu0 %1745, %v884
    %v1747 = vpop.permute.xlu0 %1746
    %v1749 = vmul.f32 %v1743, %v1747
    %v1750 = vmul.f32 %v1744, %v1747
    %v1751 = vadd.f32 %v1656, %v1749
    %v1752 = vadd.f32 %v1657, %v1750
    %1753 = vset.pattern.permute.xlu0 67
    %1754 = vperm.xlu0 %1753, %v884
    %v1755 = vpop.permute.xlu0 %1754
    %v1757 = vmul.f32 %v1449, %v1755
    %v1758 = vmul.f32 %v1450, %v1755
    %v1759 = vmul.f32 %v1451, %v1755
    %1763 = vrot.lane.b32.xlu0 %v1757, 32
    %v1764 = vpop.permute.xlu0 %1763
    %1765 = vrot.lane.b32.xlu0 %v1758, 32
    %v1766 = vpop.permute.xlu0 %1765
    %1767 = vrot.lane.b32.xlu0 %v1759, 32
    %v1768 = vpop.permute.xlu0 %1767
    %v1769 = vsel %vm794, %v1764, %v1766
    %v1770 = vsel %vm794, %v1766, %v1768
    %v1773 = vadd.f32 %v1677, %v1769
    %v1774 = vadd.f32 %v1678, %v1770
    %1775 = vrot.lane.b32.xlu0 %v1449, 29
    %v1776 = vpop.permute.xlu0 %1775
    %1777 = vrot.lane.b32.xlu0 %v1450, 29
    %v1778 = vpop.permute.xlu0 %1777
    %1779 = vrot.lane.b32.xlu0 %v1451, 29
    %v1780 = vpop.permute.xlu0 %1779
    %vm1781 = vcmask 236544
    %v1782 = vsel %vm1781, %v1776, %v1778
    %v1783 = vsel %vm1781, %v1778, %v1780
    %v1786 = vsel %vm947, %v1782, 0.0
    %v1787 = vsel %vm948, %v1783, 0.0
    %1788 = vset.pattern.permute.xlu0 68
    %1789 = vperm.xlu0 %1788, %v884
    %v1790 = vpop.permute.xlu0 %1789
    %v1792 = vmul.f32 %v1786, %v1790
    %v1793 = vmul.f32 %v1787, %v1790
    %1796 = vrot.lane.b32.xlu0 %v1792, 112
    %v1797 = vpop.permute.xlu0 %1796
    %1798 = vrot.lane.b32.xlu0 %v1793, 112
    %v1799 = vpop.permute.xlu0 %1798
    %v1800 = vsel %vm601, %v1797, %v1799
    %v1804 = vadd.f32 %v1708, %v1797
    %v1805 = vadd.f32 %v1709, %v1800
    %v1806 = vadd.f32 %v1710, %v1799
    %1807 = vrot.lane.b32.xlu0 %v1449, 26
    %v1808 = vpop.permute.xlu0 %1807
    %1809 = vrot.lane.b32.xlu0 %v1450, 26
    %v1810 = vpop.permute.xlu0 %1809
    %1811 = vrot.lane.b32.xlu0 %v1451, 26
    %v1812 = vpop.permute.xlu0 %1811
    %vm1813 = vcmask 211968
    %v1814 = vsel %vm1813, %v1808, %v1810
    %v1815 = vsel %vm1813, %v1810, %v1812
    %v1818 = vsel %vm972, %v1814, 0.0
    %v1819 = vsel %vm973, %v1815, 0.0
    %1820 = vset.pattern.permute.xlu0 69
    %1821 = vperm.xlu0 %1820, %v884
    %v1822 = vpop.permute.xlu0 %1821
    %v1824 = vmul.f32 %v1818, %v1822
    %v1825 = vmul.f32 %v1819, %v1822
    %v1826 = vadd.f32 %v1730, %v1824
    %v1827 = vadd.f32 %v1731, %v1825
    %1828 = vrot.lane.b32.xlu0 %v1449, 23
    %v1829 = vpop.permute.xlu0 %1828
    %1830 = vrot.lane.b32.xlu0 %v1450, 23
    %v1831 = vpop.permute.xlu0 %1830
    %1832 = vrot.lane.b32.xlu0 %v1451, 23
    %v1833 = vpop.permute.xlu0 %1832
    %vm1834 = vcmask 187392
    %v1835 = vsel %vm1834, %v1829, %v1831
    %v1836 = vsel %vm1834, %v1831, %v1833
    %v1839 = vsel %vm997, %v1835, 0.0
    %v1840 = vsel %vm998, %v1836, 0.0
    %1841 = vset.pattern.permute.xlu0 70
    %1842 = vperm.xlu0 %1841, %v884
    %v1843 = vpop.permute.xlu0 %1842
    %v1845 = vmul.f32 %v1839, %v1843
    %v1846 = vmul.f32 %v1840, %v1843
    %v1847 = vadd.f32 %v1751, %v1845
    %v1848 = vadd.f32 %v1752, %v1846
    %v1849 = vld [vmem:[#allocation3 + $0x18] sm:$0xff]
    %v1850 = vld [vmem:[#allocation3 + $0x20] sm:$0xff]
    %v1851 = vld [vmem:[#allocation3 + $0x28] sm:$0xff]
    %1855 = vrot.lane.b32.xlu0 %v1849, 121
    %v1856 = vpop.permute.xlu0 %1855
    %1857 = vrot.lane.b32.xlu0 %v1850, 121
    %v1858 = vpop.permute.xlu0 %1857
    %1859 = vrot.lane.b32.xlu0 %v1851, 121
    %v1860 = vpop.permute.xlu0 %1859
    %vm1861 = vcmask 990208
    %v1862 = vsel %vm1861, %v1856, %v1858
    %v1863 = vsel %vm1861, %v1858, %v1860
    %v1866 = vsel %vm866, %v1862, 0.0
    %v1867 = vsel %vm867, %v1863, 0.0
    %1868 = vset.pattern.permute.xlu0 71
    %1869 = vperm.xlu0 %1868, %v884
    %v1870 = vpop.permute.xlu0 %1869
    %v1872 = vmul.f32 %v1866, %v1870
    %v1873 = vmul.f32 %v1867, %v1870
    %v1874 = vadd.f32 %v1773, %v1872
    %v1875 = vadd.f32 %v1774, %v1873
    %1876 = vrot.lane.b32.xlu0 %v1849, 118
    %v1877 = vpop.permute.xlu0 %1876
    %1878 = vrot.lane.b32.xlu0 %v1850, 118
    %v1879 = vpop.permute.xlu0 %1878
    %1880 = vrot.lane.b32.xlu0 %v1851, 118
    %v1881 = vpop.permute.xlu0 %1880
    %vm1882 = vcmask 965632
    %v1883 = vsel %vm1882, %v1877, %v1879
    %v1884 = vsel %vm1882, %v1879, %v1881
    %v1887 = vsel %vm894, %v1883, 0.0
    %v1888 = vsel %vm895, %v1884, 0.0
    %1889 = vset.pattern.permute.xlu0 72
    %1890 = vperm.xlu0 %1889, %v884
    %v1891 = vpop.permute.xlu0 %1890
    %v1893 = vmul.f32 %v1887, %v1891
    %v1894 = vmul.f32 %v1888, %v1891
    %1897 = vrot.lane.b32.xlu0 %v1893, 112
    %v1898 = vpop.permute.xlu0 %1897
    %1899 = vrot.lane.b32.xlu0 %v1894, 112
    %v1900 = vpop.permute.xlu0 %1899
    %v1901 = vsel %vm601, %v1898, %v1900
    %v1905 = vadd.f32 %v1804, %v1898
    %v1906 = vadd.f32 %v1805, %v1901
    %v1907 = vadd.f32 %v1806, %v1900
    %1908 = vrot.lane.b32.xlu0 %v1849, 115
    %v1909 = vpop.permute.xlu0 %1908
    %1910 = vrot.lane.b32.xlu0 %v1850, 115
    %v1911 = vpop.permute.xlu0 %1910
    %1912 = vrot.lane.b32.xlu0 %v1851, 115
    %v1913 = vpop.permute.xlu0 %1912
    %vm1914 = vcmask 941056
    %v1915 = vsel %vm1914, %v1909, %v1911
    %v1916 = vsel %vm1914, %v1911, %v1913
    %v1919 = vsel %vm917, %v1915, 0.0
    %v1920 = vsel %vm918, %v1916, 0.0
    %1921 = vset.pattern.permute.xlu0 73
    %1922 = vperm.xlu0 %1921, %v884
    %v1923 = vpop.permute.xlu0 %1922
    %v1925 = vmul.f32 %v1919, %v1923
    %v1926 = vmul.f32 %v1920, %v1923
    %v1927 = vadd.f32 %v1826, %v1925
    %v1928 = vadd.f32 %v1827, %v1926
    %1929 = vset.pattern.permute.xlu0 74
    %1930 = vperm.xlu0 %1929, %v884
    %v1931 = vpop.permute.xlu0 %1930
    %v1933 = vmul.f32 %v1849, %v1931
    %v1934 = vmul.f32 %v1850, %v1931
    %v1935 = vmul.f32 %v1851, %v1931
    %1939 = vrot.lane.b32.xlu0 %v1933, 112
    %v1940 = vpop.permute.xlu0 %1939
    %1941 = vrot.lane.b32.xlu0 %v1934, 112
    %v1942 = vpop.permute.xlu0 %1941
    %1943 = vrot.lane.b32.xlu0 %v1935, 112
    %v1944 = vpop.permute.xlu0 %1943
    %v1945 = vsel %vm601, %v1940, %v1942
    %v1946 = vsel %vm601, %v1942, %v1944
    %v1949 = vadd.f32 %v1847, %v1945
    %v1950 = vadd.f32 %v1848, %v1946
    %1951 = vrot.lane.b32.xlu0 %v1849, 109
    %v1952 = vpop.permute.xlu0 %1951
    %1953 = vrot.lane.b32.xlu0 %v1850, 109
    %v1954 = vpop.permute.xlu0 %1953
    %1955 = vrot.lane.b32.xlu0 %v1851, 109
    %v1956 = vpop.permute.xlu0 %1955
    %vm1957 = vcmask 891904
    %v1958 = vsel %vm1957, %v1952, %v1954
    %v1959 = vsel %vm1957, %v1954, %v1956
    %v1962 = vsel %vm947, %v1958, 0.0
    %v1963 = vsel %vm948, %v1959, 0.0
    %1964 = vset.pattern.permute.xlu0 75
    %1965 = vperm.xlu0 %1964, %v884
    %v1966 = vpop.permute.xlu0 %1965
    %v1968 = vmul.f32 %v1962, %v1966
    %v1969 = vmul.f32 %v1963, %v1966
    %v1970 = vadd.f32 %v1874, %v1968
    %v1971 = vadd.f32 %v1875, %v1969
    %1972 = vrot.lane.b32.xlu0 %v1849, 106
    %v1973 = vpop.permute.xlu0 %1972
    %1974 = vrot.lane.b32.xlu0 %v1850, 106
    %v1975 = vpop.permute.xlu0 %1974
    %1976 = vrot.lane.b32.xlu0 %v1851, 106
    %v1977 = vpop.permute.xlu0 %1976
    %vm1978 = vcmask 867328
    %v1979 = vsel %vm1978, %v1973, %v1975
    %v1980 = vsel %vm1978, %v1975, %v1977
    %v1983 = vsel %vm972, %v1979, 0.0
    %v1984 = vsel %vm973, %v1980, 0.0
    %1985 = vset.pattern.permute.xlu0 76
    %1986 = vperm.xlu0 %1985, %v884
    %v1987 = vpop.permute.xlu0 %1986
    %v1989 = vmul.f32 %v1983, %v1987
    %v1990 = vmul.f32 %v1984, %v1987
    %1993 = vrot.lane.b32.xlu0 %v1989, 112
    %v1994 = vpop.permute.xlu0 %1993
    %1995 = vrot.lane.b32.xlu0 %v1990, 112
    %v1996 = vpop.permute.xlu0 %1995
    %v1997 = vsel %vm601, %v1994, %v1996
    %v2001 = vadd.f32 %v1905, %v1994
    %v2002 = vadd.f32 %v1906, %v1997
    %v2003 = vadd.f32 %v1907, %v1996
    %2004 = vrot.lane.b32.xlu0 %v1849, 103
    %v2005 = vpop.permute.xlu0 %2004
    %2006 = vrot.lane.b32.xlu0 %v1850, 103
    %v2007 = vpop.permute.xlu0 %2006
    %2008 = vrot.lane.b32.xlu0 %v1851, 103
    %v2009 = vpop.permute.xlu0 %2008
    %vm2010 = vcmask 842752
    %v2011 = vsel %vm2010, %v2005, %v2007
    %v2012 = vsel %vm2010, %v2007, %v2009
    %v2015 = vsel %vm997, %v2011, 0.0
    %v2016 = vsel %vm998, %v2012, 0.0
    %2017 = vset.pattern.permute.xlu0 77
    %2018 = vperm.xlu0 %2017, %v884
    %v2019 = vpop.permute.xlu0 %2018
    %v2021 = vmul.f32 %v2015, %v2019
    %v2022 = vmul.f32 %v2016, %v2019
    %v2023 = vadd.f32 %v1927, %v2021
    %v2024 = vadd.f32 %v1928, %v2022
    %v2025 = vadd.f32 %v2023, %v1949
    %v2026 = vadd.f32 %v2024, %v1950
    %2030 = vrot.lane.b32.xlu0 %v2001, 16
    %v2031 = vpop.permute.xlu0 %2030
    %2032 = vrot.lane.b32.xlu0 %v2002, 16
    %v2033 = vpop.permute.xlu0 %2032
    %2034 = vrot.lane.b32.xlu0 %v2003, 16
    %v2035 = vpop.permute.xlu0 %2034
    %v2036 = vsel %vm374, %v2031, %v2033
    %v2037 = vsel %vm374, %v2033, %v2035
    %v2040 = vadd.f32 %v1970, %v2036
    %v2041 = vadd.f32 %v1971, %v2037
    %v2042 = vadd.f32 %v2025, %v2040
    %v2043 = vadd.f32 %v2026, %v2041
    %2044 = vset.pattern.permute.xlu0 78
    %2045 = vperm.xlu0 %2044, %v884
    %v2046 = vpop.permute.xlu0 %2045
    %v2048 = vadd.f32 %v2042, %v2046
    %v2049 = vadd.f32 %v2043, %v2046
    %v2050 = vld [vmem:[%s4] sm:$0xff]
    %v2051 = vld [vmem:[%s4 + $0x8] sm:$0xff]
    %v2053 = vsel %vm97, %v2050, 0
    %v2056 = vsel %vm97, %v2051, 0
    %2058 = vmatpush.msra.mxu0 0.0
    %2059 = vmatpush.msra.mxu0 0.0
    %2060 = vmatpush.msra.mxu0 0.0
    %2061 = vmatpush.msra.mxu0 0.0
    %2062 = vmatpush.msra.mxu0 0.0
    %2063 = vmatpush.msra.mxu0 0.0
    %2064 = vmatpush.msra.mxu0 0.0
    %2065 = vmatpush.msra.mxu0 0.0
    %2066 = vmatpush.msra.mxu0 0.0
    %2067 = vmatpush.msra.mxu0 0.0
    %2068 = vmatpush.msra.mxu0 0.0
    %2069 = vmatpush.msra.mxu0 0.0
    %2070 = vmatpush.msra.mxu0 0.0
    %2071 = vmatpush.msra.mxu0 0.0
    %2072 = vmatpush.msra.mxu0 0.0
    %2073 = vmatpush.msra.mxu0 %v2048
    %2074 = vmatmul.f32.gmra.mxu0 %v2053
    %v2075 = vpop.f32.mrf.mxu0
    %v2076 = vadd.f32 0.0, %v2075
    %2077 = vmatmul.f32.gmra.mxu0 %v2056
    %v2078 = vpop.f32.mrf.mxu0
    %v2079 = vadd.f32 0.0, %v2078
    %2080 = vdwg.mxu0
    %2081 = vmatpush.msra.mxu0 0.0
    %2082 = vmatpush.msra.mxu0 0.0
    %2083 = vmatpush.msra.mxu0 0.0
    %2084 = vmatpush.msra.mxu0 0.0
    %2085 = vmatpush.msra.mxu0 0.0
    %2086 = vmatpush.msra.mxu0 0.0
    %2087 = vmatpush.msra.mxu0 0.0
    %2088 = vmatpush.msra.mxu0 0.0
    %2089 = vmatpush.msra.mxu0 0.0
    %2090 = vmatpush.msra.mxu0 0.0
    %2091 = vmatpush.msra.mxu0 0.0
    %2092 = vmatpush.msra.mxu0 0.0
    %2093 = vmatpush.msra.mxu0 0.0
    %2094 = vmatpush.msra.mxu0 0.0
    %2095 = vmatpush.msra.mxu0 0.0
    %2096 = vmatpush.msra.mxu0 %v2049
    %2097 = vmatmul.f32.gmra.mxu0 %v2053
    %v2098 = vpop.f32.mrf.mxu0
    %v2099 = vadd.f32 0.0, %v2098
    %2100 = vmatmul.f32.gmra.mxu0 %v2056
    %v2101 = vpop.f32.mrf.mxu0
    %v2102 = vadd.f32 0.0, %v2101
    %2103 = vdwg.mxu0
    %2104 = vset.pattern.permute.xlu0 79
    %2105 = vperm.xlu0 %2104, %v884
    %v2106 = vpop.permute.xlu0 %2105
    %v2108 = vadd.f32 %v2076, %v2106
    %v2109 = vadd.f32 %v2099, %v2106
    %2110 = vset.pattern.permute.xlu0 80
    %2111 = vperm.xlu0 %2110, %v884
    %v2112 = vpop.permute.xlu0 %2111
    %v2114 = vadd.f32 %v2079, %v2112
    %v2115 = vadd.f32 %v2102, %v2112
    %v2116 = vxor.u32 %v2114, 2147483648
    %v2117 = vxor.u32 %v2115, 2147483648
    %v2118 = vmul.f32 %v2116, 1.442695
    %v2119 = vpow.pop %v2118
    %v2120 = vmul.f32 %v2117, 1.442695
    %v2121 = vpow.pop %v2120
    %v2122 = vadd.f32 %v2119, 1.0
    %v2123 = vadd.f32 %v2121, 1.0
    %v2124 = vrcp.pop %v2122
    %v2125 = vmul.f32 %v2122, %v2124
    %v2126 = vsub.f32 1.0, %v2125
    %v2127 = vmul.f32 %v2124, %v2126
    %v2128 = vadd.f32 %v2124, %v2127
    %vm2129 = vweird.f32 %v2122
    %vm2130 = vweird.f32 %v2124
    %vm2131 = vmor %vm2129, %vm2130
    %v2132 = vsel %vm2131, %v2124, %v2128
    %v2133 = vand.u32 2147483647, %v2122
    %vm2134 = vcmp.eq.f32.partialorder %v2133, 8.507059e+37
    %v2135 = vand.u32 %v2122, 2147483648
    %v2136 = vor.u32 1.1754944e-38, %v2135
    %v2137 = vsel %vm2134, %v2136, %v2132
    %v2138 = vmul.f32 1.0, %v2137
    %v2139 = vrcp.pop %v2123
    %v2140 = vmul.f32 %v2123, %v2139
    %v2141 = vsub.f32 1.0, %v2140
    %v2142 = vmul.f32 %v2139, %v2141
    %v2143 = vadd.f32 %v2139, %v2142
    %vm2144 = vweird.f32 %v2123
    %vm2145 = vweird.f32 %v2139
    %vm2146 = vmor %vm2144, %vm2145
    %v2147 = vsel %vm2146, %v2139, %v2143
    %v2148 = vand.u32 2147483647, %v2123
    %vm2149 = vcmp.eq.f32.partialorder %v2148, 8.507059e+37
    %v2150 = vand.u32 %v2123, 2147483648
    %v2151 = vor.u32 1.1754944e-38, %v2150
    %v2152 = vsel %vm2149, %v2151, %v2147
    %v2153 = vmul.f32 1.0, %v2152
    %v2154 = vmul.f32 %v2138, %v2108
    %v2155 = vmul.f32 %v2153, %v2109
    %v2156 = vld [vmem:[#allocation8] sm:$0xff]
    %2157 = vset.pattern.permute.xlu0 81
    %2158 = vperm.xlu0 %2157, %v884
    %v2159 = vpop.permute.xlu0 %2158
    %v2162 = vsel %vm97, %v2156, 0
    %2164 = vmatpush.msra.mxu0 0.0
    %2165 = vmatpush.msra.mxu0 0.0
    %2166 = vmatpush.msra.mxu0 0.0
    %2167 = vmatpush.msra.mxu0 0.0
    %2168 = vmatpush.msra.mxu0 0.0
    %2169 = vmatpush.msra.mxu0 0.0
    %2170 = vmatpush.msra.mxu0 0.0
    %2171 = vmatpush.msra.mxu0 0.0
    %2172 = vmatpush.msra.mxu0 0.0
    %2173 = vmatpush.msra.mxu0 0.0
    %2174 = vmatpush.msra.mxu0 0.0
    %2175 = vmatpush.msra.mxu0 0.0
    %2176 = vmatpush.msra.mxu0 0.0
    %2177 = vmatpush.msra.mxu0 0.0
    %2178 = vmatpush.msra.mxu0 0.0
    %2179 = vmatpush.msra.mxu0 %v2154
    %2180 = vmatmul.f32.gmra.mxu0 %v2162
    %v2181 = vpop.f32.mrf.mxu0
    %v2182 = vadd.f32 %v2159, %v2181
    %2183 = vdwg.mxu0
    %2184 = vmatpush.msra.mxu0 0.0
    %2185 = vmatpush.msra.mxu0 0.0
    %2186 = vmatpush.msra.mxu0 0.0
    %2187 = vmatpush.msra.mxu0 0.0
    %2188 = vmatpush.msra.mxu0 0.0
    %2189 = vmatpush.msra.mxu0 0.0
    %2190 = vmatpush.msra.mxu0 0.0
    %2191 = vmatpush.msra.mxu0 0.0
    %2192 = vmatpush.msra.mxu0 0.0
    %2193 = vmatpush.msra.mxu0 0.0
    %2194 = vmatpush.msra.mxu0 0.0
    %2195 = vmatpush.msra.mxu0 0.0
    %2196 = vmatpush.msra.mxu0 0.0
    %2197 = vmatpush.msra.mxu0 0.0
    %2198 = vmatpush.msra.mxu0 0.0
    %2199 = vmatpush.msra.mxu0 %v2155
    %2200 = vmatmul.f32.gmra.mxu0 %v2162
    %v2201 = vpop.f32.mrf.mxu0
    %v2202 = vadd.f32 %v2159, %v2201
    %2203 = vdwg.mxu0
    %v2204 = vadd.f32 %v2182, %v90
    %v2205 = vadd.f32 %v2202, %v91
    %2206 = vset.pattern.permute.xlu0 82
    %2207 = vperm.xlu0 %2206, %v884
    %v2208 = vpop.permute.xlu0 %2207
    %v2210 = vmul.f32 %v2208, %v2204
    %v2211 = vmul.f32 %v2208, %v2205
    %v2212 = vadd.f32 %v71, %v2210
    %v2213 = vadd.f32 %v72, %v2211
    %v2214 = vld [vmem:[%s6] sm:$0xff]
    %v2215 = vld [vmem:[%s6 + $0x8] sm:$0xff]
    %v2216 = vld [vmem:[%s6 + $0x10] sm:$0xff]
    %v2217 = vld [vmem:[%s6 + $0x18] sm:$0xff]
    %v2218 = vld [vmem:[%s2] sm:$0xff]
    %v2219 = vld [vmem:[%s2 + $0x8] sm:$0xff]
    %v2220 = vld [vmem:[%s2 + $0x10] sm:$0xff]
    %v2221 = vld [vmem:[%s2 + $0x18] sm:$0xff]
    %2223 = vset.pattern.permute.xlu0 0
    %2224 = vperm.xlu0 %2223, %v2218
    %v2225 = vpop.permute.xlu0 %2224
    %2228 = vset.pattern.permute.xlu0 0
    %2229 = vperm.xlu0 %2228, %v2219
    %v2230 = vpop.permute.xlu0 %2229
    %2233 = vset.pattern.permute.xlu0 0
    %2234 = vperm.xlu0 %2233, %v2220
    %v2235 = vpop.permute.xlu0 %2234
    %2238 = vset.pattern.permute.xlu0 0
    %2239 = vperm.xlu0 %2238, %v2221
    %v2240 = vpop.permute.xlu0 %2239
    %v2243 = vsel %vm97, %v2214, 0
    %v2246 = vsel %vm97, %v2215, 0
    %v2249 = vsel %vm97, %v2216, 0
    %v2252 = vsel %vm97, %v2217, 0
    %2254 = vmatpush.msra.mxu0 0.0
    %2255 = vmatpush.msra.mxu0 0.0
    %2256 = vmatpush.msra.mxu0 0.0
    %2257 = vmatpush.msra.mxu0 0.0
    %2258 = vmatpush.msra.mxu0 0.0
    %2259 = vmatpush.msra.mxu0 0.0
    %2260 = vmatpush.msra.mxu0 0.0
    %2261 = vmatpush.msra.mxu0 0.0
    %2262 = vmatpush.msra.mxu0 0.0
    %2263 = vmatpush.msra.mxu0 0.0
    %2264 = vmatpush.msra.mxu0 0.0
    %2265 = vmatpush.msra.mxu0 0.0
    %2266 = vmatpush.msra.mxu0 0.0
    %2267 = vmatpush.msra.mxu0 0.0
    %2268 = vmatpush.msra.mxu0 0.0
    %2269 = vmatpush.msra.mxu0 %v2212
    %2270 = vmatmul.f32.gmra.mxu0 %v2243
    %v2271 = vpop.f32.mrf.mxu0
    %v2272 = vadd.f32 %v2225, %v2271
    %2273 = vmatmul.f32.gmra.mxu0 %v2246
    %v2274 = vpop.f32.mrf.mxu0
    %v2275 = vadd.f32 %v2230, %v2274
    %2276 = vmatmul.f32.gmra.mxu0 %v2249
    %v2277 = vpop.f32.mrf.mxu0
    %v2278 = vadd.f32 %v2235, %v2277
    %2279 = vmatmul.f32.gmra.mxu0 %v2252
    %v2280 = vpop.f32.mrf.mxu0
    %v2281 = vadd.f32 %v2240, %v2280
    %2282 = vdwg.mxu0
    %2283 = vmatpush.msra.mxu0 0.0
    %2284 = vmatpush.msra.mxu0 0.0
    %2285 = vmatpush.msra.mxu0 0.0
    %2286 = vmatpush.msra.mxu0 0.0
    %2287 = vmatpush.msra.mxu0 0.0
    %2288 = vmatpush.msra.mxu0 0.0
    %2289 = vmatpush.msra.mxu0 0.0
    %2290 = vmatpush.msra.mxu0 0.0
    %2291 = vmatpush.msra.mxu0 0.0
    %2292 = vmatpush.msra.mxu0 0.0
    %2293 = vmatpush.msra.mxu0 0.0
    %2294 = vmatpush.msra.mxu0 0.0
    %2295 = vmatpush.msra.mxu0 0.0
    %2296 = vmatpush.msra.mxu0 0.0
    %2297 = vmatpush.msra.mxu0 0.0
    %2298 = vmatpush.msra.mxu0 %v2213
    %2299 = vmatmul.f32.gmra.mxu0 %v2243
    %v2300 = vpop.f32.mrf.mxu0
    %v2301 = vadd.f32 %v2225, %v2300
    %2302 = vmatmul.f32.gmra.mxu0 %v2246
    %v2303 = vpop.f32.mrf.mxu0
    %v2304 = vadd.f32 %v2230, %v2303
    %2305 = vmatmul.f32.gmra.mxu0 %v2249
    %v2306 = vpop.f32.mrf.mxu0
    %v2307 = vadd.f32 %v2235, %v2306
    %2308 = vmatmul.f32.gmra.mxu0 %v2252
    %v2309 = vpop.f32.mrf.mxu0
    %v2310 = vadd.f32 %v2240, %v2309
    %2311 = vdwg.mxu0
    %2312 = vst [vmem:[#allocation4] sm:$0xff] 0.0
    %2313 = vst [vmem:[#allocation4 + $0x20] sm:$0xff] 0.0
    %2314 = vst [vmem:[#allocation4 + $0x40] sm:$0xff] 0.0
    %2315 = vst [vmem:[#allocation4 + $0x60] sm:$0xff] 0.0
    %2316 = vst [vmem:[#allocation4 + $0x18] sm:$0xff] 0.0
    %2317 = vst [vmem:[#allocation4 + $0x38] sm:$0xff] 0.0
    %2318 = vst [vmem:[#allocation4 + $0x58] sm:$0xff] 0.0
    %2319 = vst [vmem:[#allocation4 + $0x78] sm:$0xff] 0.0
    %2320 = vst [vmem:[#allocation4 + $0x8] sm:$0xff] %v2272
    %2321 = vst [vmem:[#allocation4 + $0x10] sm:$0xff] %v2301
    %2322 = vst [vmem:[#allocation4 + $0x28] sm:$0xff] %v2275
    %2323 = vst [vmem:[#allocation4 + $0x30] sm:$0xff] %v2304
    %2324 = vst [vmem:[#allocation4 + $0x48] sm:$0xff] %v2278
    %2325 = vst [vmem:[#allocation4 + $0x50] sm:$0xff] %v2307
    %2326 = vst [vmem:[#allocation4 + $0x68] sm:$0xff] %v2281
    %2327 = vst [vmem:[#allocation4 + $0x70] sm:$0xff] %v2310
    %v2328 = vld [vmem:[#allocation4] sm:$0xff]
    %v2329 = vld [vmem:[#allocation4 + $0x8] sm:$0xff]
    %v2330 = vld [vmem:[#allocation4 + $0x10] sm:$0xff]
    %v2331 = vld [vmem:[#allocation4 + $0x20] sm:$0xff]
    %v2332 = vld [vmem:[#allocation4 + $0x28] sm:$0xff]
    %v2333 = vld [vmem:[#allocation4 + $0x30] sm:$0xff]
    %v2334 = vld [vmem:[#allocation4 + $0x40] sm:$0xff]
    %v2335 = vld [vmem:[#allocation4 + $0x48] sm:$0xff]
    %v2336 = vld [vmem:[#allocation4 + $0x50] sm:$0xff]
    %v2337 = vld [vmem:[#allocation4 + $0x60] sm:$0xff]
    %v2338 = vld [vmem:[#allocation4 + $0x68] sm:$0xff]
    %v2339 = vld [vmem:[#allocation4 + $0x70] sm:$0xff]
    %2352 = vrot.lane.b32.xlu0 %v2328, 17
    %v2353 = vpop.permute.xlu0 %2352
    %2354 = vrot.lane.b32.xlu0 %v2329, 17
    %v2355 = vpop.permute.xlu0 %2354
    %2356 = vrot.lane.b32.xlu0 %v2330, 17
    %v2357 = vpop.permute.xlu0 %2356
    %2358 = vrot.lane.b32.xlu0 %v2331, 17
    %v2359 = vpop.permute.xlu0 %2358
    %2360 = vrot.lane.b32.xlu0 %v2332, 17
    %v2361 = vpop.permute.xlu0 %2360
    %2362 = vrot.lane.b32.xlu0 %v2333, 17
    %v2363 = vpop.permute.xlu0 %2362
    %2364 = vrot.lane.b32.xlu0 %v2334, 17
    %v2365 = vpop.permute.xlu0 %2364
    %2366 = vrot.lane.b32.xlu0 %v2335, 17
    %v2367 = vpop.permute.xlu0 %2366
    %2368 = vrot.lane.b32.xlu0 %v2336, 17
    %v2369 = vpop.permute.xlu0 %2368
    %2370 = vrot.lane.b32.xlu0 %v2337, 17
    %v2371 = vpop.permute.xlu0 %2370
    %2372 = vrot.lane.b32.xlu0 %v2338, 17
    %v2373 = vpop.permute.xlu0 %2372
    %2374 = vrot.lane.b32.xlu0 %v2339, 17
    %v2375 = vpop.permute.xlu0 %2374
    %v2376 = vsel %vm331, %v2353, %v2355
    %v2377 = vsel %vm331, %v2355, %v2357
    %v2378 = vsel %vm331, %v2359, %v2361
    %v2379 = vsel %vm331, %v2361, %v2363
    %v2380 = vsel %vm331, %v2365, %v2367
    %v2381 = vsel %vm331, %v2367, %v2369
    %v2382 = vsel %vm331, %v2371, %v2373
    %v2383 = vsel %vm331, %v2373, %v2375
    %v2392 = vsel %vm228, %v2376, 0.0
    %v2393 = vsel %vm229, %v2377, 0.0
    %v2394 = vsel %vm228, %v2378, 0.0
    %v2395 = vsel %vm229, %v2379, 0.0
    %v2396 = vsel %vm228, %v2380, 0.0
    %v2397 = vsel %vm229, %v2381, 0.0
    %v2398 = vsel %vm228, %v2382, 0.0
    %v2399 = vsel %vm229, %v2383, 0.0
    %v2400 = vld [vmem:[%s2] sm:$0xff]
    %v2401 = vld [vmem:[%s2 + $0x8] sm:$0xff]
    %v2402 = vld [vmem:[%s2 + $0x10] sm:$0xff]
    %v2403 = vld [vmem:[%s2 + $0x18] sm:$0xff]
    %2405 = vset.pattern.permute.xlu0 1
    %2406 = vperm.xlu0 %2405, %v2400
    %v2407 = vpop.permute.xlu0 %2406
    %2410 = vset.pattern.permute.xlu0 1
    %2411 = vperm.xlu0 %2410, %v2401
    %v2412 = vpop.permute.xlu0 %2411
    %2415 = vset.pattern.permute.xlu0 1
    %2416 = vperm.xlu0 %2415, %v2402
    %v2417 = vpop.permute.xlu0 %2416
    %2420 = vset.pattern.permute.xlu0 1
    %2421 = vperm.xlu0 %2420, %v2403
    %v2422 = vpop.permute.xlu0 %2421
    %v2424 = vmul.f32 %v2392, %v2407
    %v2425 = vmul.f32 %v2393, %v2407
    %v2426 = vmul.f32 %v2394, %v2412
    %v2427 = vmul.f32 %v2395, %v2412
    %v2428 = vmul.f32 %v2396, %v2417
    %v2429 = vmul.f32 %v2397, %v2417
    %v2430 = vmul.f32 %v2398, %v2422
    %v2431 = vmul.f32 %v2399, %v2422
    %2432 = vset.pattern.permute.xlu0 2
    %2433 = vperm.xlu0 %2432, %v2400
    %v2434 = vpop.permute.xlu0 %2433
    %2436 = vset.pattern.permute.xlu0 2
    %2437 = vperm.xlu0 %2436, %v2401
    %v2438 = vpop.permute.xlu0 %2437
    %2440 = vset.pattern.permute.xlu0 2
    %2441 = vperm.xlu0 %2440, %v2402
    %v2442 = vpop.permute.xlu0 %2441
    %2444 = vset.pattern.permute.xlu0 2
    %2445 = vperm.xlu0 %2444, %v2403
    %v2446 = vpop.permute.xlu0 %2445
    %v2448 = vmul.f32 %v2328, %v2434
    %v2449 = vmul.f32 %v2329, %v2434
    %v2450 = vmul.f32 %v2330, %v2434
    %v2451 = vmul.f32 %v2331, %v2438
    %v2452 = vmul.f32 %v2332, %v2438
    %v2453 = vmul.f32 %v2333, %v2438
    %v2454 = vmul.f32 %v2334, %v2442
    %v2455 = vmul.f32 %v2335, %v2442
    %v2456 = vmul.f32 %v2336, %v2442
    %v2457 = vmul.f32 %v2337, %v2446
    %v2458 = vmul.f32 %v2338, %v2446
    %v2459 = vmul.f32 %v2339, %v2446
    %2460 = vrot.lane.b32.xlu0 %v2328, 15
    %v2461 = vpop.permute.xlu0 %2460
    %2462 = vrot.lane.b32.xlu0 %v2329, 15
    %v2463 = vpop.permute.xlu0 %2462
    %2464 = vrot.lane.b32.xlu0 %v2330, 15
    %v2465 = vpop.permute.xlu0 %2464
    %2466 = vrot.lane.b32.xlu0 %v2331, 15
    %v2467 = vpop.permute.xlu0 %2466
    %2468 = vrot.lane.b32.xlu0 %v2332, 15
    %v2469 = vpop.permute.xlu0 %2468
    %2470 = vrot.lane.b32.xlu0 %v2333, 15
    %v2471 = vpop.permute.xlu0 %2470
    %2472 = vrot.lane.b32.xlu0 %v2334, 15
    %v2473 = vpop.permute.xlu0 %2472
    %2474 = vrot.lane.b32.xlu0 %v2335, 15
    %v2475 = vpop.permute.xlu0 %2474
    %2476 = vrot.lane.b32.xlu0 %v2336, 15
    %v2477 = vpop.permute.xlu0 %2476
    %2478 = vrot.lane.b32.xlu0 %v2337, 15
    %v2479 = vpop.permute.xlu0 %2478
    %2480 = vrot.lane.b32.xlu0 %v2338, 15
    %v2481 = vpop.permute.xlu0 %2480
    %2482 = vrot.lane.b32.xlu0 %v2339, 15
    %v2483 = vpop.permute.xlu0 %2482
    %v2484 = vsel %vm387, %v2461, %v2463
    %v2485 = vsel %vm387, %v2463, %v2465
    %v2486 = vsel %vm387, %v2467, %v2469
    %v2487 = vsel %vm387, %v2469, %v2471
    %v2488 = vsel %vm387, %v2473, %v2475
    %v2489 = vsel %vm387, %v2475, %v2477
    %v2490 = vsel %vm387, %v2479, %v2481
    %v2491 = vsel %vm387, %v2481, %v2483
    %v2500 = vsel %vm258, %v2484, 0.0
    %v2501 = vsel %vm259, %v2485, 0.0
    %v2502 = vsel %vm258, %v2486, 0.0
    %v2503 = vsel %vm259, %v2487, 0.0
    %v2504 = vsel %vm258, %v2488, 0.0
    %v2505 = vsel %vm259, %v2489, 0.0
    %v2506 = vsel %vm258, %v2490, 0.0
    %v2507 = vsel %vm259, %v2491, 0.0
    %2508 = vset.pattern.permute.xlu0 3
    %2509 = vperm.xlu0 %2508, %v2400
    %v2510 = vpop.permute.xlu0 %2509
    %2512 = vset.pattern.permute.xlu0 3
    %2513 = vperm.xlu0 %2512, %v2401
    %v2514 = vpop.permute.xlu0 %2513
    %2516 = vset.pattern.permute.xlu0 3
    %2517 = vperm.xlu0 %2516, %v2402
    %v2518 = vpop.permute.xlu0 %2517
    %2520 = vset.pattern.permute.xlu0 3
    %2521 = vperm.xlu0 %2520, %v2403
    %v2522 = vpop.permute.xlu0 %2521
    %v2524 = vmul.f32 %v2500, %v2510
    %v2525 = vmul.f32 %v2501, %v2510
    %v2526 = vmul.f32 %v2502, %v2514
    %v2527 = vmul.f32 %v2503, %v2514
    %v2528 = vmul.f32 %v2504, %v2518
    %v2529 = vmul.f32 %v2505, %v2518
    %v2530 = vmul.f32 %v2506, %v2522
    %v2531 = vmul.f32 %v2507, %v2522
    %2532 = vrot.lane.b32.xlu0 %v2328, 1
    %v2533 = vpop.permute.xlu0 %2532
    %2534 = vrot.lane.b32.xlu0 %v2329, 1
    %v2535 = vpop.permute.xlu0 %2534
    %2536 = vrot.lane.b32.xlu0 %v2330, 1
    %v2537 = vpop.permute.xlu0 %2536
    %2538 = vrot.lane.b32.xlu0 %v2331, 1
    %v2539 = vpop.permute.xlu0 %2538
    %2540 = vrot.lane.b32.xlu0 %v2332, 1
    %v2541 = vpop.permute.xlu0 %2540
    %2542 = vrot.lane.b32.xlu0 %v2333, 1
    %v2543 = vpop.permute.xlu0 %2542
    %2544 = vrot.lane.b32.xlu0 %v2334, 1
    %v2545 = vpop.permute.xlu0 %2544
    %2546 = vrot.lane.b32.xlu0 %v2335, 1
    %v2547 = vpop.permute.xlu0 %2546
    %2548 = vrot.lane.b32.xlu0 %v2336, 1
    %v2549 = vpop.permute.xlu0 %2548
    %2550 = vrot.lane.b32.xlu0 %v2337, 1
    %v2551 = vpop.permute.xlu0 %2550
    %2552 = vrot.lane.b32.xlu0 %v2338, 1
    %v2553 = vpop.permute.xlu0 %2552
    %2554 = vrot.lane.b32.xlu0 %v2339, 1
    %v2555 = vpop.permute.xlu0 %2554
    %v2556 = vsel %vm461, %v2533, %v2535
    %v2557 = vsel %vm461, %v2535, %v2537
    %v2558 = vsel %vm461, %v2539, %v2541
    %v2559 = vsel %vm461, %v2541, %v2543
    %v2560 = vsel %vm461, %v2545, %v2547
    %v2561 = vsel %vm461, %v2547, %v2549
    %v2562 = vsel %vm461, %v2551, %v2553
    %v2563 = vsel %vm461, %v2553, %v2555
    %v2572 = vsel %vm228, %v2556, 0.0
    %v2573 = vsel %vm229, %v2557, 0.0
    %v2574 = vsel %vm228, %v2558, 0.0
    %v2575 = vsel %vm229, %v2559, 0.0
    %v2576 = vsel %vm228, %v2560, 0.0
    %v2577 = vsel %vm229, %v2561, 0.0
    %v2578 = vsel %vm228, %v2562, 0.0
    %v2579 = vsel %vm229, %v2563, 0.0
    %2580 = vset.pattern.permute.xlu0 4
    %2581 = vperm.xlu0 %2580, %v2400
    %v2582 = vpop.permute.xlu0 %2581
    %2584 = vset.pattern.permute.xlu0 4
    %2585 = vperm.xlu0 %2584, %v2401
    %v2586 = vpop.permute.xlu0 %2585
    %2588 = vset.pattern.permute.xlu0 4
    %2589 = vperm.xlu0 %2588, %v2402
    %v2590 = vpop.permute.xlu0 %2589
    %2592 = vset.pattern.permute.xlu0 4
    %2593 = vperm.xlu0 %2592, %v2403
    %v2594 = vpop.permute.xlu0 %2593
    %v2596 = vmul.f32 %v2572, %v2582
    %v2597 = vmul.f32 %v2573, %v2582
    %v2598 = vmul.f32 %v2574, %v2586
    %v2599 = vmul.f32 %v2575, %v2586
    %v2600 = vmul.f32 %v2576, %v2590
    %v2601 = vmul.f32 %v2577, %v2590
    %v2602 = vmul.f32 %v2578, %v2594
    %v2603 = vmul.f32 %v2579, %v2594
    %2604 = vset.pattern.permute.xlu0 5
    %2605 = vperm.xlu0 %2604, %v2400
    %v2606 = vpop.permute.xlu0 %2605
    %2608 = vset.pattern.permute.xlu0 5
    %2609 = vperm.xlu0 %2608, %v2401
    %v2610 = vpop.permute.xlu0 %2609
    %2612 = vset.pattern.permute.xlu0 5
    %2613 = vperm.xlu0 %2612, %v2402
    %v2614 = vpop.permute.xlu0 %2613
    %2616 = vset.pattern.permute.xlu0 5
    %2617 = vperm.xlu0 %2616, %v2403
    %v2618 = vpop.permute.xlu0 %2617
    %v2620 = vmul.f32 %v2329, %v2606
    %v2621 = vmul.f32 %v2330, %v2606
    %v2622 = vmul.f32 %v2332, %v2610
    %v2623 = vmul.f32 %v2333, %v2610
    %v2624 = vmul.f32 %v2335, %v2614
    %v2625 = vmul.f32 %v2336, %v2614
    %v2626 = vmul.f32 %v2338, %v2618
    %v2627 = vmul.f32 %v2339, %v2618
    %v2628 = vadd.f32 %v2424, %v2620
    %v2629 = vadd.f32 %v2425, %v2621
    %v2630 = vadd.f32 %v2426, %v2622
    %v2631 = vadd.f32 %v2427, %v2623
    %v2632 = vadd.f32 %v2428, %v2624
    %v2633 = vadd.f32 %v2429, %v2625
    %v2634 = vadd.f32 %v2430, %v2626
    %v2635 = vadd.f32 %v2431, %v2627
    %v2636 = vld [vmem:[#allocation4 + $0x8] sm:$0xff]
    %v2637 = vld [vmem:[#allocation4 + $0x10] sm:$0xff]
    %v2638 = vld [vmem:[#allocation4 + $0x18] sm:$0xff]
    %v2639 = vld [vmem:[#allocation4 + $0x28] sm:$0xff]
    %v2640 = vld [vmem:[#allocation4 + $0x30] sm:$0xff]
    %v2641 = vld [vmem:[#allocation4 + $0x38] sm:$0xff]
    %v2642 = vld [vmem:[#allocation4 + $0x48] sm:$0xff]
    %v2643 = vld [vmem:[#allocation4 + $0x50] sm:$0xff]
    %v2644 = vld [vmem:[#allocation4 + $0x58] sm:$0xff]
    %v2645 = vld [vmem:[#allocation4 + $0x68] sm:$0xff]
    %v2646 = vld [vmem:[#allocation4 + $0x70] sm:$0xff]
    %v2647 = vld [vmem:[#allocation4 + $0x78] sm:$0xff]
    %2660 = vrot.lane.b32.xlu0 %v2636, 127
    %v2661 = vpop.permute.xlu0 %2660
    %2662 = vrot.lane.b32.xlu0 %v2637, 127
    %v2663 = vpop.permute.xlu0 %2662
    %2664 = vrot.lane.b32.xlu0 %v2638, 127
    %v2665 = vpop.permute.xlu0 %2664
    %2666 = vrot.lane.b32.xlu0 %v2639, 127
    %v2667 = vpop.permute.xlu0 %2666
    %2668 = vrot.lane.b32.xlu0 %v2640, 127
    %v2669 = vpop.permute.xlu0 %2668
    %2670 = vrot.lane.b32.xlu0 %v2641, 127
    %v2671 = vpop.permute.xlu0 %2670
    %2672 = vrot.lane.b32.xlu0 %v2642, 127
    %v2673 = vpop.permute.xlu0 %2672
    %2674 = vrot.lane.b32.xlu0 %v2643, 127
    %v2675 = vpop.permute.xlu0 %2674
    %2676 = vrot.lane.b32.xlu0 %v2644, 127
    %v2677 = vpop.permute.xlu0 %2676
    %2678 = vrot.lane.b32.xlu0 %v2645, 127
    %v2679 = vpop.permute.xlu0 %2678
    %2680 = vrot.lane.b32.xlu0 %v2646, 127
    %v2681 = vpop.permute.xlu0 %2680
    %2682 = vrot.lane.b32.xlu0 %v2647, 127
    %v2683 = vpop.permute.xlu0 %2682
    %v2684 = vsel %vm496, %v2661, %v2663
    %v2685 = vsel %vm496, %v2663, %v2665
    %v2686 = vsel %vm496, %v2667, %v2669
    %v2687 = vsel %vm496, %v2669, %v2671
    %v2688 = vsel %vm496, %v2673, %v2675
    %v2689 = vsel %vm496, %v2675, %v2677
    %v2690 = vsel %vm496, %v2679, %v2681
    %v2691 = vsel %vm496, %v2681, %v2683
    %v2700 = vsel %vm258, %v2684, 0.0
    %v2701 = vsel %vm259, %v2685, 0.0
    %v2702 = vsel %vm258, %v2686, 0.0
    %v2703 = vsel %vm259, %v2687, 0.0
    %v2704 = vsel %vm258, %v2688, 0.0
    %v2705 = vsel %vm259, %v2689, 0.0
    %v2706 = vsel %vm258, %v2690, 0.0
    %v2707 = vsel %vm259, %v2691, 0.0
    %2708 = vset.pattern.permute.xlu0 6
    %2709 = vperm.xlu0 %2708, %v2400
    %v2710 = vpop.permute.xlu0 %2709
    %2712 = vset.pattern.permute.xlu0 6
    %2713 = vperm.xlu0 %2712, %v2401
    %v2714 = vpop.permute.xlu0 %2713
    %2716 = vset.pattern.permute.xlu0 6
    %2717 = vperm.xlu0 %2716, %v2402
    %v2718 = vpop.permute.xlu0 %2717
    %2720 = vset.pattern.permute.xlu0 6
    %2721 = vperm.xlu0 %2720, %v2403
    %v2722 = vpop.permute.xlu0 %2721
    %v2724 = vmul.f32 %v2700, %v2710
    %v2725 = vmul.f32 %v2701, %v2710
    %v2726 = vmul.f32 %v2702, %v2714
    %v2727 = vmul.f32 %v2703, %v2714
    %v2728 = vmul.f32 %v2704, %v2718
    %v2729 = vmul.f32 %v2705, %v2718
    %v2730 = vmul.f32 %v2706, %v2722
    %v2731 = vmul.f32 %v2707, %v2722
    %2740 = vrot.lane.b32.xlu0 %v2724, 112
    %v2741 = vpop.permute.xlu0 %2740
    %2742 = vrot.lane.b32.xlu0 %v2725, 112
    %v2743 = vpop.permute.xlu0 %2742
    %2744 = vrot.lane.b32.xlu0 %v2726, 112
    %v2745 = vpop.permute.xlu0 %2744
    %2746 = vrot.lane.b32.xlu0 %v2727, 112
    %v2747 = vpop.permute.xlu0 %2746
    %2748 = vrot.lane.b32.xlu0 %v2728, 112
    %v2749 = vpop.permute.xlu0 %2748
    %2750 = vrot.lane.b32.xlu0 %v2729, 112
    %v2751 = vpop.permute.xlu0 %2750
    %2752 = vrot.lane.b32.xlu0 %v2730, 112
    %v2753 = vpop.permute.xlu0 %2752
    %2754 = vrot.lane.b32.xlu0 %v2731, 112
    %v2755 = vpop.permute.xlu0 %2754
    %v2756 = vsel %vm601, %v2741, %v2743
    %v2757 = vsel %vm601, %v2745, %v2747
    %v2758 = vsel %vm601, %v2749, %v2751
    %v2759 = vsel %vm601, %v2753, %v2755
    %v2772 = vadd.f32 %v2448, %v2741
    %v2773 = vadd.f32 %v2449, %v2756
    %v2774 = vadd.f32 %v2450, %v2743
    %v2775 = vadd.f32 %v2451, %v2745
    %v2776 = vadd.f32 %v2452, %v2757
    %v2777 = vadd.f32 %v2453, %v2747
    %v2778 = vadd.f32 %v2454, %v2749
    %v2779 = vadd.f32 %v2455, %v2758
    %v2780 = vadd.f32 %v2456, %v2751
    %v2781 = vadd.f32 %v2457, %v2753
    %v2782 = vadd.f32 %v2458, %v2759
    %v2783 = vadd.f32 %v2459, %v2755
    %2784 = vrot.lane.b32.xlu0 %v2636, 113
    %v2785 = vpop.permute.xlu0 %2784
    %2786 = vrot.lane.b32.xlu0 %v2637, 113
    %v2787 = vpop.permute.xlu0 %2786
    %2788 = vrot.lane.b32.xlu0 %v2638, 113
    %v2789 = vpop.permute.xlu0 %2788
    %2790 = vrot.lane.b32.xlu0 %v2639, 113
    %v2791 = vpop.permute.xlu0 %2790
    %2792 = vrot.lane.b32.xlu0 %v2640, 113
    %v2793 = vpop.permute.xlu0 %2792
    %2794 = vrot.lane.b32.xlu0 %v2641, 113
    %v2795 = vpop.permute.xlu0 %2794
    %2796 = vrot.lane.b32.xlu0 %v2642, 113
    %v2797 = vpop.permute.xlu0 %2796
    %2798 = vrot.lane.b32.xlu0 %v2643, 113
    %v2799 = vpop.permute.xlu0 %2798
    %2800 = vrot.lane.b32.xlu0 %v2644, 113
    %v2801 = vpop.permute.xlu0 %2800
    %2802 = vrot.lane.b32.xlu0 %v2645, 113
    %v2803 = vpop.permute.xlu0 %2802
    %2804 = vrot.lane.b32.xlu0 %v2646, 113
    %v2805 = vpop.permute.xlu0 %2804
    %2806 = vrot.lane.b32.xlu0 %v2647, 113
    %v2807 = vpop.permute.xlu0 %2806
    %v2808 = vsel %vm570, %v2785, %v2787
    %v2809 = vsel %vm570, %v2787, %v2789
    %v2810 = vsel %vm570, %v2791, %v2793
    %v2811 = vsel %vm570, %v2793, %v2795
    %v2812 = vsel %vm570, %v2797, %v2799
    %v2813 = vsel %vm570, %v2799, %v2801
    %v2814 = vsel %vm570, %v2803, %v2805
    %v2815 = vsel %vm570, %v2805, %v2807
    %v2824 = vsel %vm228, %v2808, 0.0
    %v2825 = vsel %vm229, %v2809, 0.0
    %v2826 = vsel %vm228, %v2810, 0.0
    %v2827 = vsel %vm229, %v2811, 0.0
    %v2828 = vsel %vm228, %v2812, 0.0
    %v2829 = vsel %vm229, %v2813, 0.0
    %v2830 = vsel %vm228, %v2814, 0.0
    %v2831 = vsel %vm229, %v2815, 0.0
    %2832 = vset.pattern.permute.xlu0 7
    %2833 = vperm.xlu0 %2832, %v2400
    %v2834 = vpop.permute.xlu0 %2833
    %2836 = vset.pattern.permute.xlu0 7
    %2837 = vperm.xlu0 %2836, %v2401
    %v2838 = vpop.permute.xlu0 %2837
    %2840 = vset.pattern.permute.xlu0 7
    %2841 = vperm.xlu0 %2840, %v2402
    %v2842 = vpop.permute.xlu0 %2841
    %2844 = vset.pattern.permute.xlu0 7
    %2845 = vperm.xlu0 %2844, %v2403
    %v2846 = vpop.permute.xlu0 %2845
    %v2848 = vmul.f32 %v2824, %v2834
    %v2849 = vmul.f32 %v2825, %v2834
    %v2850 = vmul.f32 %v2826, %v2838
    %v2851 = vmul.f32 %v2827, %v2838
    %v2852 = vmul.f32 %v2828, %v2842
    %v2853 = vmul.f32 %v2829, %v2842
    %v2854 = vmul.f32 %v2830, %v2846
    %v2855 = vmul.f32 %v2831, %v2846
    %v2856 = vadd.f32 %v2524, %v2848
    %v2857 = vadd.f32 %v2525, %v2849
    %v2858 = vadd.f32 %v2526, %v2850
    %v2859 = vadd.f32 %v2527, %v2851
    %v2860 = vadd.f32 %v2528, %v2852
    %v2861 = vadd.f32 %v2529, %v2853
    %v2862 = vadd.f32 %v2530, %v2854
    %v2863 = vadd.f32 %v2531, %v2855
    %2864 = vset.pattern.permute.xlu0 8
    %2865 = vperm.xlu0 %2864, %v2400
    %v2866 = vpop.permute.xlu0 %2865
    %2868 = vset.pattern.permute.xlu0 8
    %2869 = vperm.xlu0 %2868, %v2401
    %v2870 = vpop.permute.xlu0 %2869
    %2872 = vset.pattern.permute.xlu0 8
    %2873 = vperm.xlu0 %2872, %v2402
    %v2874 = vpop.permute.xlu0 %2873
    %2876 = vset.pattern.permute.xlu0 8
    %2877 = vperm.xlu0 %2876, %v2403
    %v2878 = vpop.permute.xlu0 %2877
    %v2880 = vmul.f32 %v2636, %v2866
    %v2881 = vmul.f32 %v2637, %v2866
    %v2882 = vmul.f32 %v2638, %v2866
    %v2883 = vmul.f32 %v2639, %v2870
    %v2884 = vmul.f32 %v2640, %v2870
    %v2885 = vmul.f32 %v2641, %v2870
    %v2886 = vmul.f32 %v2642, %v2874
    %v2887 = vmul.f32 %v2643, %v2874
    %v2888 = vmul.f32 %v2644, %v2874
    %v2889 = vmul.f32 %v2645, %v2878
    %v2890 = vmul.f32 %v2646, %v2878
    %v2891 = vmul.f32 %v2647, %v2878
    %2904 = vrot.lane.b32.xlu0 %v2880, 112
    %v2905 = vpop.permute.xlu0 %2904
    %2906 = vrot.lane.b32.xlu0 %v2881, 112
    %v2907 = vpop.permute.xlu0 %2906
    %2908 = vrot.lane.b32.xlu0 %v2882, 112
    %v2909 = vpop.permute.xlu0 %2908
    %2910 = vrot.lane.b32.xlu0 %v2883, 112
    %v2911 = vpop.permute.xlu0 %2910
    %2912 = vrot.lane.b32.xlu0 %v2884, 112
    %v2913 = vpop.permute.xlu0 %2912
    %2914 = vrot.lane.b32.xlu0 %v2885, 112
    %v2915 = vpop.permute.xlu0 %2914
    %2916 = vrot.lane.b32.xlu0 %v2886, 112
    %v2917 = vpop.permute.xlu0 %2916
    %2918 = vrot.lane.b32.xlu0 %v2887, 112
    %v2919 = vpop.permute.xlu0 %2918
    %2920 = vrot.lane.b32.xlu0 %v2888, 112
    %v2921 = vpop.permute.xlu0 %2920
    %2922 = vrot.lane.b32.xlu0 %v2889, 112
    %v2923 = vpop.permute.xlu0 %2922
    %2924 = vrot.lane.b32.xlu0 %v2890, 112
    %v2925 = vpop.permute.xlu0 %2924
    %2926 = vrot.lane.b32.xlu0 %v2891, 112
    %v2927 = vpop.permute.xlu0 %2926
    %v2928 = vsel %vm601, %v2905, %v2907
    %v2929 = vsel %vm601, %v2907, %v2909
    %v2930 = vsel %vm601, %v2911, %v2913
    %v2931 = vsel %vm601, %v2913, %v2915
    %v2932 = vsel %vm601, %v2917, %v2919
    %v2933 = vsel %vm601, %v2919, %v2921
    %v2934 = vsel %vm601, %v2923, %v2925
    %v2935 = vsel %vm601, %v2925, %v2927
    %v2944 = vadd.f32 %v2596, %v2928
    %v2945 = vadd.f32 %v2597, %v2929
    %v2946 = vadd.f32 %v2598, %v2930
    %v2947 = vadd.f32 %v2599, %v2931
    %v2948 = vadd.f32 %v2600, %v2932
    %v2949 = vadd.f32 %v2601, %v2933
    %v2950 = vadd.f32 %v2602, %v2934
    %v2951 = vadd.f32 %v2603, %v2935
    %2952 = vrot.lane.b32.xlu0 %v2636, 111
    %v2953 = vpop.permute.xlu0 %2952
    %2954 = vrot.lane.b32.xlu0 %v2637, 111
    %v2955 = vpop.permute.xlu0 %2954
    %2956 = vrot.lane.b32.xlu0 %v2638, 111
    %v2957 = vpop.permute.xlu0 %2956
    %2958 = vrot.lane.b32.xlu0 %v2639, 111
    %v2959 = vpop.permute.xlu0 %2958
    %2960 = vrot.lane.b32.xlu0 %v2640, 111
    %v2961 = vpop.permute.xlu0 %2960
    %2962 = vrot.lane.b32.xlu0 %v2641, 111
    %v2963 = vpop.permute.xlu0 %2962
    %2964 = vrot.lane.b32.xlu0 %v2642, 111
    %v2965 = vpop.permute.xlu0 %2964
    %2966 = vrot.lane.b32.xlu0 %v2643, 111
    %v2967 = vpop.permute.xlu0 %2966
    %2968 = vrot.lane.b32.xlu0 %v2644, 111
    %v2969 = vpop.permute.xlu0 %2968
    %2970 = vrot.lane.b32.xlu0 %v2645, 111
    %v2971 = vpop.permute.xlu0 %2970
    %2972 = vrot.lane.b32.xlu0 %v2646, 111
    %v2973 = vpop.permute.xlu0 %2972
    %2974 = vrot.lane.b32.xlu0 %v2647, 111
    %v2975 = vpop.permute.xlu0 %2974
    %v2976 = vsel %vm614, %v2953, %v2955
    %v2977 = vsel %vm614, %v2955, %v2957
    %v2978 = vsel %vm614, %v2959, %v2961
    %v2979 = vsel %vm614, %v2961, %v2963
    %v2980 = vsel %vm614, %v2965, %v2967
    %v2981 = vsel %vm614, %v2967, %v2969
    %v2982 = vsel %vm614, %v2971, %v2973
    %v2983 = vsel %vm614, %v2973, %v2975
    %v2992 = vsel %vm258, %v2976, 0.0
    %v2993 = vsel %vm259, %v2977, 0.0
    %v2994 = vsel %vm258, %v2978, 0.0
    %v2995 = vsel %vm259, %v2979, 0.0
    %v2996 = vsel %vm258, %v2980, 0.0
    %v2997 = vsel %vm259, %v2981, 0.0
    %v2998 = vsel %vm258, %v2982, 0.0
    %v2999 = vsel %vm259, %v2983, 0.0
    %3000 = vset.pattern.permute.xlu0 9
    %3001 = vperm.xlu0 %3000, %v2400
    %v3002 = vpop.permute.xlu0 %3001
    %3004 = vset.pattern.permute.xlu0 9
    %3005 = vperm.xlu0 %3004, %v2401
    %v3006 = vpop.permute.xlu0 %3005
    %3008 = vset.pattern.permute.xlu0 9
    %3009 = vperm.xlu0 %3008, %v2402
    %v3010 = vpop.permute.xlu0 %3009
    %3012 = vset.pattern.permute.xlu0 9
    %3013 = vperm.xlu0 %3012, %v2403
    %v3014 = vpop.permute.xlu0 %3013
    %v3016 = vmul.f32 %v2992, %v3002
    %v3017 = vmul.f32 %v2993, %v3002
    %v3018 = vmul.f32 %v2994, %v3006
    %v3019 = vmul.f32 %v2995, %v3006
    %v3020 = vmul.f32 %v2996, %v3010
    %v3021 = vmul.f32 %v2997, %v3010
    %v3022 = vmul.f32 %v2998, %v3014
    %v3023 = vmul.f32 %v2999, %v3014
    %v3024 = vadd.f32 %v2628, %v3016
    %v3025 = vadd.f32 %v2629, %v3017
    %v3026 = vadd.f32 %v2630, %v3018
    %v3027 = vadd.f32 %v2631, %v3019
    %v3028 = vadd.f32 %v2632, %v3020
    %v3029 = vadd.f32 %v2633, %v3021
    %v3030 = vadd.f32 %v2634, %v3022
    %v3031 = vadd.f32 %v2635, %v3023
    %3044 = vrot.lane.b32.xlu0 %v2772, 16
    %v3045 = vpop.permute.xlu0 %3044
    %3046 = vrot.lane.b32.xlu0 %v2773, 16
    %v3047 = vpop.permute.xlu0 %3046
    %3048 = vrot.lane.b32.xlu0 %v2774, 16
    %v3049 = vpop.permute.xlu0 %3048
    %3050 = vrot.lane.b32.xlu0 %v2775, 16
    %v3051 = vpop.permute.xlu0 %3050
    %3052 = vrot.lane.b32.xlu0 %v2776, 16
    %v3053 = vpop.permute.xlu0 %3052
    %3054 = vrot.lane.b32.xlu0 %v2777, 16
    %v3055 = vpop.permute.xlu0 %3054
    %3056 = vrot.lane.b32.xlu0 %v2778, 16
    %v3057 = vpop.permute.xlu0 %3056
    %3058 = vrot.lane.b32.xlu0 %v2779, 16
    %v3059 = vpop.permute.xlu0 %3058
    %3060 = vrot.lane.b32.xlu0 %v2780, 16
    %v3061 = vpop.permute.xlu0 %3060
    %3062 = vrot.lane.b32.xlu0 %v2781, 16
    %v3063 = vpop.permute.xlu0 %3062
    %3064 = vrot.lane.b32.xlu0 %v2782, 16
    %v3065 = vpop.permute.xlu0 %3064
    %3066 = vrot.lane.b32.xlu0 %v2783, 16
    %v3067 = vpop.permute.xlu0 %3066
    %v3068 = vsel %vm374, %v3045, %v3047
    %v3069 = vsel %vm374, %v3047, %v3049
    %v3070 = vsel %vm374, %v3051, %v3053
    %v3071 = vsel %vm374, %v3053, %v3055
    %v3072 = vsel %vm374, %v3057, %v3059
    %v3073 = vsel %vm374, %v3059, %v3061
    %v3074 = vsel %vm374, %v3063, %v3065
    %v3075 = vsel %vm374, %v3065, %v3067
    %v3084 = vadd.f32 %v3024, %v3068
    %v3085 = vadd.f32 %v3025, %v3069
    %v3086 = vadd.f32 %v3026, %v3070
    %v3087 = vadd.f32 %v3027, %v3071
    %v3088 = vadd.f32 %v3028, %v3072
    %v3089 = vadd.f32 %v3029, %v3073
    %v3090 = vadd.f32 %v3030, %v3074
    %v3091 = vadd.f32 %v3031, %v3075
    %v3092 = vadd.f32 %v2856, %v2944
    %v3093 = vadd.f32 %v2857, %v2945
    %v3094 = vadd.f32 %v2858, %v2946
    %v3095 = vadd.f32 %v2859, %v2947
    %v3096 = vadd.f32 %v2860, %v2948
    %v3097 = vadd.f32 %v2861, %v2949
    %v3098 = vadd.f32 %v2862, %v2950
    %v3099 = vadd.f32 %v2863, %v2951
    %v3100 = vadd.f32 %v3084, %v3092
    %v3101 = vadd.f32 %v3085, %v3093
    %v3102 = vadd.f32 %v3086, %v3094
    %v3103 = vadd.f32 %v3087, %v3095
    %v3104 = vadd.f32 %v3088, %v3096
    %v3105 = vadd.f32 %v3089, %v3097
    %v3106 = vadd.f32 %v3090, %v3098
    %v3107 = vadd.f32 %v3091, %v3099
    %3108 = vset.pattern.permute.xlu0 10
    %3109 = vperm.xlu0 %3108, %v2400
    %v3110 = vpop.permute.xlu0 %3109
    %3112 = vset.pattern.permute.xlu0 10
    %3113 = vperm.xlu0 %3112, %v2401
    %v3114 = vpop.permute.xlu0 %3113
    %3116 = vset.pattern.permute.xlu0 10
    %3117 = vperm.xlu0 %3116, %v2402
    %v3118 = vpop.permute.xlu0 %3117
    %3120 = vset.pattern.permute.xlu0 10
    %3121 = vperm.xlu0 %3120, %v2403
    %v3122 = vpop.permute.xlu0 %3121
    %v3124 = vadd.f32 %v3100, %v3110
    %v3125 = vadd.f32 %v3101, %v3110
    %v3126 = vadd.f32 %v3102, %v3114
    %v3127 = vadd.f32 %v3103, %v3114
    %v3128 = vadd.f32 %v3104, %v3118
    %v3129 = vadd.f32 %v3105, %v3118
    %v3130 = vadd.f32 %v3106, %v3122
    %v3131 = vadd.f32 %v3107, %v3122
    %v3132 = vmul.f32 %v3124, 0.5
    %v3133 = vmul.f32 %v3125, 0.5
    %v3134 = vmul.f32 %v3126, 0.5
    %v3135 = vmul.f32 %v3127, 0.5
    %v3136 = vmul.f32 %v3128, 0.5
    %v3137 = vmul.f32 %v3129, 0.5
    %v3138 = vmul.f32 %v3130, 0.5
    %v3139 = vmul.f32 %v3131, 0.5
    %v3140 = vmul.f32 %v3124, 0.044715
    %v3141 = vmul.f32 %v3125, 0.044715
    %v3142 = vmul.f32 %v3126, 0.044715
    %v3143 = vmul.f32 %v3127, 0.044715
    %v3144 = vmul.f32 %v3128, 0.044715
    %v3145 = vmul.f32 %v3129, 0.044715
    %v3146 = vmul.f32 %v3130, 0.044715
    %v3147 = vmul.f32 %v3131, 0.044715
    %v3148 = vmul.f32 %v3140, %v3124
    %v3149 = vmul.f32 %v3141, %v3125
    %v3150 = vmul.f32 %v3142, %v3126
    %v3151 = vmul.f32 %v3143, %v3127
    %v3152 = vmul.f32 %v3144, %v3128
    %v3153 = vmul.f32 %v3145, %v3129
    %v3154 = vmul.f32 %v3146, %v3130
    %v3155 = vmul.f32 %v3147, %v3131
    %v3156 = vmul.f32 %v3148, %v3124
    %v3157 = vmul.f32 %v3149, %v3125
    %v3158 = vmul.f32 %v3150, %v3126
    %v3159 = vmul.f32 %v3151, %v3127
    %v3160 = vmul.f32 %v3152, %v3128
    %v3161 = vmul.f32 %v3153, %v3129
    %v3162 = vmul.f32 %v3154, %v3130
    %v3163 = vmul.f32 %v3155, %v3131
    %v3164 = vadd.f32 %v3124, %v3156
    %v3165 = vadd.f32 %v3125, %v3157
    %v3166 = vadd.f32 %v3126, %v3158
    %v3167 = vadd.f32 %v3127, %v3159
    %v3168 = vadd.f32 %v3128, %v3160
    %v3169 = vadd.f32 %v3129, %v3161
    %v3170 = vadd.f32 %v3130, %v3162
    %v3171 = vadd.f32 %v3131, %v3163
    %v3172 = vmul.f32 %v3164, 0.7978846
    %v3173 = vmul.f32 %v3165, 0.7978846
    %v3174 = vmul.f32 %v3166, 0.7978846
    %v3175 = vmul.f32 %v3167, 0.7978846
    %v3176 = vmul.f32 %v3168, 0.7978846
    %v3177 = vmul.f32 %v3169, 0.7978846
    %v3178 = vmul.f32 %v3170, 0.7978846
    %v3179 = vmul.f32 %v3171, 0.7978846
    %v3180 = vtanh.pop %v3172
    %v3181 = vtanh.pop %v3173
    %v3182 = vtanh.pop %v3174
    %v3183 = vtanh.pop %v3175
    %v3184 = vtanh.pop %v3176
    %v3185 = vtanh.pop %v3177
    %v3186 = vtanh.pop %v3178
    %v3187 = vtanh.pop %v3179
    %v3188 = vadd.f32 %v3180, 1.0
    %v3189 = vadd.f32 %v3181, 1.0
    %v3190 = vadd.f32 %v3182, 1.0
    %v3191 = vadd.f32 %v3183, 1.0
    %v3192 = vadd.f32 %v3184, 1.0
    %v3193 = vadd.f32 %v3185, 1.0
    %v3194 = vadd.f32 %v3186, 1.0
    %v3195 = vadd.f32 %v3187, 1.0
    %v3196 = vmul.f32 %v3132, %v3188
    %v3197 = vmul.f32 %v3133, %v3189
    %v3198 = vmul.f32 %v3134, %v3190
    %v3199 = vmul.f32 %v3135, %v3191
    %v3200 = vmul.f32 %v3136, %v3192
    %v3201 = vmul.f32 %v3137, %v3193
    %v3202 = vmul.f32 %v3138, %v3194
    %v3203 = vmul.f32 %v3139, %v3195
    %v3204 = vld [vmem:[#allocation10] sm:$0xff]
    %v3205 = vld [vmem:[%s1] sm:$0xff]
    %3207 = vset.pattern.permute.xlu0 83
    %3208 = vperm.xlu0 %3207, %v3205
    %v3209 = vpop.permute.xlu0 %3208
    %v3212 = vsel %vm794, %v3204, 0
    %3214 = vmatpush.msra.mxu0 0.0
    %3215 = vmatpush.msra.mxu0 0.0
    %3216 = vmatpush.msra.mxu0 0.0
    %3217 = vmatpush.msra.mxu0 0.0
    %3218 = vmatpush.msra.mxu0 0.0
    %3219 = vmatpush.msra.mxu0 0.0
    %3220 = vmatpush.msra.mxu0 0.0
    %3221 = vmatpush.msra.mxu0 0.0
    %3222 = vmatpush.msra.mxu0 0.0
    %3223 = vmatpush.msra.mxu0 0.0
    %3224 = vmatpush.msra.mxu0 0.0
    %3225 = vmatpush.msra.mxu0 0.0
    %3226 = vmatpush.msra.mxu0 %v3202
    %3227 = vmatpush.msra.mxu0 %v3200
    %3228 = vmatpush.msra.mxu0 %v3198
    %3229 = vmatpush.msra.mxu0 %v3196
    %3230 = vmatmul.f32.gmra.mxu0 %v3212
    %v3231 = vpop.f32.mrf.mxu0
    %v3232 = vadd.f32 %v3209, %v3231
    %3233 = vdwg.mxu0
    %3234 = vmatpush.msra.mxu0 0.0
    %3235 = vmatpush.msra.mxu0 0.0
    %3236 = vmatpush.msra.mxu0 0.0
    %3237 = vmatpush.msra.mxu0 0.0
    %3238 = vmatpush.msra.mxu0 0.0
    %3239 = vmatpush.msra.mxu0 0.0
    %3240 = vmatpush.msra.mxu0 0.0
    %3241 = vmatpush.msra.mxu0 0.0
    %3242 = vmatpush.msra.mxu0 0.0
    %3243 = vmatpush.msra.mxu0 0.0
    %3244 = vmatpush.msra.mxu0 0.0
    %3245 = vmatpush.msra.mxu0 0.0
    %3246 = vmatpush.msra.mxu0 %v3203
    %3247 = vmatpush.msra.mxu0 %v3201
    %3248 = vmatpush.msra.mxu0 %v3199
    %3249 = vmatpush.msra.mxu0 %v3197
    %3250 = vmatmul.f32.gmra.mxu0 %v3212
    %v3251 = vpop.f32.mrf.mxu0
    %v3252 = vadd.f32 %v3209, %v3251
    %3253 = vdwg.mxu0
    %3254 = vset.pattern.permute.xlu0 84
    %3255 = vperm.xlu0 %3254, %v3205
    %v3256 = vpop.permute.xlu0 %3255
    %v3258 = vmul.f32 %v3256, %v3232
    %v3259 = vmul.f32 %v3256, %v3252
    %v3260 = vadd.f32 %v2212, %v3258
    %v3261 = vadd.f32 %v2213, %v3259
    %3262 = vst [vmem:[#allocation11] sm:$0xff] %v3260
    %3263 = vst [vmem:[#allocation11 + $0x8] sm:$0xff] %v3261
    // Predicated region
    $region46: #{tpu_custom_call.1} parent=1 // pred_check
      _
    $region47: #{tpu_custom_call.1} parent=1 // pred_check_branch
      %3265 = sbr.rel (0) target = $region49
    $region48: #{tpu_custom_call.1} parent=1 // pred_region
      %3267 = vsyncadd [#allocation7], 0
      %s3269 = sshll.u32 [#allocation11], 4
      %s3270 = int_to_ptr.vmem [resolvable:$true] %s3269
      %s3271 = sshll.u32 %s8, 4
      %s3272 = int_to_ptr.hbm [resolvable:$true] %s3271
      %3274 = dma.vmem_to_hbm [thread:$0]  %s3270, 256, %s3272, [#allocation7]
    $region49: #{tpu_custom_call.1} parent=1 // pred_fallthru
      _
    // Predicated region
    $region50: #{tpu_custom_call.1} parent=1 // pred_check
      _
    $region51: #{tpu_custom_call.1} parent=1 // pred_check_branch
      %3276 = sbr.rel (0) target = $region53
    $region52: #{tpu_custom_call.1} parent=1 // pred_region
      %3278 = dma.done [#allocation7], 256
    $region53: #{tpu_custom_call.1} parent=1 // pred_fallthru
      _
    %3279 = vsyncpa [#allocation6], 1
    %3280 = vsyncpa [#allocation9], 1
    %3281 = vsyncpa [#allocation7], 1

</llo_original>
